<compile_context>
chip_gen: v7x
topology: tpu7x:2x2x1
jax: 0.10.0
libtpu: 0.0.40
codegen_flags: <defaults>
</compile_context>

<pallas_src>
import functools

import numpy as np
import jax
import jax.numpy as jnp
from jax.experimental import pallas as pl
from jax.experimental.pallas import tpu as pltpu

LRELU_SLOPE = 0.2
BN_EPS = 0.8          # nn.BatchNorm2d(out_filters, 0.8): second positional arg is eps
HEAD_WIDTH = 128      # lane-dense fused head width (must be >= 1 + n_classes)
B_TILE = 8            # images per grid step (tunable; raise to 16/32 for large batches)


def _conv_out_size(s):
    # Conv2d(kernel=3, stride=2, padding=1): floor((s + 2 - 3) / 2) + 1
    return (s - 1) // 2 + 1


def _dense_conv_matrix(h, w, cin, cout, wt):
    """Dense (H*W*Cin, ho*wo*Cout) matrix equivalent to Conv2d(3x3, stride=2, pad=1).

    Row index    = in_pixel  * cin  + in_channel   (row-major (h, w, c) flatten)
    Column index = out_pixel * cout + out_channel
    Out-of-bounds taps simply contribute nothing, realizing padding=1 for free.

    Footprint scales as O(HW * ho*wo * cin * cout)  (~3.4 MiB bf16 total at img_size=16).
    TODO(synk): for img_size >= ~32, switch to a tiled tap-sliced im2col and set
    pltpu.CompilerParams(vmem_limit_bytes=...) explicitly (v7x has 64 MiB physical VMEM,
    v5e's default scoped VMEM is 16 MiB).
    """
    ho, wo = _conv_out_size(h), _conv_out_size(w)
    wt = np.asarray(wt, np.float32)                     # (3, 3, cin, cout)
    m = np.zeros((h * w * cin, ho * wo * cout), np.float32)
    for oh in range(ho):
        for ow in range(wo):
            q = oh * wo + ow
            for dh in range(3):
                ih = 2 * oh + dh - 1
                if not (0 <= ih < h):
                    continue
                for dw in range(3):
                    iw = 2 * ow + dw - 1
                    if not (0 <= iw < w):
                        continue
                    p = ih * w + iw
                    m[p * cin:(p + 1) * cin, q * cout:(q + 1) * cout] += wt[dh, dw]
    return m


# ----------------------------------------------------------------------------
# Fused Pallas kernel: whole Discriminator forward for B_TILE images per grid step.
# ----------------------------------------------------------------------------
def _discriminator_kernel(x_ref,
                          m1_ref, b1_ref, t1_ref,
                          m2_ref, b2_ref, t2_ref,
                          m3_ref, b3_ref, t3_ref,
                          m4_ref, b4_ref, t4_ref,
                          wh_ref, bh_ref,
                          o_ref, *, n_classes):

    def block(a_bf16, m_ref, b_ref, t_ref):
        # One MXU matmul for the whole block and batch tile: (B, HW*Cin) @ (HW*Cin, m*Cout).
        y = jnp.dot(a_bf16, m_ref[...], preferred_element_type=jnp.float32)
        y = y + b_ref[...]                              # conv bias (BN scale folded in)
        y = jnp.where(y > 0, y, LRELU_SLOPE * y)        # LeakyReLU(0.2)
        # TODO(synk): Dropout2d(0.25) is identity at inference; no stochastic mask emitted.
        return y + t_ref[...]                           # BatchNorm2d(eval) shift

    a = x_ref[...]                                                     # (B, H*W*C) bf16
    a = block(a, m1_ref, b1_ref, t1_ref).astype(jnp.bfloat16)
    a = block(a, m2_ref, b2_ref, t2_ref).astype(jnp.bfloat16)
    a = block(a, m3_ref, b3_ref, t3_ref).astype(jnp.bfloat16)
    feat = block(a, m4_ref, b4_ref, t4_ref)                            # (B, ds*ds*128) f32

    # Fused heads: one lane-dense matmul; col 0 -> sigmoid, cols 1..n_classes -> softmax.
    z = jnp.dot(feat.astype(jnp.bfloat16), wh_ref[...],
                preferred_element_type=jnp.float32) + bh_ref[...]      # (B, 128) f32
    col = jax.lax.broadcasted_iota(jnp.int32, z.shape, 1)
    is_cls = jnp.logical_and(col >= 1, col <= n_classes)
    zc = jnp.where(is_cls, z, jnp.float32(-1e30))
    zc = zc - jnp.max(zc, axis=-1, keepdims=True)
    e = jnp.exp(zc)
    inv_den = pl.reciprocal(jnp.sum(e, axis=-1, keepdims=True), approx=True)
    softmax = e * inv_den                                              # Softmax over classes
    sigmoid = pl.reciprocal(1.0 + jnp.exp(-z), approx=True)            # Sigmoid (adv head)
    o_ref[...] = jnp.where(col == 0, sigmoid,
                           jnp.where(is_cls, softmax, jnp.float32(0.0)))


# ----------------------------------------------------------------------------
# Parameters (PyTorch-default-like init), with BN scale folded into conv W/b and
# each conv block precomputed as one dense matrix.
# ----------------------------------------------------------------------------
def init_params(key, channels, img_size, n_classes):
    assert 1 + n_classes <= HEAD_WIDTH
    cins = [channels, 16, 32, 64]
    couts = [16, 32, 64, 128]
    bns = [False, True, True, True]
    keys = jax.random.split(key, 12)
    ki = 0
    blocks = []
    size = img_size
    for cin, cout, bn in zip(cins, couts, bns):
        fan_in = cin * 9
        bound = 1.0 / float(fan_in) ** 0.5
        w = jax.random.uniform(keys[ki], (3, 3, cin, cout), jnp.float32, -bound, bound); ki += 1
        b = jax.random.uniform(keys[ki], (cout,), jnp.float32, -bound, bound); ki += 1
        if bn:
            # PyTorch defaults: gamma=1, beta=0, running_mean=0, running_var=1 (eval mode).
            gamma = np.ones((cout,), np.float32)
            beta = np.zeros((cout,), np.float32)
            rmean = np.zeros((cout,), np.float32)
            rvar = np.ones((cout,), np.float32)
            scale = gamma / np.sqrt(rvar + BN_EPS)      # > 0, so the fold below is exact
            shift = beta - rmean * scale
        else:
            scale = np.ones((cout,), np.float32)
            shift = np.zeros((cout,), np.float32)
        # Fold BN scale: BN(lrelu(Wx + b)) == lrelu((s*W)x + s*b) + shift   (valid for s > 0).
        # TODO(synk): guard gamma <= 0 (fold invalid) when importing trained checkpoints.
        w_folded = np.asarray(w) * scale
        b_folded = np.asarray(b) * scale
        ho = _conv_out_size(size)
        n_out_pix = ho * ho
        blocks.append({
            "m": jnp.asarray(_dense_conv_matrix(size, size, cin, cout, w_folded), jnp.bfloat16),
            "b": jnp.asarray(np.tile(b_folded, n_out_pix)[None, :], jnp.float32),
            "t": jnp.asarray(np.tile(shift, n_out_pix)[None, :], jnp.float32),
        })
        size = ho

    ds = size                                  # == img_size // 2**4
    feat = 128 * ds * ds
    bound = 1.0 / float(feat) ** 0.5
    # Head weight rows follow the kernel's (h, w, c)-flatten order (identity when ds == 1).
    # TODO(synk): permute rows from torch's (c, h, w) order when importing trained weights.
    wa = jax.random.uniform(keys[ki], (feat, 1), jnp.float32, -bound, bound); ki += 1
    ba = jax.random.uniform(keys[ki], (1,), jnp.float32, -bound, bound); ki += 1
    wc = jax.random.uniform(keys[ki], (feat, n_classes), jnp.float32, -bound, bound); ki += 1
    bc = jax.random.uniform(keys[ki], (n_classes,), jnp.float32, -bound, bound); ki += 1
    pad = HEAD_WIDTH - 1 - n_classes
    wh = jnp.concatenate([wa, wc, jnp.zeros((feat, pad), jnp.float32)], axis=1)
    bh = jnp.concatenate([ba.reshape(1, 1), bc.reshape(1, n_classes),
                          jnp.zeros((1, pad), jnp.float32)], axis=1)
    return {"blocks": blocks, "wh": wh.astype(jnp.bfloat16), "bh": bh}


# ----------------------------------------------------------------------------
# Forward pass (inference semantics of Discriminator.forward)
# ----------------------------------------------------------------------------
@functools.partial(jax.jit, static_argnums=(2,))
def discriminator_forward(params, img_nchw, n_classes):
    n, c, h, w = img_nchw.shape
    # NCHW (PyTorch) -> (N, H*W*C) row-major (h, w, c) flatten matching the dense conv mats.
    x = jnp.transpose(img_nchw, (0, 2, 3, 1)).reshape(n, h * w * c).astype(jnp.bfloat16)
    pad_n = (-n) % B_TILE
    if pad_n:
        x = jnp.concatenate([x, jnp.zeros((pad_n, x.shape[1]), x.dtype)], axis=0)
    n_padded = n + pad_n

    flat_inputs = [x]
    in_specs = [pl.BlockSpec((B_TILE, x.shape[1]), lambda i: (i, 0))]
    for blk in params["blocks"]:
        for name in ("m", "b", "t"):
            arr = blk[name]
            flat_inputs.append(arr)
            in_specs.append(pl.BlockSpec(arr.shape, lambda i: (0, 0)))
    for name in ("wh", "bh"):
        arr = params[name]
        flat_inputs.append(arr)
        in_specs.append(pl.BlockSpec(arr.shape, lambda i: (0, 0)))

    out = pl.pallas_call(
        functools.partial(_discriminator_kernel, n_classes=n_classes),
        out_shape=jax.ShapeDtypeStruct((n_padded, HEAD_WIDTH), jnp.float32),
        grid=(n_padded // B_TILE,),
        in_specs=in_specs,
        out_specs=pl.BlockSpec((B_TILE, HEAD_WIDTH), lambda i: (i, 0)),
        compiler_params=pltpu.CompilerParams(dimension_semantics=("parallel",)),
    )(*flat_inputs)

    head = out[:n]
    validity = head[:, 0:1]                 # Sigmoid output
    label = head[:, 1:1 + n_classes]        # Softmax output
    return validity, label


if __name__ == "__main__":
    # small shapes implied by the module: opt.channels=4, opt.img_size=16, opt.n_classes=10
    batch, channels, img_size, n_classes = 2, 4, 16, 10

    key = jax.random.PRNGKey(0)
    k_img, k_params = jax.random.split(key)
    img = jax.random.normal(k_img, (batch, channels, img_size, img_size), jnp.float32)
    params = init_params(k_params, channels, img_size, n_classes)

    validity, label = discriminator_forward(params, img, n_classes)
    jax.block_until_ready((validity, label))

    assert validity.shape == (batch, 1)
    assert label.shape == (batch, n_classes)
    assert bool(jnp.all(jnp.isfinite(validity))) and bool(jnp.all(jnp.isfinite(label)))
    # softmax rows should sum to ~1 (approx reciprocal -> loose tolerance)
    assert bool(jnp.all(jnp.abs(jnp.sum(label, axis=-1) - 1.0) < 1e-2))
    print("KERNEL_OK")
</pallas_src>

<mosaic_0001>
module attributes {stable_mosaic.version = 11 : i64} {
  func.func @_discriminator_kernel(%arg0: i32, %arg1: memref<8x1024xbf16, #tpu.memory_space<vmem>>, %arg2: memref<1024x1024xbf16, #tpu.memory_space<vmem>>, %arg3: memref<1x1024xf32, #tpu.memory_space<vmem>>, %arg4: memref<1x1024xf32, #tpu.memory_space<vmem>>, %arg5: memref<1024x512xbf16, #tpu.memory_space<vmem>>, %arg6: memref<1x512xf32, #tpu.memory_space<vmem>>, %arg7: memref<1x512xf32, #tpu.memory_space<vmem>>, %arg8: memref<512x256xbf16, #tpu.memory_space<vmem>>, %arg9: memref<1x256xf32, #tpu.memory_space<vmem>>, %arg10: memref<1x256xf32, #tpu.memory_space<vmem>>, %arg11: memref<256x128xbf16, #tpu.memory_space<vmem>>, %arg12: memref<1x128xf32, #tpu.memory_space<vmem>>, %arg13: memref<1x128xf32, #tpu.memory_space<vmem>>, %arg14: memref<128x128xbf16, #tpu.memory_space<vmem>>, %arg15: memref<1x128xf32, #tpu.memory_space<vmem>>, %arg16: memref<8x128xf32, #tpu.memory_space<vmem>>) attributes {dimension_semantics = [#tpu.dimension_semantics<parallel>], iteration_bounds = array<i64: 1>, scalar_prefetch = 0 : i64, scratch_operands = 0 : i64, tpu.core_type = #tpu.core_type<tc>, window_params = [{transform_indices = @transform_0, window_bounds = array<i64: 8, 1024>}, {pipeline_mode = #tpu.pipeline_mode<synchronous>, transform_indices = @transform_1, window_bounds = array<i64: 1024, 1024>}, {pipeline_mode = #tpu.pipeline_mode<synchronous>, transform_indices = @transform_2, window_bounds = array<i64: 1, 1024>}, {pipeline_mode = #tpu.pipeline_mode<synchronous>, transform_indices = @transform_3, window_bounds = array<i64: 1, 1024>}, {pipeline_mode = #tpu.pipeline_mode<synchronous>, transform_indices = @transform_4, window_bounds = array<i64: 1024, 512>}, {pipeline_mode = #tpu.pipeline_mode<synchronous>, transform_indices = @transform_5, window_bounds = array<i64: 1, 512>}, {pipeline_mode = #tpu.pipeline_mode<synchronous>, transform_indices = @transform_6, window_bounds = array<i64: 1, 512>}, {pipeline_mode = #tpu.pipeline_mode<synchronous>, transform_indices = @transform_7, window_bounds = array<i64: 512, 256>}, {pipeline_mode = #tpu.pipeline_mode<synchronous>, transform_indices = @transform_8, window_bounds = array<i64: 1, 256>}, {pipeline_mode = #tpu.pipeline_mode<synchronous>, transform_indices = @transform_9, window_bounds = array<i64: 1, 256>}, {pipeline_mode = #tpu.pipeline_mode<synchronous>, transform_indices = @transform_10, window_bounds = array<i64: 256, 128>}, {pipeline_mode = #tpu.pipeline_mode<synchronous>, transform_indices = @transform_11, window_bounds = array<i64: 1, 128>}, {pipeline_mode = #tpu.pipeline_mode<synchronous>, transform_indices = @transform_12, window_bounds = array<i64: 1, 128>}, {pipeline_mode = #tpu.pipeline_mode<synchronous>, transform_indices = @transform_13, window_bounds = array<i64: 128, 128>}, {pipeline_mode = #tpu.pipeline_mode<synchronous>, transform_indices = @transform_14, window_bounds = array<i64: 1, 128>}, {transform_indices = @transform_15, window_bounds = array<i64: 8, 128>}]} {
    %c0 = arith.constant 0 : index
    %c0_0 = arith.constant 0 : index
    %0 = vector.load %arg1[%c0, %c0_0] : memref<8x1024xbf16, #tpu.memory_space<vmem>>, vector<8x1024xbf16>
    %c0_1 = arith.constant 0 : index
    %c0_2 = arith.constant 0 : index
    %1 = vector.load %arg2[%c0_1, %c0_2] : memref<1024x1024xbf16, #tpu.memory_space<vmem>>, vector<1024x1024xbf16>
    %cst = arith.constant dense<0.000000e+00> : vector<8x1024xf32>
    %2 = tpu.matmul %0, %1, %cst {dimension_numbers = #tpu.dot_dimension_numbers<[1], [0], [0], [1], [0, 0, 1, 1], [], []>} : vector<8x1024xbf16>, vector<1024x1024xbf16>, vector<8x1024xf32> -> vector<8x1024xf32>
    %c0_3 = arith.constant 0 : index
    %c0_4 = arith.constant 0 : index
    %3 = vector.load %arg3[%c0_3, %c0_4] : memref<1x1024xf32, #tpu.memory_space<vmem>>, vector<1x1024xf32>
    %4 = vector.broadcast %3 : vector<1x1024xf32> to vector<8x1024xf32>
    %5 = arith.addf %2, %4 : vector<8x1024xf32>
    %cst_5 = arith.constant 0.000000e+00 : f32
    %6 = vector.broadcast %cst_5 : f32 to vector<8x1024xf32>
    %7 = arith.cmpf ogt, %5, %6 : vector<8x1024xf32>
    %cst_6 = arith.constant 2.000000e-01 : f32
    %8 = vector.broadcast %cst_6 : f32 to vector<8x1024xf32>
    %9 = arith.mulf %8, %5 : vector<8x1024xf32>
    %10 = arith.select %7, %5, %9 : vector<8x1024xi1>, vector<8x1024xf32>
    %c0_7 = arith.constant 0 : index
    %c0_8 = arith.constant 0 : index
    %11 = vector.load %arg4[%c0_7, %c0_8] : memref<1x1024xf32, #tpu.memory_space<vmem>>, vector<1x1024xf32>
    %12 = vector.broadcast %11 : vector<1x1024xf32> to vector<8x1024xf32>
    %13 = arith.addf %10, %12 : vector<8x1024xf32>
    %14 = arith.truncf %13 : vector<8x1024xf32> to vector<8x1024xbf16>
    %c0_9 = arith.constant 0 : index
    %c0_10 = arith.constant 0 : index
    %15 = vector.load %arg5[%c0_9, %c0_10] : memref<1024x512xbf16, #tpu.memory_space<vmem>>, vector<1024x512xbf16>
    %cst_11 = arith.constant dense<0.000000e+00> : vector<8x512xf32>
    %16 = tpu.matmul %14, %15, %cst_11 {dimension_numbers = #tpu.dot_dimension_numbers<[1], [0], [0], [1], [0, 0, 1, 1], [], []>} : vector<8x1024xbf16>, vector<1024x512xbf16>, vector<8x512xf32> -> vector<8x512xf32>
    %c0_12 = arith.constant 0 : index
    %c0_13 = arith.constant 0 : index
    %17 = vector.load %arg6[%c0_12, %c0_13] : memref<1x512xf32, #tpu.memory_space<vmem>>, vector<1x512xf32>
    %18 = vector.broadcast %17 : vector<1x512xf32> to vector<8x512xf32>
    %19 = arith.addf %16, %18 : vector<8x512xf32>
    %cst_14 = arith.constant 0.000000e+00 : f32
    %20 = vector.broadcast %cst_14 : f32 to vector<8x512xf32>
    %21 = arith.cmpf ogt, %19, %20 : vector<8x512xf32>
    %cst_15 = arith.constant 2.000000e-01 : f32
    %22 = vector.broadcast %cst_15 : f32 to vector<8x512xf32>
    %23 = arith.mulf %22, %19 : vector<8x512xf32>
    %24 = arith.select %21, %19, %23 : vector<8x512xi1>, vector<8x512xf32>
    %c0_16 = arith.constant 0 : index
    %c0_17 = arith.constant 0 : index
    %25 = vector.load %arg7[%c0_16, %c0_17] : memref<1x512xf32, #tpu.memory_space<vmem>>, vector<1x512xf32>
    %26 = vector.broadcast %25 : vector<1x512xf32> to vector<8x512xf32>
    %27 = arith.addf %24, %26 : vector<8x512xf32>
    %28 = arith.truncf %27 : vector<8x512xf32> to vector<8x512xbf16>
    %c0_18 = arith.constant 0 : index
    %c0_19 = arith.constant 0 : index
    %29 = vector.load %arg8[%c0_18, %c0_19] : memref<512x256xbf16, #tpu.memory_space<vmem>>, vector<512x256xbf16>
    %cst_20 = arith.constant dense<0.000000e+00> : vector<8x256xf32>
    %30 = tpu.matmul %28, %29, %cst_20 {dimension_numbers = #tpu.dot_dimension_numbers<[1], [0], [0], [1], [0, 0, 1, 1], [], []>} : vector<8x512xbf16>, vector<512x256xbf16>, vector<8x256xf32> -> vector<8x256xf32>
    %c0_21 = arith.constant 0 : index
    %c0_22 = arith.constant 0 : index
    %31 = vector.load %arg9[%c0_21, %c0_22] : memref<1x256xf32, #tpu.memory_space<vmem>>, vector<1x256xf32>
    %32 = vector.broadcast %31 : vector<1x256xf32> to vector<8x256xf32>
    %33 = arith.addf %30, %32 : vector<8x256xf32>
    %cst_23 = arith.constant 0.000000e+00 : f32
    %34 = vector.broadcast %cst_23 : f32 to vector<8x256xf32>
    %35 = arith.cmpf ogt, %33, %34 : vector<8x256xf32>
    %cst_24 = arith.constant 2.000000e-01 : f32
    %36 = vector.broadcast %cst_24 : f32 to vector<8x256xf32>
    %37 = arith.mulf %36, %33 : vector<8x256xf32>
    %38 = arith.select %35, %33, %37 : vector<8x256xi1>, vector<8x256xf32>
    %c0_25 = arith.constant 0 : index
    %c0_26 = arith.constant 0 : index
    %39 = vector.load %arg10[%c0_25, %c0_26] : memref<1x256xf32, #tpu.memory_space<vmem>>, vector<1x256xf32>
    %40 = vector.broadcast %39 : vector<1x256xf32> to vector<8x256xf32>
    %41 = arith.addf %38, %40 : vector<8x256xf32>
    %42 = arith.truncf %41 : vector<8x256xf32> to vector<8x256xbf16>
    %c0_27 = arith.constant 0 : index
    %c0_28 = arith.constant 0 : index
    %43 = vector.load %arg11[%c0_27, %c0_28] : memref<256x128xbf16, #tpu.memory_space<vmem>>, vector<256x128xbf16>
    %cst_29 = arith.constant dense<0.000000e+00> : vector<8x128xf32>
    %44 = tpu.matmul %42, %43, %cst_29 {dimension_numbers = #tpu.dot_dimension_numbers<[1], [0], [0], [1], [0, 0, 1, 1], [], []>} : vector<8x256xbf16>, vector<256x128xbf16>, vector<8x128xf32> -> vector<8x128xf32>
    %c0_30 = arith.constant 0 : index
    %c0_31 = arith.constant 0 : index
    %45 = vector.load %arg12[%c0_30, %c0_31] : memref<1x128xf32, #tpu.memory_space<vmem>>, vector<1x128xf32>
    %46 = vector.broadcast %45 : vector<1x128xf32> to vector<8x128xf32>
    %47 = arith.addf %44, %46 : vector<8x128xf32>
    %cst_32 = arith.constant 0.000000e+00 : f32
    %48 = vector.broadcast %cst_32 : f32 to vector<8x128xf32>
    %49 = arith.cmpf ogt, %47, %48 : vector<8x128xf32>
    %cst_33 = arith.constant 2.000000e-01 : f32
    %50 = vector.broadcast %cst_33 : f32 to vector<8x128xf32>
    %51 = arith.mulf %50, %47 : vector<8x128xf32>
    %52 = arith.select %49, %47, %51 : vector<8x128xi1>, vector<8x128xf32>
    %c0_34 = arith.constant 0 : index
    %c0_35 = arith.constant 0 : index
    %53 = vector.load %arg13[%c0_34, %c0_35] : memref<1x128xf32, #tpu.memory_space<vmem>>, vector<1x128xf32>
    %54 = vector.broadcast %53 : vector<1x128xf32> to vector<8x128xf32>
    %55 = arith.addf %52, %54 : vector<8x128xf32>
    %56 = arith.truncf %55 : vector<8x128xf32> to vector<8x128xbf16>
    %c0_36 = arith.constant 0 : index
    %c0_37 = arith.constant 0 : index
    %57 = vector.load %arg14[%c0_36, %c0_37] : memref<128x128xbf16, #tpu.memory_space<vmem>>, vector<128x128xbf16>
    %cst_38 = arith.constant dense<0.000000e+00> : vector<8x128xf32>
    %58 = tpu.matmul %56, %57, %cst_38 {dimension_numbers = #tpu.dot_dimension_numbers<[1], [0], [0], [1], [0, 0, 1, 1], [], []>} : vector<8x128xbf16>, vector<128x128xbf16>, vector<8x128xf32> -> vector<8x128xf32>
    %c0_39 = arith.constant 0 : index
    %c0_40 = arith.constant 0 : index
    %59 = vector.load %arg15[%c0_39, %c0_40] : memref<1x128xf32, #tpu.memory_space<vmem>>, vector<1x128xf32>
    %60 = vector.broadcast %59 : vector<1x128xf32> to vector<8x128xf32>
    %61 = arith.addf %58, %60 : vector<8x128xf32>
    %62 = tpu.iota {dimensions = array<i32: 1>} : vector<8x128xi32>
    %c1_i32 = arith.constant 1 : i32
    %63 = vector.broadcast %c1_i32 : i32 to vector<8x128xi32>
    %64 = arith.cmpi sge, %62, %63 : vector<8x128xi32>
    %c10_i32 = arith.constant 10 : i32
    %65 = vector.broadcast %c10_i32 : i32 to vector<8x128xi32>
    %66 = arith.cmpi sle, %62, %65 : vector<8x128xi32>
    %67 = arith.andi %64, %66 : vector<8x128xi1>
    %cst_41 = arith.constant -1.000000e+30 : f32
    %68 = vector.broadcast %cst_41 : f32 to vector<8x128xf32>
    %69 = arith.select %67, %61, %68 : vector<8x128xi1>, vector<8x128xf32>
    %cst_42 = arith.constant dense<0xFF800000> : vector<8xf32>
    %70 = vector.multi_reduction <maximumf>, %69, %cst_42 [1] : vector<8x128xf32> to vector<8xf32>
    %71 = vector.shape_cast %70 : vector<8xf32> to vector<8x1xf32>
    %72 = vector.broadcast %71 : vector<8x1xf32> to vector<8x128xf32>
    %73 = arith.subf %69, %72 : vector<8x128xf32>
    %74 = math.exp %73 : vector<8x128xf32>
    %cst_43 = arith.constant dense<0.000000e+00> : vector<8xf32>
    %75 = vector.multi_reduction <add>, %74, %cst_43 [1] : vector<8x128xf32> to vector<8xf32>
    %76 = vector.shape_cast %75 : vector<8xf32> to vector<8x1xf32>
    %77 = tpu.reciprocal %76 {approx = true} : vector<8x1xf32> -> vector<8x1xf32>
    %78 = vector.broadcast %77 : vector<8x1xf32> to vector<8x128xf32>
    %79 = arith.mulf %74, %78 : vector<8x128xf32>
    %cst_44 = arith.constant 0.000000e+00 : f32
    %80 = vector.broadcast %cst_44 : f32 to vector<8x128xf32>
    %81 = arith.subf %80, %61 : vector<8x128xf32>
    %82 = math.exp %81 : vector<8x128xf32>
    %cst_45 = arith.constant 1.000000e+00 : f32
    %83 = vector.broadcast %cst_45 : f32 to vector<8x128xf32>
    %84 = arith.addf %83, %82 : vector<8x128xf32>
    %85 = tpu.reciprocal %84 {approx = true} : vector<8x128xf32> -> vector<8x128xf32>
    %c0_i32 = arith.constant 0 : i32
    %86 = vector.broadcast %c0_i32 : i32 to vector<8x128xi32>
    %87 = arith.cmpi eq, %62, %86 : vector<8x128xi32>
    %cst_46 = arith.constant 0.000000e+00 : f32
    %88 = vector.broadcast %cst_46 : f32 to vector<8x128xf32>
    %89 = arith.select %67, %79, %88 : vector<8x128xi1>, vector<8x128xf32>
    %90 = arith.select %87, %85, %89 : vector<8x128xi1>, vector<8x128xf32>
    %c0_47 = arith.constant 0 : index
    %c0_48 = arith.constant 0 : index
    %91 = vector.load %arg16[%c0_47, %c0_48] : memref<8x128xf32, #tpu.memory_space<vmem>>, vector<8x128xf32>
    tpu.vector_store %arg16[%c0_47, %c0_48], %90 {strides = array<i32>} : memref<8x128xf32, #tpu.memory_space<vmem>>, vector<8x128xf32>,
    return
  }
  func.func @transform_0(%arg0: i32) -> (i32, i32) {
    %c0_i32 = arith.constant 0 : i32
    %c0_i32_0 = arith.constant 0 : i32
    return %arg0, %c0_i32 : i32, i32
  }
  func.func @transform_1(%arg0: i32) -> (i32, i32) {
    %c0_i32 = arith.constant 0 : i32
    %c0_i32_0 = arith.constant 0 : i32
    %c0_i32_1 = arith.constant 0 : i32
    return %c0_i32, %c0_i32_0 : i32, i32
  }
  func.func @transform_2(%arg0: i32) -> (i32, i32) {
    %c0_i32 = arith.constant 0 : i32
    %c0_i32_0 = arith.constant 0 : i32
    %c0_i32_1 = arith.constant 0 : i32
    return %c0_i32, %c0_i32_0 : i32, i32
  }
  func.func @transform_3(%arg0: i32) -> (i32, i32) {
    %c0_i32 = arith.constant 0 : i32
    %c0_i32_0 = arith.constant 0 : i32
    %c0_i32_1 = arith.constant 0 : i32
    return %c0_i32, %c0_i32_0 : i32, i32
  }
  func.func @transform_4(%arg0: i32) -> (i32, i32) {
    %c0_i32 = arith.constant 0 : i32
    %c0_i32_0 = arith.constant 0 : i32
    %c0_i32_1 = arith.constant 0 : i32
    return %c0_i32, %c0_i32_0 : i32, i32
  }
  func.func @transform_5(%arg0: i32) -> (i32, i32) {
    %c0_i32 = arith.constant 0 : i32
    %c0_i32_0 = arith.constant 0 : i32
    %c0_i32_1 = arith.constant 0 : i32
    return %c0_i32, %c0_i32_0 : i32, i32
  }
  func.func @transform_6(%arg0: i32) -> (i32, i32) {
    %c0_i32 = arith.constant 0 : i32
    %c0_i32_0 = arith.constant 0 : i32
    %c0_i32_1 = arith.constant 0 : i32
    return %c0_i32, %c0_i32_0 : i32, i32
  }
  func.func @transform_7(%arg0: i32) -> (i32, i32) {
    %c0_i32 = arith.constant 0 : i32
    %c0_i32_0 = arith.constant 0 : i32
    %c0_i32_1 = arith.constant 0 : i32
    return %c0_i32, %c0_i32_0 : i32, i32
  }
  func.func @transform_8(%arg0: i32) -> (i32, i32) {
    %c0_i32 = arith.constant 0 : i32
    %c0_i32_0 = arith.constant 0 : i32
    %c0_i32_1 = arith.constant 0 : i32
    return %c0_i32, %c0_i32_0 : i32, i32
  }
  func.func @transform_9(%arg0: i32) -> (i32, i32) {
    %c0_i32 = arith.constant 0 : i32
    %c0_i32_0 = arith.constant 0 : i32
    %c0_i32_1 = arith.constant 0 : i32
    return %c0_i32, %c0_i32_0 : i32, i32
  }
  func.func @transform_10(%arg0: i32) -> (i32, i32) {
    %c0_i32 = arith.constant 0 : i32
    %c0_i32_0 = arith.constant 0 : i32
    %c0_i32_1 = arith.constant 0 : i32
    return %c0_i32, %c0_i32_0 : i32, i32
  }
  func.func @transform_11(%arg0: i32) -> (i32, i32) {
    %c0_i32 = arith.constant 0 : i32
    %c0_i32_0 = arith.constant 0 : i32
    %c0_i32_1 = arith.constant 0 : i32
    return %c0_i32, %c0_i32_0 : i32, i32
  }
  func.func @transform_12(%arg0: i32) -> (i32, i32) {
    %c0_i32 = arith.constant 0 : i32
    %c0_i32_0 = arith.constant 0 : i32
    %c0_i32_1 = arith.constant 0 : i32
    return %c0_i32, %c0_i32_0 : i32, i32
  }
  func.func @transform_13(%arg0: i32) -> (i32, i32) {
    %c0_i32 = arith.constant 0 : i32
    %c0_i32_0 = arith.constant 0 : i32
    %c0_i32_1 = arith.constant 0 : i32
    return %c0_i32, %c0_i32_0 : i32, i32
  }
  func.func @transform_14(%arg0: i32) -> (i32, i32) {
    %c0_i32 = arith.constant 0 : i32
    %c0_i32_0 = arith.constant 0 : i32
    %c0_i32_1 = arith.constant 0 : i32
    return %c0_i32, %c0_i32_0 : i32, i32
  }
  func.func @transform_15(%arg0: i32) -> (i32, i32) {
    %c0_i32 = arith.constant 0 : i32
    %c0_i32_0 = arith.constant 0 : i32
    return %arg0, %c0_i32 : i32, i32
  }
}

</mosaic_0001>

<llo_original>
// kernel: discriminator_forward.1
$region0: #{discriminator_forward.1}
  #allocation0 [shape = 'u32[]', space=smem, size = 0x4, offset = 0x4, fixed_abs, tag = 'smem constant byte address 0x4 - core index']
  #allocation1 [shape = 'u32[144,128]{1,0:T(1,128)}', space=vmem, size = 0x12000, scoped, tag = 'internal scratch']
  %s0 = inlined_call_operand.vmem [shape: bf16[8,1024], index: 0, kind: input, shape index: {}]
  %s1 = inlined_call_operand.hbm [shape: bf16[1024,1024], index: 1, kind: input, shape index: {}]
  %s2 = inlined_call_operand.hbm [shape: f32[1,1024], index: 2, kind: input, shape index: {}]
  %s3 = inlined_call_operand.hbm [shape: f32[1,1024], index: 3, kind: input, shape index: {}]
  %s4 = inlined_call_operand.hbm [shape: bf16[1024,512], index: 4, kind: input, shape index: {}]
  %s5 = inlined_call_operand.hbm [shape: f32[1,512], index: 5, kind: input, shape index: {}]
  %s6 = inlined_call_operand.hbm [shape: f32[1,512], index: 6, kind: input, shape index: {}]
  %s7 = inlined_call_operand.hbm [shape: bf16[512,256], index: 7, kind: input, shape index: {}]
  %s8 = inlined_call_operand.hbm [shape: f32[1,256], index: 8, kind: input, shape index: {}]
  %s9 = inlined_call_operand.hbm [shape: f32[1,256], index: 9, kind: input, shape index: {}]
  %s10 = inlined_call_operand.hbm [shape: bf16[256,128], index: 10, kind: input, shape index: {}]
  %s11 = inlined_call_operand.hbm [shape: f32[1,128], index: 11, kind: input, shape index: {}]
  %s12 = inlined_call_operand.hbm [shape: f32[1,128], index: 12, kind: input, shape index: {}]
  %s13 = inlined_call_operand.hbm [shape: bf16[128,128], index: 13, kind: input, shape index: {}]
  %s14 = inlined_call_operand.hbm [shape: f32[1,128], index: 14, kind: input, shape index: {}]
  %s15 = inlined_call_operand.vmem [shape: f32[8,128], index: 15, kind: output, shape index: {}]
  %s16 = sld [smem:[#allocation0]]
  $region126: #{discriminator_forward.1} parent=0
    _
  %s18 = ssub.s32 1, %s16
  %s19 = scalar_select 0, %s18, %s16
  $region1: #{discriminator_forward.1} parent=0
    #allocation2 [shape = 'u8[2097152]{0}', space=vmem, size = 0x200000, scoped, tag = 'input window, operand 1, single buffered']
    #allocation3 [shape = 's32[1]{0}', space=sflag, size = 0x4, scoped, tag = 'scoped memory for discriminator_forward.1']
    #allocation4 [shape = 'u8[4096]{0}', space=vmem, size = 0x1000, scoped, tag = 'input window, operand 2, single buffered']
    #allocation5 [shape = 's32[1]{0}', space=sflag, size = 0x4, scoped, tag = 'scoped memory for discriminator_forward.1']
    #allocation6 [shape = 'u8[4096]{0}', space=vmem, size = 0x1000, scoped, tag = 'input window, operand 3, single buffered']
    #allocation7 [shape = 'u8[1048576]{0}', space=vmem, size = 0x100000, scoped, tag = 'input window, operand 4, single buffered']
    #allocation8 [shape = 's32[1]{0}', space=sflag, size = 0x4, scoped, tag = 'scoped memory for discriminator_forward.1']
    #allocation9 [shape = 'u8[2048]{0}', space=vmem, size = 0x800, scoped, tag = 'input window, operand 5, single buffered']
    #allocation10 [shape = 'u8[2048]{0}', space=vmem, size = 0x800, scoped, tag = 'input window, operand 6, single buffered']
    #allocation11 [shape = 's32[1]{0}', space=sflag, size = 0x4, scoped, tag = 'scoped memory for discriminator_forward.1']
    #allocation12 [shape = 'u8[262144]{0}', space=vmem, size = 0x40000, scoped, tag = 'input window, operand 7, single buffered']
    #allocation13 [shape = 'u8[1024]{0}', space=vmem, size = 0x400, scoped, tag = 'input window, operand 8, single buffered']
    #allocation14 [shape = 's32[1]{0}', space=sflag, size = 0x4, scoped, tag = 'scoped memory for discriminator_forward.1']
    #allocation15 [shape = 'u8[1024]{0}', space=vmem, size = 0x400, scoped, tag = 'input window, operand 9, single buffered']
    #allocation16 [shape = 'u8[65536]{0}', space=vmem, size = 0x10000, scoped, tag = 'input window, operand 10, single buffered']
    #allocation17 [shape = 's32[1]{0}', space=sflag, size = 0x4, scoped, tag = 'scoped memory for discriminator_forward.1']
    #allocation18 [shape = 'u8[512]{0}', space=vmem, size = 0x400, scoped, tag = 'input window, operand 11, single buffered']
    #allocation19 [shape = 'u8[512]{0}', space=vmem, size = 0x400, scoped, tag = 'input window, operand 12, single buffered']
    #allocation20 [shape = 's32[1]{0}', space=sflag, size = 0x4, scoped, tag = 'scoped memory for discriminator_forward.1']
    #allocation21 [shape = 'u8[32768]{0}', space=vmem, size = 0x8000, scoped, tag = 'input window, operand 13, single buffered']
    #allocation22 [shape = 'u8[512]{0}', space=vmem, size = 0x400, scoped, tag = 'input window, operand 14, single buffered']
    #allocation23 [shape = 's32[1]{0}', space=sflag, size = 0x4, scoped, tag = 'scoped memory for discriminator_forward.1']
    %20 = vsyncpa [#allocation3], 0
    %21 = vsyncpa [#allocation5], 0
    %22 = vsyncpa [#allocation8], 0
    %23 = vsyncpa [#allocation11], 0
    %24 = vsyncpa [#allocation14], 0
    %25 = vsyncpa [#allocation17], 0
    %26 = vsyncpa [#allocation20], 0
    %27 = vsyncpa [#allocation23], 0
    // Predicated region
    $region2: #{discriminator_forward.1} parent=1 // pred_check
      _
    $region3: #{discriminator_forward.1} parent=1 // pred_check_branch
      %29 = sbr.rel (0) target = $region5
    $region4: #{discriminator_forward.1} parent=1 // pred_region
      _
    $region5: #{discriminator_forward.1} parent=1 // pred_fallthru
      _
    // Predicated region
    $region6: #{discriminator_forward.1} parent=1 // pred_check
      _
    $region7: #{discriminator_forward.1} parent=1 // pred_check_branch
      %31 = sbr.rel (0) target = $region9
    $region8: #{discriminator_forward.1} parent=1 // pred_region
      %s33 = ssub.s32 65536, 65536
      %34 = vsyncadd [#allocation3], %s33
      %s35 = sshll.u32 [#allocation2], 4
      %s36 = int_to_ptr.vmem [resolvable:$true] %s35
      %41 = dma.hbm_to_vmem [thread:$0]  %s1, 65536, %s36, [#allocation3], 512, 512, 32
    $region9: #{discriminator_forward.1} parent=1 // pred_fallthru
      _
    // Predicated region
    $region10: #{discriminator_forward.1} parent=1 // pred_check
      _
    $region11: #{discriminator_forward.1} parent=1 // pred_check_branch
      %43 = sbr.rel (0) target = $region13
    $region12: #{discriminator_forward.1} parent=1 // pred_region
      %s45 = ssub.s32 128, 128
      %46 = vsyncadd [#allocation5], %s45
      %s48 = sshll.u32 [#allocation4], 4
      %s49 = int_to_ptr.vmem [resolvable:$true] %s48
      %51 = dma.hbm_to_vmem [thread:$0]  %s2, 128, %s49, [#allocation5]
    $region13: #{discriminator_forward.1} parent=1 // pred_fallthru
      _
    // Predicated region
    $region14: #{discriminator_forward.1} parent=1 // pred_check
      _
    $region15: #{discriminator_forward.1} parent=1 // pred_check_branch
      %53 = sbr.rel (0) target = $region17
    $region16: #{discriminator_forward.1} parent=1 // pred_region
      %s55 = ssub.s32 128, 128
      %56 = vsyncadd [#allocation5], %s55
      %s58 = sshll.u32 [#allocation6], 4
      %s59 = int_to_ptr.vmem [resolvable:$true] %s58
      %61 = dma.hbm_to_vmem [thread:$0]  %s3, 128, %s59, [#allocation5]
    $region17: #{discriminator_forward.1} parent=1 // pred_fallthru
      _
    // Predicated region
    $region18: #{discriminator_forward.1} parent=1 // pred_check
      _
    $region19: #{discriminator_forward.1} parent=1 // pred_check_branch
      %63 = sbr.rel (0) target = $region21
    $region20: #{discriminator_forward.1} parent=1 // pred_region
      %s65 = ssub.s32 32768, 32768
      %66 = vsyncadd [#allocation8], %s65
      %s67 = sshll.u32 [#allocation7], 4
      %s68 = int_to_ptr.vmem [resolvable:$true] %s67
      %73 = dma.hbm_to_vmem [thread:$0]  %s4, 32768, %s68, [#allocation8], 256, 256, 16
    $region21: #{discriminator_forward.1} parent=1 // pred_fallthru
      _
    // Predicated region
    $region22: #{discriminator_forward.1} parent=1 // pred_check
      _
    $region23: #{discriminator_forward.1} parent=1 // pred_check_branch
      %75 = sbr.rel (0) target = $region25
    $region24: #{discriminator_forward.1} parent=1 // pred_region
      %s77 = ssub.s32 64, 64
      %78 = vsyncadd [#allocation8], %s77
      %s80 = sshll.u32 [#allocation9], 4
      %s81 = int_to_ptr.vmem [resolvable:$true] %s80
      %83 = dma.hbm_to_vmem [thread:$0]  %s5, 64, %s81, [#allocation8]
    $region25: #{discriminator_forward.1} parent=1 // pred_fallthru
      _
    // Predicated region
    $region26: #{discriminator_forward.1} parent=1 // pred_check
      _
    $region27: #{discriminator_forward.1} parent=1 // pred_check_branch
      %85 = sbr.rel (0) target = $region29
    $region28: #{discriminator_forward.1} parent=1 // pred_region
      %s87 = ssub.s32 64, 64
      %88 = vsyncadd [#allocation11], %s87
      %s90 = sshll.u32 [#allocation10], 4
      %s91 = int_to_ptr.vmem [resolvable:$true] %s90
      %93 = dma.hbm_to_vmem [thread:$0]  %s6, 64, %s91, [#allocation11]
    $region29: #{discriminator_forward.1} parent=1 // pred_fallthru
      _
    // Predicated region
    $region30: #{discriminator_forward.1} parent=1 // pred_check
      _
    $region31: #{discriminator_forward.1} parent=1 // pred_check_branch
      %95 = sbr.rel (0) target = $region33
    $region32: #{discriminator_forward.1} parent=1 // pred_region
      %s97 = ssub.s32 8192, 8192
      %98 = vsyncadd [#allocation11], %s97
      %s99 = sshll.u32 [#allocation12], 4
      %s100 = int_to_ptr.vmem [resolvable:$true] %s99
      %105 = dma.hbm_to_vmem [thread:$0]  %s7, 8192, %s100, [#allocation11], 128, 128, 8
    $region33: #{discriminator_forward.1} parent=1 // pred_fallthru
      _
    // Predicated region
    $region34: #{discriminator_forward.1} parent=1 // pred_check
      _
    $region35: #{discriminator_forward.1} parent=1 // pred_check_branch
      %107 = sbr.rel (0) target = $region37
    $region36: #{discriminator_forward.1} parent=1 // pred_region
      %s109 = ssub.s32 32, 32
      %110 = vsyncadd [#allocation14], %s109
      %s112 = sshll.u32 [#allocation13], 4
      %s113 = int_to_ptr.vmem [resolvable:$true] %s112
      %115 = dma.hbm_to_vmem [thread:$0]  %s8, 32, %s113, [#allocation14]
    $region37: #{discriminator_forward.1} parent=1 // pred_fallthru
      _
    // Predicated region
    $region38: #{discriminator_forward.1} parent=1 // pred_check
      _
    $region39: #{discriminator_forward.1} parent=1 // pred_check_branch
      %117 = sbr.rel (0) target = $region41
    $region40: #{discriminator_forward.1} parent=1 // pred_region
      %s119 = ssub.s32 32, 32
      %120 = vsyncadd [#allocation14], %s119
      %s122 = sshll.u32 [#allocation15], 4
      %s123 = int_to_ptr.vmem [resolvable:$true] %s122
      %125 = dma.hbm_to_vmem [thread:$0]  %s9, 32, %s123, [#allocation14]
    $region41: #{discriminator_forward.1} parent=1 // pred_fallthru
      _
    // Predicated region
    $region42: #{discriminator_forward.1} parent=1 // pred_check
      _
    $region43: #{discriminator_forward.1} parent=1 // pred_check_branch
      %127 = sbr.rel (0) target = $region45
    $region44: #{discriminator_forward.1} parent=1 // pred_region
      %s129 = ssub.s32 2048, 2048
      %130 = vsyncadd [#allocation17], %s129
      %s131 = sshll.u32 [#allocation16], 4
      %s132 = int_to_ptr.vmem [resolvable:$true] %s131
      %137 = dma.hbm_to_vmem [thread:$0]  %s10, 2048, %s132, [#allocation17], 64, 64, 4
    $region45: #{discriminator_forward.1} parent=1 // pred_fallthru
      _
    // Predicated region
    $region46: #{discriminator_forward.1} parent=1 // pred_check
      _
    $region47: #{discriminator_forward.1} parent=1 // pred_check_branch
      %139 = sbr.rel (0) target = $region49
    $region48: #{discriminator_forward.1} parent=1 // pred_region
      %s141 = ssub.s32 16, 16
      %142 = vsyncadd [#allocation17], %s141
      %s144 = sshll.u32 [#allocation18], 4
      %s145 = int_to_ptr.vmem [resolvable:$true] %s144
      %147 = dma.hbm_to_vmem [thread:$0]  %s11, 16, %s145, [#allocation17]
    $region49: #{discriminator_forward.1} parent=1 // pred_fallthru
      _
    // Predicated region
    $region50: #{discriminator_forward.1} parent=1 // pred_check
      _
    $region51: #{discriminator_forward.1} parent=1 // pred_check_branch
      %149 = sbr.rel (0) target = $region53
    $region52: #{discriminator_forward.1} parent=1 // pred_region
      %s151 = ssub.s32 16, 16
      %152 = vsyncadd [#allocation20], %s151
      %s154 = sshll.u32 [#allocation19], 4
      %s155 = int_to_ptr.vmem [resolvable:$true] %s154
      %157 = dma.hbm_to_vmem [thread:$0]  %s12, 16, %s155, [#allocation20]
    $region53: #{discriminator_forward.1} parent=1 // pred_fallthru
      _
    // Predicated region
    $region54: #{discriminator_forward.1} parent=1 // pred_check
      _
    $region55: #{discriminator_forward.1} parent=1 // pred_check_branch
      %159 = sbr.rel (0) target = $region57
    $region56: #{discriminator_forward.1} parent=1 // pred_region
      %s161 = ssub.s32 1024, 1024
      %162 = vsyncadd [#allocation20], %s161
      %s163 = sshll.u32 [#allocation21], 4
      %s164 = int_to_ptr.vmem [resolvable:$true] %s163
      %169 = dma.hbm_to_vmem [thread:$0]  %s13, 1024, %s164, [#allocation20], 64, 64, 4
    $region57: #{discriminator_forward.1} parent=1 // pred_fallthru
      _
    // Predicated region
    $region58: #{discriminator_forward.1} parent=1 // pred_check
      _
    $region59: #{discriminator_forward.1} parent=1 // pred_check_branch
      %171 = sbr.rel (0) target = $region61
    $region60: #{discriminator_forward.1} parent=1 // pred_region
      %s173 = ssub.s32 16, 16
      %174 = vsyncadd [#allocation23], %s173
      %s176 = sshll.u32 [#allocation22], 4
      %s177 = int_to_ptr.vmem [resolvable:$true] %s176
      %179 = dma.hbm_to_vmem [thread:$0]  %s14, 16, %s177, [#allocation23]
    $region61: #{discriminator_forward.1} parent=1 // pred_fallthru
      _
    // Predicated region
    $region62: #{discriminator_forward.1} parent=1 // pred_check
      _
    $region63: #{discriminator_forward.1} parent=1 // pred_check_branch
      %181 = sbr.rel (0) target = $region65
    $region64: #{discriminator_forward.1} parent=1 // pred_region
      %182 = dma.done [#allocation3], 65536
    $region65: #{discriminator_forward.1} parent=1 // pred_fallthru
      _
    // Predicated region
    $region66: #{discriminator_forward.1} parent=1 // pred_check
      _
    $region67: #{discriminator_forward.1} parent=1 // pred_check_branch
      %184 = sbr.rel (0) target = $region69
    $region68: #{discriminator_forward.1} parent=1 // pred_region
      %185 = dma.done [#allocation5], 128
    $region69: #{discriminator_forward.1} parent=1 // pred_fallthru
      _
    // Predicated region
    $region70: #{discriminator_forward.1} parent=1 // pred_check
      _
    $region71: #{discriminator_forward.1} parent=1 // pred_check_branch
      %187 = sbr.rel (0) target = $region73
    $region72: #{discriminator_forward.1} parent=1 // pred_region
      %188 = dma.done [#allocation5], 128
    $region73: #{discriminator_forward.1} parent=1 // pred_fallthru
      _
    // Predicated region
    $region74: #{discriminator_forward.1} parent=1 // pred_check
      _
    $region75: #{discriminator_forward.1} parent=1 // pred_check_branch
      %190 = sbr.rel (0) target = $region77
    $region76: #{discriminator_forward.1} parent=1 // pred_region
      %191 = dma.done [#allocation8], 32768
    $region77: #{discriminator_forward.1} parent=1 // pred_fallthru
      _
    // Predicated region
    $region78: #{discriminator_forward.1} parent=1 // pred_check
      _
    $region79: #{discriminator_forward.1} parent=1 // pred_check_branch
      %193 = sbr.rel (0) target = $region81
    $region80: #{discriminator_forward.1} parent=1 // pred_region
      %194 = dma.done [#allocation8], 64
    $region81: #{discriminator_forward.1} parent=1 // pred_fallthru
      _
    // Predicated region
    $region82: #{discriminator_forward.1} parent=1 // pred_check
      _
    $region83: #{discriminator_forward.1} parent=1 // pred_check_branch
      %196 = sbr.rel (0) target = $region85
    $region84: #{discriminator_forward.1} parent=1 // pred_region
      %197 = dma.done [#allocation11], 64
    $region85: #{discriminator_forward.1} parent=1 // pred_fallthru
      _
    // Predicated region
    $region86: #{discriminator_forward.1} parent=1 // pred_check
      _
    $region87: #{discriminator_forward.1} parent=1 // pred_check_branch
      %199 = sbr.rel (0) target = $region89
    $region88: #{discriminator_forward.1} parent=1 // pred_region
      %200 = dma.done [#allocation11], 8192
    $region89: #{discriminator_forward.1} parent=1 // pred_fallthru
      _
    // Predicated region
    $region90: #{discriminator_forward.1} parent=1 // pred_check
      _
    $region91: #{discriminator_forward.1} parent=1 // pred_check_branch
      %202 = sbr.rel (0) target = $region93
    $region92: #{discriminator_forward.1} parent=1 // pred_region
      %203 = dma.done [#allocation14], 32
    $region93: #{discriminator_forward.1} parent=1 // pred_fallthru
      _
    // Predicated region
    $region94: #{discriminator_forward.1} parent=1 // pred_check
      _
    $region95: #{discriminator_forward.1} parent=1 // pred_check_branch
      %205 = sbr.rel (0) target = $region97
    $region96: #{discriminator_forward.1} parent=1 // pred_region
      %206 = dma.done [#allocation14], 32
    $region97: #{discriminator_forward.1} parent=1 // pred_fallthru
      _
    // Predicated region
    $region98: #{discriminator_forward.1} parent=1 // pred_check
      _
    $region99: #{discriminator_forward.1} parent=1 // pred_check_branch
      %208 = sbr.rel (0) target = $region101
    $region100: #{discriminator_forward.1} parent=1 // pred_region
      %209 = dma.done [#allocation17], 2048
    $region101: #{discriminator_forward.1} parent=1 // pred_fallthru
      _
    // Predicated region
    $region102: #{discriminator_forward.1} parent=1 // pred_check
      _
    $region103: #{discriminator_forward.1} parent=1 // pred_check_branch
      %211 = sbr.rel (0) target = $region105
    $region104: #{discriminator_forward.1} parent=1 // pred_region
      %212 = dma.done [#allocation17], 16
    $region105: #{discriminator_forward.1} parent=1 // pred_fallthru
      _
    // Predicated region
    $region106: #{discriminator_forward.1} parent=1 // pred_check
      _
    $region107: #{discriminator_forward.1} parent=1 // pred_check_branch
      %214 = sbr.rel (0) target = $region109
    $region108: #{discriminator_forward.1} parent=1 // pred_region
      %215 = dma.done [#allocation20], 16
    $region109: #{discriminator_forward.1} parent=1 // pred_fallthru
      _
    // Predicated region
    $region110: #{discriminator_forward.1} parent=1 // pred_check
      _
    $region111: #{discriminator_forward.1} parent=1 // pred_check_branch
      %217 = sbr.rel (0) target = $region113
    $region112: #{discriminator_forward.1} parent=1 // pred_region
      %218 = dma.done [#allocation20], 1024
    $region113: #{discriminator_forward.1} parent=1 // pred_fallthru
      _
    // Predicated region
    $region114: #{discriminator_forward.1} parent=1 // pred_check
      _
    $region115: #{discriminator_forward.1} parent=1 // pred_check_branch
      %220 = sbr.rel (0) target = $region117
    $region116: #{discriminator_forward.1} parent=1 // pred_region
      %221 = dma.done [#allocation23], 16
    $region117: #{discriminator_forward.1} parent=1 // pred_fallthru
      _
    %v223 = vld [vmem:[%s0] sm:$0xff]
    %v224 = vld [vmem:[%s0 + $0x8] sm:$0xff]
    %v225 = vld [vmem:[%s0 + $0x10] sm:$0xff]
    %v226 = vld [vmem:[%s0 + $0x18] sm:$0xff]
    %v227 = vld [vmem:[#allocation2] sm:$0xff]
    %v228 = vld [vmem:[#allocation2 + $0x8] sm:$0xff]
    %v229 = vld [vmem:[#allocation2 + $0x10] sm:$0xff]
    %v230 = vld [vmem:[#allocation2 + $0x18] sm:$0xff]
    %v231 = vld [vmem:[#allocation2 + $0x20] sm:$0xff]
    %v232 = vld [vmem:[#allocation2 + $0x28] sm:$0xff]
    %v233 = vld [vmem:[#allocation2 + $0x30] sm:$0xff]
    %v234 = vld [vmem:[#allocation2 + $0x38] sm:$0xff]
    %v235 = vld [vmem:[#allocation2 + $0x40] sm:$0xff]
    %v236 = vld [vmem:[#allocation2 + $0x48] sm:$0xff]
    %v237 = vld [vmem:[#allocation2 + $0x50] sm:$0xff]
    %v238 = vld [vmem:[#allocation2 + $0x58] sm:$0xff]
    %v239 = vld [vmem:[#allocation2 + $0x60] sm:$0xff]
    %v240 = vld [vmem:[#allocation2 + $0x68] sm:$0xff]
    %v241 = vld [vmem:[#allocation2 + $0x70] sm:$0xff]
    %v242 = vld [vmem:[#allocation2 + $0x78] sm:$0xff]
    %v243 = vld [vmem:[#allocation2 + $0x80] sm:$0xff]
    %v244 = vld [vmem:[#allocation2 + $0x88] sm:$0xff]
    %v245 = vld [vmem:[#allocation2 + $0x90] sm:$0xff]
    %v246 = vld [vmem:[#allocation2 + $0x98] sm:$0xff]
    %v247 = vld [vmem:[#allocation2 + $0xa0] sm:$0xff]
    %v248 = vld [vmem:[#allocation2 + $0xa8] sm:$0xff]
    %v249 = vld [vmem:[#allocation2 + $0xb0] sm:$0xff]
    %v250 = vld [vmem:[#allocation2 + $0xb8] sm:$0xff]
    %v251 = vld [vmem:[#allocation2 + $0xc0] sm:$0xff]
    %v252 = vld [vmem:[#allocation2 + $0xc8] sm:$0xff]
    %v253 = vld [vmem:[#allocation2 + $0xd0] sm:$0xff]
    %v254 = vld [vmem:[#allocation2 + $0xd8] sm:$0xff]
    %v255 = vld [vmem:[#allocation2 + $0xe0] sm:$0xff]
    %v256 = vld [vmem:[#allocation2 + $0xe8] sm:$0xff]
    %v257 = vld [vmem:[#allocation2 + $0xf0] sm:$0xff]
    %v258 = vld [vmem:[#allocation2 + $0xf8] sm:$0xff]
    %v259 = vld [vmem:[#allocation2 + $0x100] sm:$0xff]
    %v260 = vld [vmem:[#allocation2 + $0x108] sm:$0xff]
    %v261 = vld [vmem:[#allocation2 + $0x110] sm:$0xff]
    %v262 = vld [vmem:[#allocation2 + $0x118] sm:$0xff]
    %v263 = vld [vmem:[#allocation2 + $0x120] sm:$0xff]
    %v264 = vld [vmem:[#allocation2 + $0x128] sm:$0xff]
    %v265 = vld [vmem:[#allocation2 + $0x130] sm:$0xff]
    %v266 = vld [vmem:[#allocation2 + $0x138] sm:$0xff]
    %v267 = vld [vmem:[#allocation2 + $0x140] sm:$0xff]
    %v268 = vld [vmem:[#allocation2 + $0x148] sm:$0xff]
    %v269 = vld [vmem:[#allocation2 + $0x150] sm:$0xff]
    %v270 = vld [vmem:[#allocation2 + $0x158] sm:$0xff]
    %v271 = vld [vmem:[#allocation2 + $0x160] sm:$0xff]
    %v272 = vld [vmem:[#allocation2 + $0x168] sm:$0xff]
    %v273 = vld [vmem:[#allocation2 + $0x170] sm:$0xff]
    %v274 = vld [vmem:[#allocation2 + $0x178] sm:$0xff]
    %v275 = vld [vmem:[#allocation2 + $0x180] sm:$0xff]
    %v276 = vld [vmem:[#allocation2 + $0x188] sm:$0xff]
    %v277 = vld [vmem:[#allocation2 + $0x190] sm:$0xff]
    %v278 = vld [vmem:[#allocation2 + $0x198] sm:$0xff]
    %v279 = vld [vmem:[#allocation2 + $0x1a0] sm:$0xff]
    %v280 = vld [vmem:[#allocation2 + $0x1a8] sm:$0xff]
    %v281 = vld [vmem:[#allocation2 + $0x1b0] sm:$0xff]
    %v282 = vld [vmem:[#allocation2 + $0x1b8] sm:$0xff]
    %v283 = vld [vmem:[#allocation2 + $0x1c0] sm:$0xff]
    %v284 = vld [vmem:[#allocation2 + $0x1c8] sm:$0xff]
    %v285 = vld [vmem:[#allocation2 + $0x1d0] sm:$0xff]
    %v286 = vld [vmem:[#allocation2 + $0x1d8] sm:$0xff]
    %v287 = vld [vmem:[#allocation2 + $0x1e0] sm:$0xff]
    %v288 = vld [vmem:[#allocation2 + $0x1e8] sm:$0xff]
    %v289 = vld [vmem:[#allocation2 + $0x1f0] sm:$0xff]
    %v290 = vld [vmem:[#allocation2 + $0x1f8] sm:$0xff]
    %v291 = vld [vmem:[#allocation2 + $0x200] sm:$0xff]
    %v292 = vld [vmem:[#allocation2 + $0x208] sm:$0xff]
    %v293 = vld [vmem:[#allocation2 + $0x210] sm:$0xff]
    %v294 = vld [vmem:[#allocation2 + $0x218] sm:$0xff]
    %v295 = vld [vmem:[#allocation2 + $0x220] sm:$0xff]
    %v296 = vld [vmem:[#allocation2 + $0x228] sm:$0xff]
    %v297 = vld [vmem:[#allocation2 + $0x230] sm:$0xff]
    %v298 = vld [vmem:[#allocation2 + $0x238] sm:$0xff]
    %v299 = vld [vmem:[#allocation2 + $0x240] sm:$0xff]
    %v300 = vld [vmem:[#allocation2 + $0x248] sm:$0xff]
    %v301 = vld [vmem:[#allocation2 + $0x250] sm:$0xff]
    %v302 = vld [vmem:[#allocation2 + $0x258] sm:$0xff]
    %v303 = vld [vmem:[#allocation2 + $0x260] sm:$0xff]
    %v304 = vld [vmem:[#allocation2 + $0x268] sm:$0xff]
    %v305 = vld [vmem:[#allocation2 + $0x270] sm:$0xff]
    %v306 = vld [vmem:[#allocation2 + $0x278] sm:$0xff]
    %v307 = vld [vmem:[#allocation2 + $0x280] sm:$0xff]
    %v308 = vld [vmem:[#allocation2 + $0x288] sm:$0xff]
    %v309 = vld [vmem:[#allocation2 + $0x290] sm:$0xff]
    %v310 = vld [vmem:[#allocation2 + $0x298] sm:$0xff]
    %v311 = vld [vmem:[#allocation2 + $0x2a0] sm:$0xff]
    %v312 = vld [vmem:[#allocation2 + $0x2a8] sm:$0xff]
    %v313 = vld [vmem:[#allocation2 + $0x2b0] sm:$0xff]
    %v314 = vld [vmem:[#allocation2 + $0x2b8] sm:$0xff]
    %v315 = vld [vmem:[#allocation2 + $0x2c0] sm:$0xff]
    %v316 = vld [vmem:[#allocation2 + $0x2c8] sm:$0xff]
    %v317 = vld [vmem:[#allocation2 + $0x2d0] sm:$0xff]
    %v318 = vld [vmem:[#allocation2 + $0x2d8] sm:$0xff]
    %v319 = vld [vmem:[#allocation2 + $0x2e0] sm:$0xff]
    %v320 = vld [vmem:[#allocation2 + $0x2e8] sm:$0xff]
    %v321 = vld [vmem:[#allocation2 + $0x2f0] sm:$0xff]
    %v322 = vld [vmem:[#allocation2 + $0x2f8] sm:$0xff]
    %v323 = vld [vmem:[#allocation2 + $0x300] sm:$0xff]
    %v324 = vld [vmem:[#allocation2 + $0x308] sm:$0xff]
    %v325 = vld [vmem:[#allocation2 + $0x310] sm:$0xff]
    %v326 = vld [vmem:[#allocation2 + $0x318] sm:$0xff]
    %v327 = vld [vmem:[#allocation2 + $0x320] sm:$0xff]
    %v328 = vld [vmem:[#allocation2 + $0x328] sm:$0xff]
    %v329 = vld [vmem:[#allocation2 + $0x330] sm:$0xff]
    %v330 = vld [vmem:[#allocation2 + $0x338] sm:$0xff]
    %v331 = vld [vmem:[#allocation2 + $0x340] sm:$0xff]
    %v332 = vld [vmem:[#allocation2 + $0x348] sm:$0xff]
    %v333 = vld [vmem:[#allocation2 + $0x350] sm:$0xff]
    %v334 = vld [vmem:[#allocation2 + $0x358] sm:$0xff]
    %v335 = vld [vmem:[#allocation2 + $0x360] sm:$0xff]
    %v336 = vld [vmem:[#allocation2 + $0x368] sm:$0xff]
    %v337 = vld [vmem:[#allocation2 + $0x370] sm:$0xff]
    %v338 = vld [vmem:[#allocation2 + $0x378] sm:$0xff]
    %v339 = vld [vmem:[#allocation2 + $0x380] sm:$0xff]
    %v340 = vld [vmem:[#allocation2 + $0x388] sm:$0xff]
    %v341 = vld [vmem:[#allocation2 + $0x390] sm:$0xff]
    %v342 = vld [vmem:[#allocation2 + $0x398] sm:$0xff]
    %v343 = vld [vmem:[#allocation2 + $0x3a0] sm:$0xff]
    %v344 = vld [vmem:[#allocation2 + $0x3a8] sm:$0xff]
    %v345 = vld [vmem:[#allocation2 + $0x3b0] sm:$0xff]
    %v346 = vld [vmem:[#allocation2 + $0x3b8] sm:$0xff]
    %v347 = vld [vmem:[#allocation2 + $0x3c0] sm:$0xff]
    %v348 = vld [vmem:[#allocation2 + $0x3c8] sm:$0xff]
    %v349 = vld [vmem:[#allocation2 + $0x3d0] sm:$0xff]
    %v350 = vld [vmem:[#allocation2 + $0x3d8] sm:$0xff]
    %v351 = vld [vmem:[#allocation2 + $0x3e0] sm:$0xff]
    %v352 = vld [vmem:[#allocation2 + $0x3e8] sm:$0xff]
    %v353 = vld [vmem:[#allocation2 + $0x3f0] sm:$0xff]
    %v354 = vld [vmem:[#allocation2 + $0x3f8] sm:$0xff]
    %v355 = vld [vmem:[#allocation2 + $0x400] sm:$0xff]
    %v356 = vld [vmem:[#allocation2 + $0x408] sm:$0xff]
    %v357 = vld [vmem:[#allocation2 + $0x410] sm:$0xff]
    %v358 = vld [vmem:[#allocation2 + $0x418] sm:$0xff]
    %v359 = vld [vmem:[#allocation2 + $0x420] sm:$0xff]
    %v360 = vld [vmem:[#allocation2 + $0x428] sm:$0xff]
    %v361 = vld [vmem:[#allocation2 + $0x430] sm:$0xff]
    %v362 = vld [vmem:[#allocation2 + $0x438] sm:$0xff]
    %v363 = vld [vmem:[#allocation2 + $0x440] sm:$0xff]
    %v364 = vld [vmem:[#allocation2 + $0x448] sm:$0xff]
    %v365 = vld [vmem:[#allocation2 + $0x450] sm:$0xff]
    %v366 = vld [vmem:[#allocation2 + $0x458] sm:$0xff]
    %v367 = vld [vmem:[#allocation2 + $0x460] sm:$0xff]
    %v368 = vld [vmem:[#allocation2 + $0x468] sm:$0xff]
    %v369 = vld [vmem:[#allocation2 + $0x470] sm:$0xff]
    %v370 = vld [vmem:[#allocation2 + $0x478] sm:$0xff]
    %v371 = vld [vmem:[#allocation2 + $0x480] sm:$0xff]
    %v372 = vld [vmem:[#allocation2 + $0x488] sm:$0xff]
    %v373 = vld [vmem:[#allocation2 + $0x490] sm:$0xff]
    %v374 = vld [vmem:[#allocation2 + $0x498] sm:$0xff]
    %v375 = vld [vmem:[#allocation2 + $0x4a0] sm:$0xff]
    %v376 = vld [vmem:[#allocation2 + $0x4a8] sm:$0xff]
    %v377 = vld [vmem:[#allocation2 + $0x4b0] sm:$0xff]
    %v378 = vld [vmem:[#allocation2 + $0x4b8] sm:$0xff]
    %v379 = vld [vmem:[#allocation2 + $0x4c0] sm:$0xff]
    %v380 = vld [vmem:[#allocation2 + $0x4c8] sm:$0xff]
    %v381 = vld [vmem:[#allocation2 + $0x4d0] sm:$0xff]
    %v382 = vld [vmem:[#allocation2 + $0x4d8] sm:$0xff]
    %v383 = vld [vmem:[#allocation2 + $0x4e0] sm:$0xff]
    %v384 = vld [vmem:[#allocation2 + $0x4e8] sm:$0xff]
    %v385 = vld [vmem:[#allocation2 + $0x4f0] sm:$0xff]
    %v386 = vld [vmem:[#allocation2 + $0x4f8] sm:$0xff]
    %v387 = vld [vmem:[#allocation2 + $0x500] sm:$0xff]
    %v388 = vld [vmem:[#allocation2 + $0x508] sm:$0xff]
    %v389 = vld [vmem:[#allocation2 + $0x510] sm:$0xff]
    %v390 = vld [vmem:[#allocation2 + $0x518] sm:$0xff]
    %v391 = vld [vmem:[#allocation2 + $0x520] sm:$0xff]
    %v392 = vld [vmem:[#allocation2 + $0x528] sm:$0xff]
    %v393 = vld [vmem:[#allocation2 + $0x530] sm:$0xff]
    %v394 = vld [vmem:[#allocation2 + $0x538] sm:$0xff]
    %v395 = vld [vmem:[#allocation2 + $0x540] sm:$0xff]
    %v396 = vld [vmem:[#allocation2 + $0x548] sm:$0xff]
    %v397 = vld [vmem:[#allocation2 + $0x550] sm:$0xff]
    %v398 = vld [vmem:[#allocation2 + $0x558] sm:$0xff]
    %v399 = vld [vmem:[#allocation2 + $0x560] sm:$0xff]
    %v400 = vld [vmem:[#allocation2 + $0x568] sm:$0xff]
    %v401 = vld [vmem:[#allocation2 + $0x570] sm:$0xff]
    %v402 = vld [vmem:[#allocation2 + $0x578] sm:$0xff]
    %v403 = vld [vmem:[#allocation2 + $0x580] sm:$0xff]
    %v404 = vld [vmem:[#allocation2 + $0x588] sm:$0xff]
    %v405 = vld [vmem:[#allocation2 + $0x590] sm:$0xff]
    %v406 = vld [vmem:[#allocation2 + $0x598] sm:$0xff]
    %v407 = vld [vmem:[#allocation2 + $0x5a0] sm:$0xff]
    %v408 = vld [vmem:[#allocation2 + $0x5a8] sm:$0xff]
    %v409 = vld [vmem:[#allocation2 + $0x5b0] sm:$0xff]
    %v410 = vld [vmem:[#allocation2 + $0x5b8] sm:$0xff]
    %v411 = vld [vmem:[#allocation2 + $0x5c0] sm:$0xff]
    %v412 = vld [vmem:[#allocation2 + $0x5c8] sm:$0xff]
    %v413 = vld [vmem:[#allocation2 + $0x5d0] sm:$0xff]
    %v414 = vld [vmem:[#allocation2 + $0x5d8] sm:$0xff]
    %v415 = vld [vmem:[#allocation2 + $0x5e0] sm:$0xff]
    %v416 = vld [vmem:[#allocation2 + $0x5e8] sm:$0xff]
    %v417 = vld [vmem:[#allocation2 + $0x5f0] sm:$0xff]
    %v418 = vld [vmem:[#allocation2 + $0x5f8] sm:$0xff]
    %v419 = vld [vmem:[#allocation2 + $0x600] sm:$0xff]
    %v420 = vld [vmem:[#allocation2 + $0x608] sm:$0xff]
    %v421 = vld [vmem:[#allocation2 + $0x610] sm:$0xff]
    %v422 = vld [vmem:[#allocation2 + $0x618] sm:$0xff]
    %v423 = vld [vmem:[#allocation2 + $0x620] sm:$0xff]
    %v424 = vld [vmem:[#allocation2 + $0x628] sm:$0xff]
    %v425 = vld [vmem:[#allocation2 + $0x630] sm:$0xff]
    %v426 = vld [vmem:[#allocation2 + $0x638] sm:$0xff]
    %v427 = vld [vmem:[#allocation2 + $0x640] sm:$0xff]
    %v428 = vld [vmem:[#allocation2 + $0x648] sm:$0xff]
    %v429 = vld [vmem:[#allocation2 + $0x650] sm:$0xff]
    %v430 = vld [vmem:[#allocation2 + $0x658] sm:$0xff]
    %v431 = vld [vmem:[#allocation2 + $0x660] sm:$0xff]
    %v432 = vld [vmem:[#allocation2 + $0x668] sm:$0xff]
    %v433 = vld [vmem:[#allocation2 + $0x670] sm:$0xff]
    %v434 = vld [vmem:[#allocation2 + $0x678] sm:$0xff]
    %v435 = vld [vmem:[#allocation2 + $0x680] sm:$0xff]
    %v436 = vld [vmem:[#allocation2 + $0x688] sm:$0xff]
    %v437 = vld [vmem:[#allocation2 + $0x690] sm:$0xff]
    %v438 = vld [vmem:[#allocation2 + $0x698] sm:$0xff]
    %v439 = vld [vmem:[#allocation2 + $0x6a0] sm:$0xff]
    %v440 = vld [vmem:[#allocation2 + $0x6a8] sm:$0xff]
    %v441 = vld [vmem:[#allocation2 + $0x6b0] sm:$0xff]
    %v442 = vld [vmem:[#allocation2 + $0x6b8] sm:$0xff]
    %v443 = vld [vmem:[#allocation2 + $0x6c0] sm:$0xff]
    %v444 = vld [vmem:[#allocation2 + $0x6c8] sm:$0xff]
    %v445 = vld [vmem:[#allocation2 + $0x6d0] sm:$0xff]
    %v446 = vld [vmem:[#allocation2 + $0x6d8] sm:$0xff]
    %v447 = vld [vmem:[#allocation2 + $0x6e0] sm:$0xff]
    %v448 = vld [vmem:[#allocation2 + $0x6e8] sm:$0xff]
    %v449 = vld [vmem:[#allocation2 + $0x6f0] sm:$0xff]
    %v450 = vld [vmem:[#allocation2 + $0x6f8] sm:$0xff]
    %v451 = vld [vmem:[#allocation2 + $0x700] sm:$0xff]
    %v452 = vld [vmem:[#allocation2 + $0x708] sm:$0xff]
    %v453 = vld [vmem:[#allocation2 + $0x710] sm:$0xff]
    %v454 = vld [vmem:[#allocation2 + $0x718] sm:$0xff]
    %v455 = vld [vmem:[#allocation2 + $0x720] sm:$0xff]
    %v456 = vld [vmem:[#allocation2 + $0x728] sm:$0xff]
    %v457 = vld [vmem:[#allocation2 + $0x730] sm:$0xff]
    %v458 = vld [vmem:[#allocation2 + $0x738] sm:$0xff]
    %v459 = vld [vmem:[#allocation2 + $0x740] sm:$0xff]
    %v460 = vld [vmem:[#allocation2 + $0x748] sm:$0xff]
    %v461 = vld [vmem:[#allocation2 + $0x750] sm:$0xff]
    %v462 = vld [vmem:[#allocation2 + $0x758] sm:$0xff]
    %v463 = vld [vmem:[#allocation2 + $0x760] sm:$0xff]
    %v464 = vld [vmem:[#allocation2 + $0x768] sm:$0xff]
    %v465 = vld [vmem:[#allocation2 + $0x770] sm:$0xff]
    %v466 = vld [vmem:[#allocation2 + $0x778] sm:$0xff]
    %v467 = vld [vmem:[#allocation2 + $0x780] sm:$0xff]
    %v468 = vld [vmem:[#allocation2 + $0x788] sm:$0xff]
    %v469 = vld [vmem:[#allocation2 + $0x790] sm:$0xff]
    %v470 = vld [vmem:[#allocation2 + $0x798] sm:$0xff]
    %v471 = vld [vmem:[#allocation2 + $0x7a0] sm:$0xff]
    %v472 = vld [vmem:[#allocation2 + $0x7a8] sm:$0xff]
    %v473 = vld [vmem:[#allocation2 + $0x7b0] sm:$0xff]
    %v474 = vld [vmem:[#allocation2 + $0x7b8] sm:$0xff]
    %v475 = vld [vmem:[#allocation2 + $0x7c0] sm:$0xff]
    %v476 = vld [vmem:[#allocation2 + $0x7c8] sm:$0xff]
    %v477 = vld [vmem:[#allocation2 + $0x7d0] sm:$0xff]
    %v478 = vld [vmem:[#allocation2 + $0x7d8] sm:$0xff]
    %v479 = vld [vmem:[#allocation2 + $0x7e0] sm:$0xff]
    %v480 = vld [vmem:[#allocation2 + $0x7e8] sm:$0xff]
    %v481 = vld [vmem:[#allocation2 + $0x7f0] sm:$0xff]
    %v482 = vld [vmem:[#allocation2 + $0x7f8] sm:$0xff]
    %v483 = vld [vmem:[#allocation2 + $0x800] sm:$0xff]
    %v484 = vld [vmem:[#allocation2 + $0x808] sm:$0xff]
    %v485 = vld [vmem:[#allocation2 + $0x810] sm:$0xff]
    %v486 = vld [vmem:[#allocation2 + $0x818] sm:$0xff]
    %v487 = vld [vmem:[#allocation2 + $0x820] sm:$0xff]
    %v488 = vld [vmem:[#allocation2 + $0x828] sm:$0xff]
    %v489 = vld [vmem:[#allocation2 + $0x830] sm:$0xff]
    %v490 = vld [vmem:[#allocation2 + $0x838] sm:$0xff]
    %v491 = vld [vmem:[#allocation2 + $0x840] sm:$0xff]
    %v492 = vld [vmem:[#allocation2 + $0x848] sm:$0xff]
    %v493 = vld [vmem:[#allocation2 + $0x850] sm:$0xff]
    %v494 = vld [vmem:[#allocation2 + $0x858] sm:$0xff]
    %v495 = vld [vmem:[#allocation2 + $0x860] sm:$0xff]
    %v496 = vld [vmem:[#allocation2 + $0x868] sm:$0xff]
    %v497 = vld [vmem:[#allocation2 + $0x870] sm:$0xff]
    %v498 = vld [vmem:[#allocation2 + $0x878] sm:$0xff]
    %v499 = vld [vmem:[#allocation2 + $0x880] sm:$0xff]
    %v500 = vld [vmem:[#allocation2 + $0x888] sm:$0xff]
    %v501 = vld [vmem:[#allocation2 + $0x890] sm:$0xff]
    %v502 = vld [vmem:[#allocation2 + $0x898] sm:$0xff]
    %v503 = vld [vmem:[#allocation2 + $0x8a0] sm:$0xff]
    %v504 = vld [vmem:[#allocation2 + $0x8a8] sm:$0xff]
    %v505 = vld [vmem:[#allocation2 + $0x8b0] sm:$0xff]
    %v506 = vld [vmem:[#allocation2 + $0x8b8] sm:$0xff]
    %v507 = vld [vmem:[#allocation2 + $0x8c0] sm:$0xff]
    %v508 = vld [vmem:[#allocation2 + $0x8c8] sm:$0xff]
    %v509 = vld [vmem:[#allocation2 + $0x8d0] sm:$0xff]
    %v510 = vld [vmem:[#allocation2 + $0x8d8] sm:$0xff]
    %v511 = vld [vmem:[#allocation2 + $0x8e0] sm:$0xff]
    %v512 = vld [vmem:[#allocation2 + $0x8e8] sm:$0xff]
    %v513 = vld [vmem:[#allocation2 + $0x8f0] sm:$0xff]
    %v514 = vld [vmem:[#allocation2 + $0x8f8] sm:$0xff]
    %v515 = vld [vmem:[#allocation2 + $0x900] sm:$0xff]
    %v516 = vld [vmem:[#allocation2 + $0x908] sm:$0xff]
    %v517 = vld [vmem:[#allocation2 + $0x910] sm:$0xff]
    %v518 = vld [vmem:[#allocation2 + $0x918] sm:$0xff]
    %v519 = vld [vmem:[#allocation2 + $0x920] sm:$0xff]
    %v520 = vld [vmem:[#allocation2 + $0x928] sm:$0xff]
    %v521 = vld [vmem:[#allocation2 + $0x930] sm:$0xff]
    %v522 = vld [vmem:[#allocation2 + $0x938] sm:$0xff]
    %v523 = vld [vmem:[#allocation2 + $0x940] sm:$0xff]
    %v524 = vld [vmem:[#allocation2 + $0x948] sm:$0xff]
    %v525 = vld [vmem:[#allocation2 + $0x950] sm:$0xff]
    %v526 = vld [vmem:[#allocation2 + $0x958] sm:$0xff]
    %v527 = vld [vmem:[#allocation2 + $0x960] sm:$0xff]
    %v528 = vld [vmem:[#allocation2 + $0x968] sm:$0xff]
    %v529 = vld [vmem:[#allocation2 + $0x970] sm:$0xff]
    %v530 = vld [vmem:[#allocation2 + $0x978] sm:$0xff]
    %v531 = vld [vmem:[#allocation2 + $0x980] sm:$0xff]
    %v532 = vld [vmem:[#allocation2 + $0x988] sm:$0xff]
    %v533 = vld [vmem:[#allocation2 + $0x990] sm:$0xff]
    %v534 = vld [vmem:[#allocation2 + $0x998] sm:$0xff]
    %v535 = vld [vmem:[#allocation2 + $0x9a0] sm:$0xff]
    %v536 = vld [vmem:[#allocation2 + $0x9a8] sm:$0xff]
    %v537 = vld [vmem:[#allocation2 + $0x9b0] sm:$0xff]
    %v538 = vld [vmem:[#allocation2 + $0x9b8] sm:$0xff]
    %v539 = vld [vmem:[#allocation2 + $0x9c0] sm:$0xff]
    %v540 = vld [vmem:[#allocation2 + $0x9c8] sm:$0xff]
    %v541 = vld [vmem:[#allocation2 + $0x9d0] sm:$0xff]
    %v542 = vld [vmem:[#allocation2 + $0x9d8] sm:$0xff]
    %v543 = vld [vmem:[#allocation2 + $0x9e0] sm:$0xff]
    %v544 = vld [vmem:[#allocation2 + $0x9e8] sm:$0xff]
    %v545 = vld [vmem:[#allocation2 + $0x9f0] sm:$0xff]
    %v546 = vld [vmem:[#allocation2 + $0x9f8] sm:$0xff]
    %v547 = vld [vmem:[#allocation2 + $0xa00] sm:$0xff]
    %v548 = vld [vmem:[#allocation2 + $0xa08] sm:$0xff]
    %v549 = vld [vmem:[#allocation2 + $0xa10] sm:$0xff]
    %v550 = vld [vmem:[#allocation2 + $0xa18] sm:$0xff]
    %v551 = vld [vmem:[#allocation2 + $0xa20] sm:$0xff]
    %v552 = vld [vmem:[#allocation2 + $0xa28] sm:$0xff]
    %v553 = vld [vmem:[#allocation2 + $0xa30] sm:$0xff]
    %v554 = vld [vmem:[#allocation2 + $0xa38] sm:$0xff]
    %v555 = vld [vmem:[#allocation2 + $0xa40] sm:$0xff]
    %v556 = vld [vmem:[#allocation2 + $0xa48] sm:$0xff]
    %v557 = vld [vmem:[#allocation2 + $0xa50] sm:$0xff]
    %v558 = vld [vmem:[#allocation2 + $0xa58] sm:$0xff]
    %v559 = vld [vmem:[#allocation2 + $0xa60] sm:$0xff]
    %v560 = vld [vmem:[#allocation2 + $0xa68] sm:$0xff]
    %v561 = vld [vmem:[#allocation2 + $0xa70] sm:$0xff]
    %v562 = vld [vmem:[#allocation2 + $0xa78] sm:$0xff]
    %v563 = vld [vmem:[#allocation2 + $0xa80] sm:$0xff]
    %v564 = vld [vmem:[#allocation2 + $0xa88] sm:$0xff]
    %v565 = vld [vmem:[#allocation2 + $0xa90] sm:$0xff]
    %v566 = vld [vmem:[#allocation2 + $0xa98] sm:$0xff]
    %v567 = vld [vmem:[#allocation2 + $0xaa0] sm:$0xff]
    %v568 = vld [vmem:[#allocation2 + $0xaa8] sm:$0xff]
    %v569 = vld [vmem:[#allocation2 + $0xab0] sm:$0xff]
    %v570 = vld [vmem:[#allocation2 + $0xab8] sm:$0xff]
    %v571 = vld [vmem:[#allocation2 + $0xac0] sm:$0xff]
    %v572 = vld [vmem:[#allocation2 + $0xac8] sm:$0xff]
    %v573 = vld [vmem:[#allocation2 + $0xad0] sm:$0xff]
    %v574 = vld [vmem:[#allocation2 + $0xad8] sm:$0xff]
    %v575 = vld [vmem:[#allocation2 + $0xae0] sm:$0xff]
    %v576 = vld [vmem:[#allocation2 + $0xae8] sm:$0xff]
    %v577 = vld [vmem:[#allocation2 + $0xaf0] sm:$0xff]
    %v578 = vld [vmem:[#allocation2 + $0xaf8] sm:$0xff]
    %v579 = vld [vmem:[#allocation2 + $0xb00] sm:$0xff]
    %v580 = vld [vmem:[#allocation2 + $0xb08] sm:$0xff]
    %v581 = vld [vmem:[#allocation2 + $0xb10] sm:$0xff]
    %v582 = vld [vmem:[#allocation2 + $0xb18] sm:$0xff]
    %v583 = vld [vmem:[#allocation2 + $0xb20] sm:$0xff]
    %v584 = vld [vmem:[#allocation2 + $0xb28] sm:$0xff]
    %v585 = vld [vmem:[#allocation2 + $0xb30] sm:$0xff]
    %v586 = vld [vmem:[#allocation2 + $0xb38] sm:$0xff]
    %v587 = vld [vmem:[#allocation2 + $0xb40] sm:$0xff]
    %v588 = vld [vmem:[#allocation2 + $0xb48] sm:$0xff]
    %v589 = vld [vmem:[#allocation2 + $0xb50] sm:$0xff]
    %v590 = vld [vmem:[#allocation2 + $0xb58] sm:$0xff]
    %v591 = vld [vmem:[#allocation2 + $0xb60] sm:$0xff]
    %v592 = vld [vmem:[#allocation2 + $0xb68] sm:$0xff]
    %v593 = vld [vmem:[#allocation2 + $0xb70] sm:$0xff]
    %v594 = vld [vmem:[#allocation2 + $0xb78] sm:$0xff]
    %v595 = vld [vmem:[#allocation2 + $0xb80] sm:$0xff]
    %v596 = vld [vmem:[#allocation2 + $0xb88] sm:$0xff]
    %v597 = vld [vmem:[#allocation2 + $0xb90] sm:$0xff]
    %v598 = vld [vmem:[#allocation2 + $0xb98] sm:$0xff]
    %v599 = vld [vmem:[#allocation2 + $0xba0] sm:$0xff]
    %v600 = vld [vmem:[#allocation2 + $0xba8] sm:$0xff]
    %v601 = vld [vmem:[#allocation2 + $0xbb0] sm:$0xff]
    %v602 = vld [vmem:[#allocation2 + $0xbb8] sm:$0xff]
    %v603 = vld [vmem:[#allocation2 + $0xbc0] sm:$0xff]
    %v604 = vld [vmem:[#allocation2 + $0xbc8] sm:$0xff]
    %v605 = vld [vmem:[#allocation2 + $0xbd0] sm:$0xff]
    %v606 = vld [vmem:[#allocation2 + $0xbd8] sm:$0xff]
    %v607 = vld [vmem:[#allocation2 + $0xbe0] sm:$0xff]
    %v608 = vld [vmem:[#allocation2 + $0xbe8] sm:$0xff]
    %v609 = vld [vmem:[#allocation2 + $0xbf0] sm:$0xff]
    %v610 = vld [vmem:[#allocation2 + $0xbf8] sm:$0xff]
    %v611 = vld [vmem:[#allocation2 + $0xc00] sm:$0xff]
    %v612 = vld [vmem:[#allocation2 + $0xc08] sm:$0xff]
    %v613 = vld [vmem:[#allocation2 + $0xc10] sm:$0xff]
    %v614 = vld [vmem:[#allocation2 + $0xc18] sm:$0xff]
    %v615 = vld [vmem:[#allocation2 + $0xc20] sm:$0xff]
    %v616 = vld [vmem:[#allocation2 + $0xc28] sm:$0xff]
    %v617 = vld [vmem:[#allocation2 + $0xc30] sm:$0xff]
    %v618 = vld [vmem:[#allocation2 + $0xc38] sm:$0xff]
    %v619 = vld [vmem:[#allocation2 + $0xc40] sm:$0xff]
    %v620 = vld [vmem:[#allocation2 + $0xc48] sm:$0xff]
    %v621 = vld [vmem:[#allocation2 + $0xc50] sm:$0xff]
    %v622 = vld [vmem:[#allocation2 + $0xc58] sm:$0xff]
    %v623 = vld [vmem:[#allocation2 + $0xc60] sm:$0xff]
    %v624 = vld [vmem:[#allocation2 + $0xc68] sm:$0xff]
    %v625 = vld [vmem:[#allocation2 + $0xc70] sm:$0xff]
    %v626 = vld [vmem:[#allocation2 + $0xc78] sm:$0xff]
    %v627 = vld [vmem:[#allocation2 + $0xc80] sm:$0xff]
    %v628 = vld [vmem:[#allocation2 + $0xc88] sm:$0xff]
    %v629 = vld [vmem:[#allocation2 + $0xc90] sm:$0xff]
    %v630 = vld [vmem:[#allocation2 + $0xc98] sm:$0xff]
    %v631 = vld [vmem:[#allocation2 + $0xca0] sm:$0xff]
    %v632 = vld [vmem:[#allocation2 + $0xca8] sm:$0xff]
    %v633 = vld [vmem:[#allocation2 + $0xcb0] sm:$0xff]
    %v634 = vld [vmem:[#allocation2 + $0xcb8] sm:$0xff]
    %v635 = vld [vmem:[#allocation2 + $0xcc0] sm:$0xff]
    %v636 = vld [vmem:[#allocation2 + $0xcc8] sm:$0xff]
    %v637 = vld [vmem:[#allocation2 + $0xcd0] sm:$0xff]
    %v638 = vld [vmem:[#allocation2 + $0xcd8] sm:$0xff]
    %v639 = vld [vmem:[#allocation2 + $0xce0] sm:$0xff]
    %v640 = vld [vmem:[#allocation2 + $0xce8] sm:$0xff]
    %v641 = vld [vmem:[#allocation2 + $0xcf0] sm:$0xff]
    %v642 = vld [vmem:[#allocation2 + $0xcf8] sm:$0xff]
    %v643 = vld [vmem:[#allocation2 + $0xd00] sm:$0xff]
    %v644 = vld [vmem:[#allocation2 + $0xd08] sm:$0xff]
    %v645 = vld [vmem:[#allocation2 + $0xd10] sm:$0xff]
    %v646 = vld [vmem:[#allocation2 + $0xd18] sm:$0xff]
    %v647 = vld [vmem:[#allocation2 + $0xd20] sm:$0xff]
    %v648 = vld [vmem:[#allocation2 + $0xd28] sm:$0xff]
    %v649 = vld [vmem:[#allocation2 + $0xd30] sm:$0xff]
    %v650 = vld [vmem:[#allocation2 + $0xd38] sm:$0xff]
    %v651 = vld [vmem:[#allocation2 + $0xd40] sm:$0xff]
    %v652 = vld [vmem:[#allocation2 + $0xd48] sm:$0xff]
    %v653 = vld [vmem:[#allocation2 + $0xd50] sm:$0xff]
    %v654 = vld [vmem:[#allocation2 + $0xd58] sm:$0xff]
    %v655 = vld [vmem:[#allocation2 + $0xd60] sm:$0xff]
    %v656 = vld [vmem:[#allocation2 + $0xd68] sm:$0xff]
    %v657 = vld [vmem:[#allocation2 + $0xd70] sm:$0xff]
    %v658 = vld [vmem:[#allocation2 + $0xd78] sm:$0xff]
    %v659 = vld [vmem:[#allocation2 + $0xd80] sm:$0xff]
    %v660 = vld [vmem:[#allocation2 + $0xd88] sm:$0xff]
    %v661 = vld [vmem:[#allocation2 + $0xd90] sm:$0xff]
    %v662 = vld [vmem:[#allocation2 + $0xd98] sm:$0xff]
    %v663 = vld [vmem:[#allocation2 + $0xda0] sm:$0xff]
    %v664 = vld [vmem:[#allocation2 + $0xda8] sm:$0xff]
    %v665 = vld [vmem:[#allocation2 + $0xdb0] sm:$0xff]
    %v666 = vld [vmem:[#allocation2 + $0xdb8] sm:$0xff]
    %v667 = vld [vmem:[#allocation2 + $0xdc0] sm:$0xff]
    %v668 = vld [vmem:[#allocation2 + $0xdc8] sm:$0xff]
    %v669 = vld [vmem:[#allocation2 + $0xdd0] sm:$0xff]
    %v670 = vld [vmem:[#allocation2 + $0xdd8] sm:$0xff]
    %v671 = vld [vmem:[#allocation2 + $0xde0] sm:$0xff]
    %v672 = vld [vmem:[#allocation2 + $0xde8] sm:$0xff]
    %v673 = vld [vmem:[#allocation2 + $0xdf0] sm:$0xff]
    %v674 = vld [vmem:[#allocation2 + $0xdf8] sm:$0xff]
    %v675 = vld [vmem:[#allocation2 + $0xe00] sm:$0xff]
    %v676 = vld [vmem:[#allocation2 + $0xe08] sm:$0xff]
    %v677 = vld [vmem:[#allocation2 + $0xe10] sm:$0xff]
    %v678 = vld [vmem:[#allocation2 + $0xe18] sm:$0xff]
    %v679 = vld [vmem:[#allocation2 + $0xe20] sm:$0xff]
    %v680 = vld [vmem:[#allocation2 + $0xe28] sm:$0xff]
    %v681 = vld [vmem:[#allocation2 + $0xe30] sm:$0xff]
    %v682 = vld [vmem:[#allocation2 + $0xe38] sm:$0xff]
    %v683 = vld [vmem:[#allocation2 + $0xe40] sm:$0xff]
    %v684 = vld [vmem:[#allocation2 + $0xe48] sm:$0xff]
    %v685 = vld [vmem:[#allocation2 + $0xe50] sm:$0xff]
    %v686 = vld [vmem:[#allocation2 + $0xe58] sm:$0xff]
    %v687 = vld [vmem:[#allocation2 + $0xe60] sm:$0xff]
    %v688 = vld [vmem:[#allocation2 + $0xe68] sm:$0xff]
    %v689 = vld [vmem:[#allocation2 + $0xe70] sm:$0xff]
    %v690 = vld [vmem:[#allocation2 + $0xe78] sm:$0xff]
    %v691 = vld [vmem:[#allocation2 + $0xe80] sm:$0xff]
    %v692 = vld [vmem:[#allocation2 + $0xe88] sm:$0xff]
    %v693 = vld [vmem:[#allocation2 + $0xe90] sm:$0xff]
    %v694 = vld [vmem:[#allocation2 + $0xe98] sm:$0xff]
    %v695 = vld [vmem:[#allocation2 + $0xea0] sm:$0xff]
    %v696 = vld [vmem:[#allocation2 + $0xea8] sm:$0xff]
    %v697 = vld [vmem:[#allocation2 + $0xeb0] sm:$0xff]
    %v698 = vld [vmem:[#allocation2 + $0xeb8] sm:$0xff]
    %v699 = vld [vmem:[#allocation2 + $0xec0] sm:$0xff]
    %v700 = vld [vmem:[#allocation2 + $0xec8] sm:$0xff]
    %v701 = vld [vmem:[#allocation2 + $0xed0] sm:$0xff]
    %v702 = vld [vmem:[#allocation2 + $0xed8] sm:$0xff]
    %v703 = vld [vmem:[#allocation2 + $0xee0] sm:$0xff]
    %v704 = vld [vmem:[#allocation2 + $0xee8] sm:$0xff]
    %v705 = vld [vmem:[#allocation2 + $0xef0] sm:$0xff]
    %v706 = vld [vmem:[#allocation2 + $0xef8] sm:$0xff]
    %v707 = vld [vmem:[#allocation2 + $0xf00] sm:$0xff]
    %v708 = vld [vmem:[#allocation2 + $0xf08] sm:$0xff]
    %v709 = vld [vmem:[#allocation2 + $0xf10] sm:$0xff]
    %v710 = vld [vmem:[#allocation2 + $0xf18] sm:$0xff]
    %v711 = vld [vmem:[#allocation2 + $0xf20] sm:$0xff]
    %v712 = vld [vmem:[#allocation2 + $0xf28] sm:$0xff]
    %v713 = vld [vmem:[#allocation2 + $0xf30] sm:$0xff]
    %v714 = vld [vmem:[#allocation2 + $0xf38] sm:$0xff]
    %v715 = vld [vmem:[#allocation2 + $0xf40] sm:$0xff]
    %v716 = vld [vmem:[#allocation2 + $0xf48] sm:$0xff]
    %v717 = vld [vmem:[#allocation2 + $0xf50] sm:$0xff]
    %v718 = vld [vmem:[#allocation2 + $0xf58] sm:$0xff]
    %v719 = vld [vmem:[#allocation2 + $0xf60] sm:$0xff]
    %v720 = vld [vmem:[#allocation2 + $0xf68] sm:$0xff]
    %v721 = vld [vmem:[#allocation2 + $0xf70] sm:$0xff]
    %v722 = vld [vmem:[#allocation2 + $0xf78] sm:$0xff]
    %v723 = vld [vmem:[#allocation2 + $0xf80] sm:$0xff]
    %v724 = vld [vmem:[#allocation2 + $0xf88] sm:$0xff]
    %v725 = vld [vmem:[#allocation2 + $0xf90] sm:$0xff]
    %v726 = vld [vmem:[#allocation2 + $0xf98] sm:$0xff]
    %v727 = vld [vmem:[#allocation2 + $0xfa0] sm:$0xff]
    %v728 = vld [vmem:[#allocation2 + $0xfa8] sm:$0xff]
    %v729 = vld [vmem:[#allocation2 + $0xfb0] sm:$0xff]
    %v730 = vld [vmem:[#allocation2 + $0xfb8] sm:$0xff]
    %v731 = vld [vmem:[#allocation2 + $0xfc0] sm:$0xff]
    %v732 = vld [vmem:[#allocation2 + $0xfc8] sm:$0xff]
    %v733 = vld [vmem:[#allocation2 + $0xfd0] sm:$0xff]
    %v734 = vld [vmem:[#allocation2 + $0xfd8] sm:$0xff]
    %v735 = vld [vmem:[#allocation2 + $0xfe0] sm:$0xff]
    %v736 = vld [vmem:[#allocation2 + $0xfe8] sm:$0xff]
    %v737 = vld [vmem:[#allocation2 + $0xff0] sm:$0xff]
    %v738 = vld [vmem:[#allocation2 + $0xff8] sm:$0xff]
    %v739 = vld [vmem:[#allocation4] sm:$0xff]
    %v741 = vlaneseq
    %v742 = vshrl.u32 %v741, 7
    %v743 = vsub.s32 0, %v742
    %v744 = vrot.slane %v739, %v743
    %v745 = vlaneseq
    %v746 = vshrl.u32 %v745, 7
    %v747 = vsub.s32 1, %v746
    %v748 = vrot.slane %v739, %v747
    %v749 = vlaneseq
    %v750 = vshrl.u32 %v749, 7
    %v751 = vsub.s32 2, %v750
    %v752 = vrot.slane %v739, %v751
    %v753 = vlaneseq
    %v754 = vshrl.u32 %v753, 7
    %v755 = vsub.s32 3, %v754
    %v756 = vrot.slane %v739, %v755
    %v757 = vlaneseq
    %v758 = vshrl.u32 %v757, 7
    %v759 = vsub.s32 4, %v758
    %v760 = vrot.slane %v739, %v759
    %v761 = vlaneseq
    %v762 = vshrl.u32 %v761, 7
    %v763 = vsub.s32 5, %v762
    %v764 = vrot.slane %v739, %v763
    %v765 = vlaneseq
    %v766 = vshrl.u32 %v765, 7
    %v767 = vsub.s32 6, %v766
    %v768 = vrot.slane %v739, %v767
    %v769 = vlaneseq
    %v770 = vshrl.u32 %v769, 7
    %v771 = vsub.s32 7, %v770
    %v772 = vrot.slane %v739, %v771
    %v785 = vunpack.c.l.b16 %v223
    %v786 = vunpack.c.h.b16 %v223
    %v787 = vunpack.c.l.b16 %v224
    %v788 = vunpack.c.h.b16 %v224
    %v789 = vunpack.c.l.b16 %v225
    %v790 = vunpack.c.h.b16 %v225
    %v791 = vunpack.c.l.b16 %v226
    %v792 = vunpack.c.h.b16 %v226
    %v793 = vpack.c.b16 %v785, %v785
    %v794 = vpack.c.b16 %v786, %v786
    %v795 = vpack.c.b16 %v787, %v787
    %v796 = vpack.c.b16 %v788, %v788
    %v797 = vpack.c.b16 %v789, %v789
    %v798 = vpack.c.b16 %v790, %v790
    %v799 = vpack.c.b16 %v791, %v791
    %v800 = vpack.c.b16 %v792, %v792
    %v1321 = vunpack.c.l.b16 %v227
    %v1322 = vunpack.c.h.b16 %v227
    %v1323 = vunpack.c.l.b16 %v228
    %v1324 = vunpack.c.h.b16 %v228
    %v1325 = vunpack.c.l.b16 %v229
    %v1326 = vunpack.c.h.b16 %v229
    %v1327 = vunpack.c.l.b16 %v230
    %v1328 = vunpack.c.h.b16 %v230
    %v1329 = vunpack.c.l.b16 %v231
    %v1330 = vunpack.c.h.b16 %v231
    %v1331 = vunpack.c.l.b16 %v232
    %v1332 = vunpack.c.h.b16 %v232
    %v1333 = vunpack.c.l.b16 %v233
    %v1334 = vunpack.c.h.b16 %v233
    %v1335 = vunpack.c.l.b16 %v234
    %v1336 = vunpack.c.h.b16 %v234
    %v1337 = vunpack.c.l.b16 %v235
    %v1338 = vunpack.c.h.b16 %v235
    %v1339 = vunpack.c.l.b16 %v236
    %v1340 = vunpack.c.h.b16 %v236
    %v1341 = vunpack.c.l.b16 %v237
    %v1342 = vunpack.c.h.b16 %v237
    %v1343 = vunpack.c.l.b16 %v238
    %v1344 = vunpack.c.h.b16 %v238
    %v1345 = vunpack.c.l.b16 %v239
    %v1346 = vunpack.c.h.b16 %v239
    %v1347 = vunpack.c.l.b16 %v240
    %v1348 = vunpack.c.h.b16 %v240
    %v1349 = vunpack.c.l.b16 %v241
    %v1350 = vunpack.c.h.b16 %v241
    %v1351 = vunpack.c.l.b16 %v242
    %v1352 = vunpack.c.h.b16 %v242
    %v1353 = vunpack.c.l.b16 %v243
    %v1354 = vunpack.c.h.b16 %v243
    %v1355 = vunpack.c.l.b16 %v244
    %v1356 = vunpack.c.h.b16 %v244
    %v1357 = vunpack.c.l.b16 %v245
    %v1358 = vunpack.c.h.b16 %v245
    %v1359 = vunpack.c.l.b16 %v246
    %v1360 = vunpack.c.h.b16 %v246
    %v1361 = vunpack.c.l.b16 %v247
    %v1362 = vunpack.c.h.b16 %v247
    %v1363 = vunpack.c.l.b16 %v248
    %v1364 = vunpack.c.h.b16 %v248
    %v1365 = vunpack.c.l.b16 %v249
    %v1366 = vunpack.c.h.b16 %v249
    %v1367 = vunpack.c.l.b16 %v250
    %v1368 = vunpack.c.h.b16 %v250
    %v1369 = vunpack.c.l.b16 %v251
    %v1370 = vunpack.c.h.b16 %v251
    %v1371 = vunpack.c.l.b16 %v252
    %v1372 = vunpack.c.h.b16 %v252
    %v1373 = vunpack.c.l.b16 %v253
    %v1374 = vunpack.c.h.b16 %v253
    %v1375 = vunpack.c.l.b16 %v254
    %v1376 = vunpack.c.h.b16 %v254
    %v1377 = vunpack.c.l.b16 %v255
    %v1378 = vunpack.c.h.b16 %v255
    %v1379 = vunpack.c.l.b16 %v256
    %v1380 = vunpack.c.h.b16 %v256
    %v1381 = vunpack.c.l.b16 %v257
    %v1382 = vunpack.c.h.b16 %v257
    %v1383 = vunpack.c.l.b16 %v258
    %v1384 = vunpack.c.h.b16 %v258
    %v1385 = vunpack.c.l.b16 %v259
    %v1386 = vunpack.c.h.b16 %v259
    %v1387 = vunpack.c.l.b16 %v260
    %v1388 = vunpack.c.h.b16 %v260
    %v1389 = vunpack.c.l.b16 %v261
    %v1390 = vunpack.c.h.b16 %v261
    %v1391 = vunpack.c.l.b16 %v262
    %v1392 = vunpack.c.h.b16 %v262
    %v1393 = vunpack.c.l.b16 %v263
    %v1394 = vunpack.c.h.b16 %v263
    %v1395 = vunpack.c.l.b16 %v264
    %v1396 = vunpack.c.h.b16 %v264
    %v1397 = vunpack.c.l.b16 %v265
    %v1398 = vunpack.c.h.b16 %v265
    %v1399 = vunpack.c.l.b16 %v266
    %v1400 = vunpack.c.h.b16 %v266
    %v1401 = vunpack.c.l.b16 %v267
    %v1402 = vunpack.c.h.b16 %v267
    %v1403 = vunpack.c.l.b16 %v268
    %v1404 = vunpack.c.h.b16 %v268
    %v1405 = vunpack.c.l.b16 %v269
    %v1406 = vunpack.c.h.b16 %v269
    %v1407 = vunpack.c.l.b16 %v270
    %v1408 = vunpack.c.h.b16 %v270
    %v1409 = vunpack.c.l.b16 %v271
    %v1410 = vunpack.c.h.b16 %v271
    %v1411 = vunpack.c.l.b16 %v272
    %v1412 = vunpack.c.h.b16 %v272
    %v1413 = vunpack.c.l.b16 %v273
    %v1414 = vunpack.c.h.b16 %v273
    %v1415 = vunpack.c.l.b16 %v274
    %v1416 = vunpack.c.h.b16 %v274
    %v1417 = vunpack.c.l.b16 %v275
    %v1418 = vunpack.c.h.b16 %v275
    %v1419 = vunpack.c.l.b16 %v276
    %v1420 = vunpack.c.h.b16 %v276
    %v1421 = vunpack.c.l.b16 %v277
    %v1422 = vunpack.c.h.b16 %v277
    %v1423 = vunpack.c.l.b16 %v278
    %v1424 = vunpack.c.h.b16 %v278
    %v1425 = vunpack.c.l.b16 %v279
    %v1426 = vunpack.c.h.b16 %v279
    %v1427 = vunpack.c.l.b16 %v280
    %v1428 = vunpack.c.h.b16 %v280
    %v1429 = vunpack.c.l.b16 %v281
    %v1430 = vunpack.c.h.b16 %v281
    %v1431 = vunpack.c.l.b16 %v282
    %v1432 = vunpack.c.h.b16 %v282
    %v1433 = vunpack.c.l.b16 %v283
    %v1434 = vunpack.c.h.b16 %v283
    %v1435 = vunpack.c.l.b16 %v284
    %v1436 = vunpack.c.h.b16 %v284
    %v1437 = vunpack.c.l.b16 %v285
    %v1438 = vunpack.c.h.b16 %v285
    %v1439 = vunpack.c.l.b16 %v286
    %v1440 = vunpack.c.h.b16 %v286
    %v1441 = vunpack.c.l.b16 %v287
    %v1442 = vunpack.c.h.b16 %v287
    %v1443 = vunpack.c.l.b16 %v288
    %v1444 = vunpack.c.h.b16 %v288
    %v1445 = vunpack.c.l.b16 %v289
    %v1446 = vunpack.c.h.b16 %v289
    %v1447 = vunpack.c.l.b16 %v290
    %v1448 = vunpack.c.h.b16 %v290
    %v1449 = vunpack.c.l.b16 %v291
    %v1450 = vunpack.c.h.b16 %v291
    %v1451 = vunpack.c.l.b16 %v292
    %v1452 = vunpack.c.h.b16 %v292
    %v1453 = vunpack.c.l.b16 %v293
    %v1454 = vunpack.c.h.b16 %v293
    %v1455 = vunpack.c.l.b16 %v294
    %v1456 = vunpack.c.h.b16 %v294
    %v1457 = vunpack.c.l.b16 %v295
    %v1458 = vunpack.c.h.b16 %v295
    %v1459 = vunpack.c.l.b16 %v296
    %v1460 = vunpack.c.h.b16 %v296
    %v1461 = vunpack.c.l.b16 %v297
    %v1462 = vunpack.c.h.b16 %v297
    %v1463 = vunpack.c.l.b16 %v298
    %v1464 = vunpack.c.h.b16 %v298
    %v1465 = vunpack.c.l.b16 %v299
    %v1466 = vunpack.c.h.b16 %v299
    %v1467 = vunpack.c.l.b16 %v300
    %v1468 = vunpack.c.h.b16 %v300
    %v1469 = vunpack.c.l.b16 %v301
    %v1470 = vunpack.c.h.b16 %v301
    %v1471 = vunpack.c.l.b16 %v302
    %v1472 = vunpack.c.h.b16 %v302
    %v1473 = vunpack.c.l.b16 %v303
    %v1474 = vunpack.c.h.b16 %v303
    %v1475 = vunpack.c.l.b16 %v304
    %v1476 = vunpack.c.h.b16 %v304
    %v1477 = vunpack.c.l.b16 %v305
    %v1478 = vunpack.c.h.b16 %v305
    %v1479 = vunpack.c.l.b16 %v306
    %v1480 = vunpack.c.h.b16 %v306
    %v1481 = vunpack.c.l.b16 %v307
    %v1482 = vunpack.c.h.b16 %v307
    %v1483 = vunpack.c.l.b16 %v308
    %v1484 = vunpack.c.h.b16 %v308
    %v1485 = vunpack.c.l.b16 %v309
    %v1486 = vunpack.c.h.b16 %v309
    %v1487 = vunpack.c.l.b16 %v310
    %v1488 = vunpack.c.h.b16 %v310
    %v1489 = vunpack.c.l.b16 %v311
    %v1490 = vunpack.c.h.b16 %v311
    %v1491 = vunpack.c.l.b16 %v312
    %v1492 = vunpack.c.h.b16 %v312
    %v1493 = vunpack.c.l.b16 %v313
    %v1494 = vunpack.c.h.b16 %v313
    %v1495 = vunpack.c.l.b16 %v314
    %v1496 = vunpack.c.h.b16 %v314
    %v1497 = vunpack.c.l.b16 %v315
    %v1498 = vunpack.c.h.b16 %v315
    %v1499 = vunpack.c.l.b16 %v316
    %v1500 = vunpack.c.h.b16 %v316
    %v1501 = vunpack.c.l.b16 %v317
    %v1502 = vunpack.c.h.b16 %v317
    %v1503 = vunpack.c.l.b16 %v318
    %v1504 = vunpack.c.h.b16 %v318
    %v1505 = vunpack.c.l.b16 %v319
    %v1506 = vunpack.c.h.b16 %v319
    %v1507 = vunpack.c.l.b16 %v320
    %v1508 = vunpack.c.h.b16 %v320
    %v1509 = vunpack.c.l.b16 %v321
    %v1510 = vunpack.c.h.b16 %v321
    %v1511 = vunpack.c.l.b16 %v322
    %v1512 = vunpack.c.h.b16 %v322
    %v1513 = vunpack.c.l.b16 %v323
    %v1514 = vunpack.c.h.b16 %v323
    %v1515 = vunpack.c.l.b16 %v324
    %v1516 = vunpack.c.h.b16 %v324
    %v1517 = vunpack.c.l.b16 %v325
    %v1518 = vunpack.c.h.b16 %v325
    %v1519 = vunpack.c.l.b16 %v326
    %v1520 = vunpack.c.h.b16 %v326
    %v1521 = vunpack.c.l.b16 %v327
    %v1522 = vunpack.c.h.b16 %v327
    %v1523 = vunpack.c.l.b16 %v328
    %v1524 = vunpack.c.h.b16 %v328
    %v1525 = vunpack.c.l.b16 %v329
    %v1526 = vunpack.c.h.b16 %v329
    %v1527 = vunpack.c.l.b16 %v330
    %v1528 = vunpack.c.h.b16 %v330
    %v1529 = vunpack.c.l.b16 %v331
    %v1530 = vunpack.c.h.b16 %v331
    %v1531 = vunpack.c.l.b16 %v332
    %v1532 = vunpack.c.h.b16 %v332
    %v1533 = vunpack.c.l.b16 %v333
    %v1534 = vunpack.c.h.b16 %v333
    %v1535 = vunpack.c.l.b16 %v334
    %v1536 = vunpack.c.h.b16 %v334
    %v1537 = vunpack.c.l.b16 %v335
    %v1538 = vunpack.c.h.b16 %v335
    %v1539 = vunpack.c.l.b16 %v336
    %v1540 = vunpack.c.h.b16 %v336
    %v1541 = vunpack.c.l.b16 %v337
    %v1542 = vunpack.c.h.b16 %v337
    %v1543 = vunpack.c.l.b16 %v338
    %v1544 = vunpack.c.h.b16 %v338
    %v1545 = vunpack.c.l.b16 %v339
    %v1546 = vunpack.c.h.b16 %v339
    %v1547 = vunpack.c.l.b16 %v340
    %v1548 = vunpack.c.h.b16 %v340
    %v1549 = vunpack.c.l.b16 %v341
    %v1550 = vunpack.c.h.b16 %v341
    %v1551 = vunpack.c.l.b16 %v342
    %v1552 = vunpack.c.h.b16 %v342
    %v1553 = vunpack.c.l.b16 %v343
    %v1554 = vunpack.c.h.b16 %v343
    %v1555 = vunpack.c.l.b16 %v344
    %v1556 = vunpack.c.h.b16 %v344
    %v1557 = vunpack.c.l.b16 %v345
    %v1558 = vunpack.c.h.b16 %v345
    %v1559 = vunpack.c.l.b16 %v346
    %v1560 = vunpack.c.h.b16 %v346
    %v1561 = vunpack.c.l.b16 %v347
    %v1562 = vunpack.c.h.b16 %v347
    %v1563 = vunpack.c.l.b16 %v348
    %v1564 = vunpack.c.h.b16 %v348
    %v1565 = vunpack.c.l.b16 %v349
    %v1566 = vunpack.c.h.b16 %v349
    %v1567 = vunpack.c.l.b16 %v350
    %v1568 = vunpack.c.h.b16 %v350
    %v1569 = vunpack.c.l.b16 %v351
    %v1570 = vunpack.c.h.b16 %v351
    %v1571 = vunpack.c.l.b16 %v352
    %v1572 = vunpack.c.h.b16 %v352
    %v1573 = vunpack.c.l.b16 %v353
    %v1574 = vunpack.c.h.b16 %v353
    %v1575 = vunpack.c.l.b16 %v354
    %v1576 = vunpack.c.h.b16 %v354
    %v1577 = vunpack.c.l.b16 %v355
    %v1578 = vunpack.c.h.b16 %v355
    %v1579 = vunpack.c.l.b16 %v356
    %v1580 = vunpack.c.h.b16 %v356
    %v1581 = vunpack.c.l.b16 %v357
    %v1582 = vunpack.c.h.b16 %v357
    %v1583 = vunpack.c.l.b16 %v358
    %v1584 = vunpack.c.h.b16 %v358
    %v1585 = vunpack.c.l.b16 %v359
    %v1586 = vunpack.c.h.b16 %v359
    %v1587 = vunpack.c.l.b16 %v360
    %v1588 = vunpack.c.h.b16 %v360
    %v1589 = vunpack.c.l.b16 %v361
    %v1590 = vunpack.c.h.b16 %v361
    %v1591 = vunpack.c.l.b16 %v362
    %v1592 = vunpack.c.h.b16 %v362
    %v1593 = vunpack.c.l.b16 %v363
    %v1594 = vunpack.c.h.b16 %v363
    %v1595 = vunpack.c.l.b16 %v364
    %v1596 = vunpack.c.h.b16 %v364
    %v1597 = vunpack.c.l.b16 %v365
    %v1598 = vunpack.c.h.b16 %v365
    %v1599 = vunpack.c.l.b16 %v366
    %v1600 = vunpack.c.h.b16 %v366
    %v1601 = vunpack.c.l.b16 %v367
    %v1602 = vunpack.c.h.b16 %v367
    %v1603 = vunpack.c.l.b16 %v368
    %v1604 = vunpack.c.h.b16 %v368
    %v1605 = vunpack.c.l.b16 %v369
    %v1606 = vunpack.c.h.b16 %v369
    %v1607 = vunpack.c.l.b16 %v370
    %v1608 = vunpack.c.h.b16 %v370
    %v1609 = vunpack.c.l.b16 %v371
    %v1610 = vunpack.c.h.b16 %v371
    %v1611 = vunpack.c.l.b16 %v372
    %v1612 = vunpack.c.h.b16 %v372
    %v1613 = vunpack.c.l.b16 %v373
    %v1614 = vunpack.c.h.b16 %v373
    %v1615 = vunpack.c.l.b16 %v374
    %v1616 = vunpack.c.h.b16 %v374
    %v1617 = vunpack.c.l.b16 %v375
    %v1618 = vunpack.c.h.b16 %v375
    %v1619 = vunpack.c.l.b16 %v376
    %v1620 = vunpack.c.h.b16 %v376
    %v1621 = vunpack.c.l.b16 %v377
    %v1622 = vunpack.c.h.b16 %v377
    %v1623 = vunpack.c.l.b16 %v378
    %v1624 = vunpack.c.h.b16 %v378
    %v1625 = vunpack.c.l.b16 %v379
    %v1626 = vunpack.c.h.b16 %v379
    %v1627 = vunpack.c.l.b16 %v380
    %v1628 = vunpack.c.h.b16 %v380
    %v1629 = vunpack.c.l.b16 %v381
    %v1630 = vunpack.c.h.b16 %v381
    %v1631 = vunpack.c.l.b16 %v382
    %v1632 = vunpack.c.h.b16 %v382
    %v1633 = vunpack.c.l.b16 %v383
    %v1634 = vunpack.c.h.b16 %v383
    %v1635 = vunpack.c.l.b16 %v384
    %v1636 = vunpack.c.h.b16 %v384
    %v1637 = vunpack.c.l.b16 %v385
    %v1638 = vunpack.c.h.b16 %v385
    %v1639 = vunpack.c.l.b16 %v386
    %v1640 = vunpack.c.h.b16 %v386
    %v1641 = vunpack.c.l.b16 %v387
    %v1642 = vunpack.c.h.b16 %v387
    %v1643 = vunpack.c.l.b16 %v388
    %v1644 = vunpack.c.h.b16 %v388
    %v1645 = vunpack.c.l.b16 %v389
    %v1646 = vunpack.c.h.b16 %v389
    %v1647 = vunpack.c.l.b16 %v390
    %v1648 = vunpack.c.h.b16 %v390
    %v1649 = vunpack.c.l.b16 %v391
    %v1650 = vunpack.c.h.b16 %v391
    %v1651 = vunpack.c.l.b16 %v392
    %v1652 = vunpack.c.h.b16 %v392
    %v1653 = vunpack.c.l.b16 %v393
    %v1654 = vunpack.c.h.b16 %v393
    %v1655 = vunpack.c.l.b16 %v394
    %v1656 = vunpack.c.h.b16 %v394
    %v1657 = vunpack.c.l.b16 %v395
    %v1658 = vunpack.c.h.b16 %v395
    %v1659 = vunpack.c.l.b16 %v396
    %v1660 = vunpack.c.h.b16 %v396
    %v1661 = vunpack.c.l.b16 %v397
    %v1662 = vunpack.c.h.b16 %v397
    %v1663 = vunpack.c.l.b16 %v398
    %v1664 = vunpack.c.h.b16 %v398
    %v1665 = vunpack.c.l.b16 %v399
    %v1666 = vunpack.c.h.b16 %v399
    %v1667 = vunpack.c.l.b16 %v400
    %v1668 = vunpack.c.h.b16 %v400
    %v1669 = vunpack.c.l.b16 %v401
    %v1670 = vunpack.c.h.b16 %v401
    %v1671 = vunpack.c.l.b16 %v402
    %v1672 = vunpack.c.h.b16 %v402
    %v1673 = vunpack.c.l.b16 %v403
    %v1674 = vunpack.c.h.b16 %v403
    %v1675 = vunpack.c.l.b16 %v404
    %v1676 = vunpack.c.h.b16 %v404
    %v1677 = vunpack.c.l.b16 %v405
    %v1678 = vunpack.c.h.b16 %v405
    %v1679 = vunpack.c.l.b16 %v406
    %v1680 = vunpack.c.h.b16 %v406
    %v1681 = vunpack.c.l.b16 %v407
    %v1682 = vunpack.c.h.b16 %v407
    %v1683 = vunpack.c.l.b16 %v408
    %v1684 = vunpack.c.h.b16 %v408
    %v1685 = vunpack.c.l.b16 %v409
    %v1686 = vunpack.c.h.b16 %v409
    %v1687 = vunpack.c.l.b16 %v410
    %v1688 = vunpack.c.h.b16 %v410
    %v1689 = vunpack.c.l.b16 %v411
    %v1690 = vunpack.c.h.b16 %v411
    %v1691 = vunpack.c.l.b16 %v412
    %v1692 = vunpack.c.h.b16 %v412
    %v1693 = vunpack.c.l.b16 %v413
    %v1694 = vunpack.c.h.b16 %v413
    %v1695 = vunpack.c.l.b16 %v414
    %v1696 = vunpack.c.h.b16 %v414
    %v1697 = vunpack.c.l.b16 %v415
    %v1698 = vunpack.c.h.b16 %v415
    %v1699 = vunpack.c.l.b16 %v416
    %v1700 = vunpack.c.h.b16 %v416
    %v1701 = vunpack.c.l.b16 %v417
    %v1702 = vunpack.c.h.b16 %v417
    %v1703 = vunpack.c.l.b16 %v418
    %v1704 = vunpack.c.h.b16 %v418
    %v1705 = vunpack.c.l.b16 %v419
    %v1706 = vunpack.c.h.b16 %v419
    %v1707 = vunpack.c.l.b16 %v420
    %v1708 = vunpack.c.h.b16 %v420
    %v1709 = vunpack.c.l.b16 %v421
    %v1710 = vunpack.c.h.b16 %v421
    %v1711 = vunpack.c.l.b16 %v422
    %v1712 = vunpack.c.h.b16 %v422
    %v1713 = vunpack.c.l.b16 %v423
    %v1714 = vunpack.c.h.b16 %v423
    %v1715 = vunpack.c.l.b16 %v424
    %v1716 = vunpack.c.h.b16 %v424
    %v1717 = vunpack.c.l.b16 %v425
    %v1718 = vunpack.c.h.b16 %v425
    %v1719 = vunpack.c.l.b16 %v426
    %v1720 = vunpack.c.h.b16 %v426
    %v1721 = vunpack.c.l.b16 %v427
    %v1722 = vunpack.c.h.b16 %v427
    %v1723 = vunpack.c.l.b16 %v428
    %v1724 = vunpack.c.h.b16 %v428
    %v1725 = vunpack.c.l.b16 %v429
    %v1726 = vunpack.c.h.b16 %v429
    %v1727 = vunpack.c.l.b16 %v430
    %v1728 = vunpack.c.h.b16 %v430
    %v1729 = vunpack.c.l.b16 %v431
    %v1730 = vunpack.c.h.b16 %v431
    %v1731 = vunpack.c.l.b16 %v432
    %v1732 = vunpack.c.h.b16 %v432
    %v1733 = vunpack.c.l.b16 %v433
    %v1734 = vunpack.c.h.b16 %v433
    %v1735 = vunpack.c.l.b16 %v434
    %v1736 = vunpack.c.h.b16 %v434
    %v1737 = vunpack.c.l.b16 %v435
    %v1738 = vunpack.c.h.b16 %v435
    %v1739 = vunpack.c.l.b16 %v436
    %v1740 = vunpack.c.h.b16 %v436
    %v1741 = vunpack.c.l.b16 %v437
    %v1742 = vunpack.c.h.b16 %v437
    %v1743 = vunpack.c.l.b16 %v438
    %v1744 = vunpack.c.h.b16 %v438
    %v1745 = vunpack.c.l.b16 %v439
    %v1746 = vunpack.c.h.b16 %v439
    %v1747 = vunpack.c.l.b16 %v440
    %v1748 = vunpack.c.h.b16 %v440
    %v1749 = vunpack.c.l.b16 %v441
    %v1750 = vunpack.c.h.b16 %v441
    %v1751 = vunpack.c.l.b16 %v442
    %v1752 = vunpack.c.h.b16 %v442
    %v1753 = vunpack.c.l.b16 %v443
    %v1754 = vunpack.c.h.b16 %v443
    %v1755 = vunpack.c.l.b16 %v444
    %v1756 = vunpack.c.h.b16 %v444
    %v1757 = vunpack.c.l.b16 %v445
    %v1758 = vunpack.c.h.b16 %v445
    %v1759 = vunpack.c.l.b16 %v446
    %v1760 = vunpack.c.h.b16 %v446
    %v1761 = vunpack.c.l.b16 %v447
    %v1762 = vunpack.c.h.b16 %v447
    %v1763 = vunpack.c.l.b16 %v448
    %v1764 = vunpack.c.h.b16 %v448
    %v1765 = vunpack.c.l.b16 %v449
    %v1766 = vunpack.c.h.b16 %v449
    %v1767 = vunpack.c.l.b16 %v450
    %v1768 = vunpack.c.h.b16 %v450
    %v1769 = vunpack.c.l.b16 %v451
    %v1770 = vunpack.c.h.b16 %v451
    %v1771 = vunpack.c.l.b16 %v452
    %v1772 = vunpack.c.h.b16 %v452
    %v1773 = vunpack.c.l.b16 %v453
    %v1774 = vunpack.c.h.b16 %v453
    %v1775 = vunpack.c.l.b16 %v454
    %v1776 = vunpack.c.h.b16 %v454
    %v1777 = vunpack.c.l.b16 %v455
    %v1778 = vunpack.c.h.b16 %v455
    %v1779 = vunpack.c.l.b16 %v456
    %v1780 = vunpack.c.h.b16 %v456
    %v1781 = vunpack.c.l.b16 %v457
    %v1782 = vunpack.c.h.b16 %v457
    %v1783 = vunpack.c.l.b16 %v458
    %v1784 = vunpack.c.h.b16 %v458
    %v1785 = vunpack.c.l.b16 %v459
    %v1786 = vunpack.c.h.b16 %v459
    %v1787 = vunpack.c.l.b16 %v460
    %v1788 = vunpack.c.h.b16 %v460
    %v1789 = vunpack.c.l.b16 %v461
    %v1790 = vunpack.c.h.b16 %v461
    %v1791 = vunpack.c.l.b16 %v462
    %v1792 = vunpack.c.h.b16 %v462
    %v1793 = vunpack.c.l.b16 %v463
    %v1794 = vunpack.c.h.b16 %v463
    %v1795 = vunpack.c.l.b16 %v464
    %v1796 = vunpack.c.h.b16 %v464
    %v1797 = vunpack.c.l.b16 %v465
    %v1798 = vunpack.c.h.b16 %v465
    %v1799 = vunpack.c.l.b16 %v466
    %v1800 = vunpack.c.h.b16 %v466
    %v1801 = vunpack.c.l.b16 %v467
    %v1802 = vunpack.c.h.b16 %v467
    %v1803 = vunpack.c.l.b16 %v468
    %v1804 = vunpack.c.h.b16 %v468
    %v1805 = vunpack.c.l.b16 %v469
    %v1806 = vunpack.c.h.b16 %v469
    %v1807 = vunpack.c.l.b16 %v470
    %v1808 = vunpack.c.h.b16 %v470
    %v1809 = vunpack.c.l.b16 %v471
    %v1810 = vunpack.c.h.b16 %v471
    %v1811 = vunpack.c.l.b16 %v472
    %v1812 = vunpack.c.h.b16 %v472
    %v1813 = vunpack.c.l.b16 %v473
    %v1814 = vunpack.c.h.b16 %v473
    %v1815 = vunpack.c.l.b16 %v474
    %v1816 = vunpack.c.h.b16 %v474
    %v1817 = vunpack.c.l.b16 %v475
    %v1818 = vunpack.c.h.b16 %v475
    %v1819 = vunpack.c.l.b16 %v476
    %v1820 = vunpack.c.h.b16 %v476
    %v1821 = vunpack.c.l.b16 %v477
    %v1822 = vunpack.c.h.b16 %v477
    %v1823 = vunpack.c.l.b16 %v478
    %v1824 = vunpack.c.h.b16 %v478
    %v1825 = vunpack.c.l.b16 %v479
    %v1826 = vunpack.c.h.b16 %v479
    %v1827 = vunpack.c.l.b16 %v480
    %v1828 = vunpack.c.h.b16 %v480
    %v1829 = vunpack.c.l.b16 %v481
    %v1830 = vunpack.c.h.b16 %v481
    %v1831 = vunpack.c.l.b16 %v482
    %v1832 = vunpack.c.h.b16 %v482
    %v1833 = vunpack.c.l.b16 %v483
    %v1834 = vunpack.c.h.b16 %v483
    %v1835 = vunpack.c.l.b16 %v484
    %v1836 = vunpack.c.h.b16 %v484
    %v1837 = vunpack.c.l.b16 %v485
    %v1838 = vunpack.c.h.b16 %v485
    %v1839 = vunpack.c.l.b16 %v486
    %v1840 = vunpack.c.h.b16 %v486
    %v1841 = vunpack.c.l.b16 %v487
    %v1842 = vunpack.c.h.b16 %v487
    %v1843 = vunpack.c.l.b16 %v488
    %v1844 = vunpack.c.h.b16 %v488
    %v1845 = vunpack.c.l.b16 %v489
    %v1846 = vunpack.c.h.b16 %v489
    %v1847 = vunpack.c.l.b16 %v490
    %v1848 = vunpack.c.h.b16 %v490
    %v1849 = vunpack.c.l.b16 %v491
    %v1850 = vunpack.c.h.b16 %v491
    %v1851 = vunpack.c.l.b16 %v492
    %v1852 = vunpack.c.h.b16 %v492
    %v1853 = vunpack.c.l.b16 %v493
    %v1854 = vunpack.c.h.b16 %v493
    %v1855 = vunpack.c.l.b16 %v494
    %v1856 = vunpack.c.h.b16 %v494
    %v1857 = vunpack.c.l.b16 %v495
    %v1858 = vunpack.c.h.b16 %v495
    %v1859 = vunpack.c.l.b16 %v496
    %v1860 = vunpack.c.h.b16 %v496
    %v1861 = vunpack.c.l.b16 %v497
    %v1862 = vunpack.c.h.b16 %v497
    %v1863 = vunpack.c.l.b16 %v498
    %v1864 = vunpack.c.h.b16 %v498
    %v1865 = vunpack.c.l.b16 %v499
    %v1866 = vunpack.c.h.b16 %v499
    %v1867 = vunpack.c.l.b16 %v500
    %v1868 = vunpack.c.h.b16 %v500
    %v1869 = vunpack.c.l.b16 %v501
    %v1870 = vunpack.c.h.b16 %v501
    %v1871 = vunpack.c.l.b16 %v502
    %v1872 = vunpack.c.h.b16 %v502
    %v1873 = vunpack.c.l.b16 %v503
    %v1874 = vunpack.c.h.b16 %v503
    %v1875 = vunpack.c.l.b16 %v504
    %v1876 = vunpack.c.h.b16 %v504
    %v1877 = vunpack.c.l.b16 %v505
    %v1878 = vunpack.c.h.b16 %v505
    %v1879 = vunpack.c.l.b16 %v506
    %v1880 = vunpack.c.h.b16 %v506
    %v1881 = vunpack.c.l.b16 %v507
    %v1882 = vunpack.c.h.b16 %v507
    %v1883 = vunpack.c.l.b16 %v508
    %v1884 = vunpack.c.h.b16 %v508
    %v1885 = vunpack.c.l.b16 %v509
    %v1886 = vunpack.c.h.b16 %v509
    %v1887 = vunpack.c.l.b16 %v510
    %v1888 = vunpack.c.h.b16 %v510
    %v1889 = vunpack.c.l.b16 %v511
    %v1890 = vunpack.c.h.b16 %v511
    %v1891 = vunpack.c.l.b16 %v512
    %v1892 = vunpack.c.h.b16 %v512
    %v1893 = vunpack.c.l.b16 %v513
    %v1894 = vunpack.c.h.b16 %v513
    %v1895 = vunpack.c.l.b16 %v514
    %v1896 = vunpack.c.h.b16 %v514
    %v1897 = vunpack.c.l.b16 %v515
    %v1898 = vunpack.c.h.b16 %v515
    %v1899 = vunpack.c.l.b16 %v516
    %v1900 = vunpack.c.h.b16 %v516
    %v1901 = vunpack.c.l.b16 %v517
    %v1902 = vunpack.c.h.b16 %v517
    %v1903 = vunpack.c.l.b16 %v518
    %v1904 = vunpack.c.h.b16 %v518
    %v1905 = vunpack.c.l.b16 %v519
    %v1906 = vunpack.c.h.b16 %v519
    %v1907 = vunpack.c.l.b16 %v520
    %v1908 = vunpack.c.h.b16 %v520
    %v1909 = vunpack.c.l.b16 %v521
    %v1910 = vunpack.c.h.b16 %v521
    %v1911 = vunpack.c.l.b16 %v522
    %v1912 = vunpack.c.h.b16 %v522
    %v1913 = vunpack.c.l.b16 %v523
    %v1914 = vunpack.c.h.b16 %v523
    %v1915 = vunpack.c.l.b16 %v524
    %v1916 = vunpack.c.h.b16 %v524
    %v1917 = vunpack.c.l.b16 %v525
    %v1918 = vunpack.c.h.b16 %v525
    %v1919 = vunpack.c.l.b16 %v526
    %v1920 = vunpack.c.h.b16 %v526
    %v1921 = vunpack.c.l.b16 %v527
    %v1922 = vunpack.c.h.b16 %v527
    %v1923 = vunpack.c.l.b16 %v528
    %v1924 = vunpack.c.h.b16 %v528
    %v1925 = vunpack.c.l.b16 %v529
    %v1926 = vunpack.c.h.b16 %v529
    %v1927 = vunpack.c.l.b16 %v530
    %v1928 = vunpack.c.h.b16 %v530
    %v1929 = vunpack.c.l.b16 %v531
    %v1930 = vunpack.c.h.b16 %v531
    %v1931 = vunpack.c.l.b16 %v532
    %v1932 = vunpack.c.h.b16 %v532
    %v1933 = vunpack.c.l.b16 %v533
    %v1934 = vunpack.c.h.b16 %v533
    %v1935 = vunpack.c.l.b16 %v534
    %v1936 = vunpack.c.h.b16 %v534
    %v1937 = vunpack.c.l.b16 %v535
    %v1938 = vunpack.c.h.b16 %v535
    %v1939 = vunpack.c.l.b16 %v536
    %v1940 = vunpack.c.h.b16 %v536
    %v1941 = vunpack.c.l.b16 %v537
    %v1942 = vunpack.c.h.b16 %v537
    %v1943 = vunpack.c.l.b16 %v538
    %v1944 = vunpack.c.h.b16 %v538
    %v1945 = vunpack.c.l.b16 %v539
    %v1946 = vunpack.c.h.b16 %v539
    %v1947 = vunpack.c.l.b16 %v540
    %v1948 = vunpack.c.h.b16 %v540
    %v1949 = vunpack.c.l.b16 %v541
    %v1950 = vunpack.c.h.b16 %v541
    %v1951 = vunpack.c.l.b16 %v542
    %v1952 = vunpack.c.h.b16 %v542
    %v1953 = vunpack.c.l.b16 %v543
    %v1954 = vunpack.c.h.b16 %v543
    %v1955 = vunpack.c.l.b16 %v544
    %v1956 = vunpack.c.h.b16 %v544
    %v1957 = vunpack.c.l.b16 %v545
    %v1958 = vunpack.c.h.b16 %v545
    %v1959 = vunpack.c.l.b16 %v546
    %v1960 = vunpack.c.h.b16 %v546
    %v1961 = vunpack.c.l.b16 %v547
    %v1962 = vunpack.c.h.b16 %v547
    %v1963 = vunpack.c.l.b16 %v548
    %v1964 = vunpack.c.h.b16 %v548
    %v1965 = vunpack.c.l.b16 %v549
    %v1966 = vunpack.c.h.b16 %v549
    %v1967 = vunpack.c.l.b16 %v550
    %v1968 = vunpack.c.h.b16 %v550
    %v1969 = vunpack.c.l.b16 %v551
    %v1970 = vunpack.c.h.b16 %v551
    %v1971 = vunpack.c.l.b16 %v552
    %v1972 = vunpack.c.h.b16 %v552
    %v1973 = vunpack.c.l.b16 %v553
    %v1974 = vunpack.c.h.b16 %v553
    %v1975 = vunpack.c.l.b16 %v554
    %v1976 = vunpack.c.h.b16 %v554
    %v1977 = vunpack.c.l.b16 %v555
    %v1978 = vunpack.c.h.b16 %v555
    %v1979 = vunpack.c.l.b16 %v556
    %v1980 = vunpack.c.h.b16 %v556
    %v1981 = vunpack.c.l.b16 %v557
    %v1982 = vunpack.c.h.b16 %v557
    %v1983 = vunpack.c.l.b16 %v558
    %v1984 = vunpack.c.h.b16 %v558
    %v1985 = vunpack.c.l.b16 %v559
    %v1986 = vunpack.c.h.b16 %v559
    %v1987 = vunpack.c.l.b16 %v560
    %v1988 = vunpack.c.h.b16 %v560
    %v1989 = vunpack.c.l.b16 %v561
    %v1990 = vunpack.c.h.b16 %v561
    %v1991 = vunpack.c.l.b16 %v562
    %v1992 = vunpack.c.h.b16 %v562
    %v1993 = vunpack.c.l.b16 %v563
    %v1994 = vunpack.c.h.b16 %v563
    %v1995 = vunpack.c.l.b16 %v564
    %v1996 = vunpack.c.h.b16 %v564
    %v1997 = vunpack.c.l.b16 %v565
    %v1998 = vunpack.c.h.b16 %v565
    %v1999 = vunpack.c.l.b16 %v566
    %v2000 = vunpack.c.h.b16 %v566
    %v2001 = vunpack.c.l.b16 %v567
    %v2002 = vunpack.c.h.b16 %v567
    %v2003 = vunpack.c.l.b16 %v568
    %v2004 = vunpack.c.h.b16 %v568
    %v2005 = vunpack.c.l.b16 %v569
    %v2006 = vunpack.c.h.b16 %v569
    %v2007 = vunpack.c.l.b16 %v570
    %v2008 = vunpack.c.h.b16 %v570
    %v2009 = vunpack.c.l.b16 %v571
    %v2010 = vunpack.c.h.b16 %v571
    %v2011 = vunpack.c.l.b16 %v572
    %v2012 = vunpack.c.h.b16 %v572
    %v2013 = vunpack.c.l.b16 %v573
    %v2014 = vunpack.c.h.b16 %v573
    %v2015 = vunpack.c.l.b16 %v574
    %v2016 = vunpack.c.h.b16 %v574
    %v2017 = vunpack.c.l.b16 %v575
    %v2018 = vunpack.c.h.b16 %v575
    %v2019 = vunpack.c.l.b16 %v576
    %v2020 = vunpack.c.h.b16 %v576
    %v2021 = vunpack.c.l.b16 %v577
    %v2022 = vunpack.c.h.b16 %v577
    %v2023 = vunpack.c.l.b16 %v578
    %v2024 = vunpack.c.h.b16 %v578
    %v2025 = vunpack.c.l.b16 %v579
    %v2026 = vunpack.c.h.b16 %v579
    %v2027 = vunpack.c.l.b16 %v580
    %v2028 = vunpack.c.h.b16 %v580
    %v2029 = vunpack.c.l.b16 %v581
    %v2030 = vunpack.c.h.b16 %v581
    %v2031 = vunpack.c.l.b16 %v582
    %v2032 = vunpack.c.h.b16 %v582
    %v2033 = vunpack.c.l.b16 %v583
    %v2034 = vunpack.c.h.b16 %v583
    %v2035 = vunpack.c.l.b16 %v584
    %v2036 = vunpack.c.h.b16 %v584
    %v2037 = vunpack.c.l.b16 %v585
    %v2038 = vunpack.c.h.b16 %v585
    %v2039 = vunpack.c.l.b16 %v586
    %v2040 = vunpack.c.h.b16 %v586
    %v2041 = vunpack.c.l.b16 %v587
    %v2042 = vunpack.c.h.b16 %v587
    %v2043 = vunpack.c.l.b16 %v588
    %v2044 = vunpack.c.h.b16 %v588
    %v2045 = vunpack.c.l.b16 %v589
    %v2046 = vunpack.c.h.b16 %v589
    %v2047 = vunpack.c.l.b16 %v590
    %v2048 = vunpack.c.h.b16 %v590
    %v2049 = vunpack.c.l.b16 %v591
    %v2050 = vunpack.c.h.b16 %v591
    %v2051 = vunpack.c.l.b16 %v592
    %v2052 = vunpack.c.h.b16 %v592
    %v2053 = vunpack.c.l.b16 %v593
    %v2054 = vunpack.c.h.b16 %v593
    %v2055 = vunpack.c.l.b16 %v594
    %v2056 = vunpack.c.h.b16 %v594
    %v2057 = vunpack.c.l.b16 %v595
    %v2058 = vunpack.c.h.b16 %v595
    %v2059 = vunpack.c.l.b16 %v596
    %v2060 = vunpack.c.h.b16 %v596
    %v2061 = vunpack.c.l.b16 %v597
    %v2062 = vunpack.c.h.b16 %v597
    %v2063 = vunpack.c.l.b16 %v598
    %v2064 = vunpack.c.h.b16 %v598
    %v2065 = vunpack.c.l.b16 %v599
    %v2066 = vunpack.c.h.b16 %v599
    %v2067 = vunpack.c.l.b16 %v600
    %v2068 = vunpack.c.h.b16 %v600
    %v2069 = vunpack.c.l.b16 %v601
    %v2070 = vunpack.c.h.b16 %v601
    %v2071 = vunpack.c.l.b16 %v602
    %v2072 = vunpack.c.h.b16 %v602
    %v2073 = vunpack.c.l.b16 %v603
    %v2074 = vunpack.c.h.b16 %v603
    %v2075 = vunpack.c.l.b16 %v604
    %v2076 = vunpack.c.h.b16 %v604
    %v2077 = vunpack.c.l.b16 %v605
    %v2078 = vunpack.c.h.b16 %v605
    %v2079 = vunpack.c.l.b16 %v606
    %v2080 = vunpack.c.h.b16 %v606
    %v2081 = vunpack.c.l.b16 %v607
    %v2082 = vunpack.c.h.b16 %v607
    %v2083 = vunpack.c.l.b16 %v608
    %v2084 = vunpack.c.h.b16 %v608
    %v2085 = vunpack.c.l.b16 %v609
    %v2086 = vunpack.c.h.b16 %v609
    %v2087 = vunpack.c.l.b16 %v610
    %v2088 = vunpack.c.h.b16 %v610
    %v2089 = vunpack.c.l.b16 %v611
    %v2090 = vunpack.c.h.b16 %v611
    %v2091 = vunpack.c.l.b16 %v612
    %v2092 = vunpack.c.h.b16 %v612
    %v2093 = vunpack.c.l.b16 %v613
    %v2094 = vunpack.c.h.b16 %v613
    %v2095 = vunpack.c.l.b16 %v614
    %v2096 = vunpack.c.h.b16 %v614
    %v2097 = vunpack.c.l.b16 %v615
    %v2098 = vunpack.c.h.b16 %v615
    %v2099 = vunpack.c.l.b16 %v616
    %v2100 = vunpack.c.h.b16 %v616
    %v2101 = vunpack.c.l.b16 %v617
    %v2102 = vunpack.c.h.b16 %v617
    %v2103 = vunpack.c.l.b16 %v618
    %v2104 = vunpack.c.h.b16 %v618
    %v2105 = vunpack.c.l.b16 %v619
    %v2106 = vunpack.c.h.b16 %v619
    %v2107 = vunpack.c.l.b16 %v620
    %v2108 = vunpack.c.h.b16 %v620
    %v2109 = vunpack.c.l.b16 %v621
    %v2110 = vunpack.c.h.b16 %v621
    %v2111 = vunpack.c.l.b16 %v622
    %v2112 = vunpack.c.h.b16 %v622
    %v2113 = vunpack.c.l.b16 %v623
    %v2114 = vunpack.c.h.b16 %v623
    %v2115 = vunpack.c.l.b16 %v624
    %v2116 = vunpack.c.h.b16 %v624
    %v2117 = vunpack.c.l.b16 %v625
    %v2118 = vunpack.c.h.b16 %v625
    %v2119 = vunpack.c.l.b16 %v626
    %v2120 = vunpack.c.h.b16 %v626
    %v2121 = vunpack.c.l.b16 %v627
    %v2122 = vunpack.c.h.b16 %v627
    %v2123 = vunpack.c.l.b16 %v628
    %v2124 = vunpack.c.h.b16 %v628
    %v2125 = vunpack.c.l.b16 %v629
    %v2126 = vunpack.c.h.b16 %v629
    %v2127 = vunpack.c.l.b16 %v630
    %v2128 = vunpack.c.h.b16 %v630
    %v2129 = vunpack.c.l.b16 %v631
    %v2130 = vunpack.c.h.b16 %v631
    %v2131 = vunpack.c.l.b16 %v632
    %v2132 = vunpack.c.h.b16 %v632
    %v2133 = vunpack.c.l.b16 %v633
    %v2134 = vunpack.c.h.b16 %v633
    %v2135 = vunpack.c.l.b16 %v634
    %v2136 = vunpack.c.h.b16 %v634
    %v2137 = vunpack.c.l.b16 %v635
    %v2138 = vunpack.c.h.b16 %v635
    %v2139 = vunpack.c.l.b16 %v636
    %v2140 = vunpack.c.h.b16 %v636
    %v2141 = vunpack.c.l.b16 %v637
    %v2142 = vunpack.c.h.b16 %v637
    %v2143 = vunpack.c.l.b16 %v638
    %v2144 = vunpack.c.h.b16 %v638
    %v2145 = vunpack.c.l.b16 %v639
    %v2146 = vunpack.c.h.b16 %v639
    %v2147 = vunpack.c.l.b16 %v640
    %v2148 = vunpack.c.h.b16 %v640
    %v2149 = vunpack.c.l.b16 %v641
    %v2150 = vunpack.c.h.b16 %v641
    %v2151 = vunpack.c.l.b16 %v642
    %v2152 = vunpack.c.h.b16 %v642
    %v2153 = vunpack.c.l.b16 %v643
    %v2154 = vunpack.c.h.b16 %v643
    %v2155 = vunpack.c.l.b16 %v644
    %v2156 = vunpack.c.h.b16 %v644
    %v2157 = vunpack.c.l.b16 %v645
    %v2158 = vunpack.c.h.b16 %v645
    %v2159 = vunpack.c.l.b16 %v646
    %v2160 = vunpack.c.h.b16 %v646
    %v2161 = vunpack.c.l.b16 %v647
    %v2162 = vunpack.c.h.b16 %v647
    %v2163 = vunpack.c.l.b16 %v648
    %v2164 = vunpack.c.h.b16 %v648
    %v2165 = vunpack.c.l.b16 %v649
    %v2166 = vunpack.c.h.b16 %v649
    %v2167 = vunpack.c.l.b16 %v650
    %v2168 = vunpack.c.h.b16 %v650
    %v2169 = vunpack.c.l.b16 %v651
    %v2170 = vunpack.c.h.b16 %v651
    %v2171 = vunpack.c.l.b16 %v652
    %v2172 = vunpack.c.h.b16 %v652
    %v2173 = vunpack.c.l.b16 %v653
    %v2174 = vunpack.c.h.b16 %v653
    %v2175 = vunpack.c.l.b16 %v654
    %v2176 = vunpack.c.h.b16 %v654
    %v2177 = vunpack.c.l.b16 %v655
    %v2178 = vunpack.c.h.b16 %v655
    %v2179 = vunpack.c.l.b16 %v656
    %v2180 = vunpack.c.h.b16 %v656
    %v2181 = vunpack.c.l.b16 %v657
    %v2182 = vunpack.c.h.b16 %v657
    %v2183 = vunpack.c.l.b16 %v658
    %v2184 = vunpack.c.h.b16 %v658
    %v2185 = vunpack.c.l.b16 %v659
    %v2186 = vunpack.c.h.b16 %v659
    %v2187 = vunpack.c.l.b16 %v660
    %v2188 = vunpack.c.h.b16 %v660
    %v2189 = vunpack.c.l.b16 %v661
    %v2190 = vunpack.c.h.b16 %v661
    %v2191 = vunpack.c.l.b16 %v662
    %v2192 = vunpack.c.h.b16 %v662
    %v2193 = vunpack.c.l.b16 %v663
    %v2194 = vunpack.c.h.b16 %v663
    %v2195 = vunpack.c.l.b16 %v664
    %v2196 = vunpack.c.h.b16 %v664
    %v2197 = vunpack.c.l.b16 %v665
    %v2198 = vunpack.c.h.b16 %v665
    %v2199 = vunpack.c.l.b16 %v666
    %v2200 = vunpack.c.h.b16 %v666
    %v2201 = vunpack.c.l.b16 %v667
    %v2202 = vunpack.c.h.b16 %v667
    %v2203 = vunpack.c.l.b16 %v668
    %v2204 = vunpack.c.h.b16 %v668
    %v2205 = vunpack.c.l.b16 %v669
    %v2206 = vunpack.c.h.b16 %v669
    %v2207 = vunpack.c.l.b16 %v670
    %v2208 = vunpack.c.h.b16 %v670
    %v2209 = vunpack.c.l.b16 %v671
    %v2210 = vunpack.c.h.b16 %v671
    %v2211 = vunpack.c.l.b16 %v672
    %v2212 = vunpack.c.h.b16 %v672
    %v2213 = vunpack.c.l.b16 %v673
    %v2214 = vunpack.c.h.b16 %v673
    %v2215 = vunpack.c.l.b16 %v674
    %v2216 = vunpack.c.h.b16 %v674
    %v2217 = vunpack.c.l.b16 %v675
    %v2218 = vunpack.c.h.b16 %v675
    %v2219 = vunpack.c.l.b16 %v676
    %v2220 = vunpack.c.h.b16 %v676
    %v2221 = vunpack.c.l.b16 %v677
    %v2222 = vunpack.c.h.b16 %v677
    %v2223 = vunpack.c.l.b16 %v678
    %v2224 = vunpack.c.h.b16 %v678
    %v2225 = vunpack.c.l.b16 %v679
    %v2226 = vunpack.c.h.b16 %v679
    %v2227 = vunpack.c.l.b16 %v680
    %v2228 = vunpack.c.h.b16 %v680
    %v2229 = vunpack.c.l.b16 %v681
    %v2230 = vunpack.c.h.b16 %v681
    %v2231 = vunpack.c.l.b16 %v682
    %v2232 = vunpack.c.h.b16 %v682
    %v2233 = vunpack.c.l.b16 %v683
    %v2234 = vunpack.c.h.b16 %v683
    %v2235 = vunpack.c.l.b16 %v684
    %v2236 = vunpack.c.h.b16 %v684
    %v2237 = vunpack.c.l.b16 %v685
    %v2238 = vunpack.c.h.b16 %v685
    %v2239 = vunpack.c.l.b16 %v686
    %v2240 = vunpack.c.h.b16 %v686
    %v2241 = vunpack.c.l.b16 %v687
    %v2242 = vunpack.c.h.b16 %v687
    %v2243 = vunpack.c.l.b16 %v688
    %v2244 = vunpack.c.h.b16 %v688
    %v2245 = vunpack.c.l.b16 %v689
    %v2246 = vunpack.c.h.b16 %v689
    %v2247 = vunpack.c.l.b16 %v690
    %v2248 = vunpack.c.h.b16 %v690
    %v2249 = vunpack.c.l.b16 %v691
    %v2250 = vunpack.c.h.b16 %v691
    %v2251 = vunpack.c.l.b16 %v692
    %v2252 = vunpack.c.h.b16 %v692
    %v2253 = vunpack.c.l.b16 %v693
    %v2254 = vunpack.c.h.b16 %v693
    %v2255 = vunpack.c.l.b16 %v694
    %v2256 = vunpack.c.h.b16 %v694
    %v2257 = vunpack.c.l.b16 %v695
    %v2258 = vunpack.c.h.b16 %v695
    %v2259 = vunpack.c.l.b16 %v696
    %v2260 = vunpack.c.h.b16 %v696
    %v2261 = vunpack.c.l.b16 %v697
    %v2262 = vunpack.c.h.b16 %v697
    %v2263 = vunpack.c.l.b16 %v698
    %v2264 = vunpack.c.h.b16 %v698
    %v2265 = vunpack.c.l.b16 %v699
    %v2266 = vunpack.c.h.b16 %v699
    %v2267 = vunpack.c.l.b16 %v700
    %v2268 = vunpack.c.h.b16 %v700
    %v2269 = vunpack.c.l.b16 %v701
    %v2270 = vunpack.c.h.b16 %v701
    %v2271 = vunpack.c.l.b16 %v702
    %v2272 = vunpack.c.h.b16 %v702
    %v2273 = vunpack.c.l.b16 %v703
    %v2274 = vunpack.c.h.b16 %v703
    %v2275 = vunpack.c.l.b16 %v704
    %v2276 = vunpack.c.h.b16 %v704
    %v2277 = vunpack.c.l.b16 %v705
    %v2278 = vunpack.c.h.b16 %v705
    %v2279 = vunpack.c.l.b16 %v706
    %v2280 = vunpack.c.h.b16 %v706
    %v2281 = vunpack.c.l.b16 %v707
    %v2282 = vunpack.c.h.b16 %v707
    %v2283 = vunpack.c.l.b16 %v708
    %v2284 = vunpack.c.h.b16 %v708
    %v2285 = vunpack.c.l.b16 %v709
    %v2286 = vunpack.c.h.b16 %v709
    %v2287 = vunpack.c.l.b16 %v710
    %v2288 = vunpack.c.h.b16 %v710
    %v2289 = vunpack.c.l.b16 %v711
    %v2290 = vunpack.c.h.b16 %v711
    %v2291 = vunpack.c.l.b16 %v712
    %v2292 = vunpack.c.h.b16 %v712
    %v2293 = vunpack.c.l.b16 %v713
    %v2294 = vunpack.c.h.b16 %v713
    %v2295 = vunpack.c.l.b16 %v714
    %v2296 = vunpack.c.h.b16 %v714
    %v2297 = vunpack.c.l.b16 %v715
    %v2298 = vunpack.c.h.b16 %v715
    %v2299 = vunpack.c.l.b16 %v716
    %v2300 = vunpack.c.h.b16 %v716
    %v2301 = vunpack.c.l.b16 %v717
    %v2302 = vunpack.c.h.b16 %v717
    %v2303 = vunpack.c.l.b16 %v718
    %v2304 = vunpack.c.h.b16 %v718
    %v2305 = vunpack.c.l.b16 %v719
    %v2306 = vunpack.c.h.b16 %v719
    %v2307 = vunpack.c.l.b16 %v720
    %v2308 = vunpack.c.h.b16 %v720
    %v2309 = vunpack.c.l.b16 %v721
    %v2310 = vunpack.c.h.b16 %v721
    %v2311 = vunpack.c.l.b16 %v722
    %v2312 = vunpack.c.h.b16 %v722
    %v2313 = vunpack.c.l.b16 %v723
    %v2314 = vunpack.c.h.b16 %v723
    %v2315 = vunpack.c.l.b16 %v724
    %v2316 = vunpack.c.h.b16 %v724
    %v2317 = vunpack.c.l.b16 %v725
    %v2318 = vunpack.c.h.b16 %v725
    %v2319 = vunpack.c.l.b16 %v726
    %v2320 = vunpack.c.h.b16 %v726
    %v2321 = vunpack.c.l.b16 %v727
    %v2322 = vunpack.c.h.b16 %v727
    %v2323 = vunpack.c.l.b16 %v728
    %v2324 = vunpack.c.h.b16 %v728
    %v2325 = vunpack.c.l.b16 %v729
    %v2326 = vunpack.c.h.b16 %v729
    %v2327 = vunpack.c.l.b16 %v730
    %v2328 = vunpack.c.h.b16 %v730
    %v2329 = vunpack.c.l.b16 %v731
    %v2330 = vunpack.c.h.b16 %v731
    %v2331 = vunpack.c.l.b16 %v732
    %v2332 = vunpack.c.h.b16 %v732
    %v2333 = vunpack.c.l.b16 %v733
    %v2334 = vunpack.c.h.b16 %v733
    %v2335 = vunpack.c.l.b16 %v734
    %v2336 = vunpack.c.h.b16 %v734
    %v2337 = vunpack.c.l.b16 %v735
    %v2338 = vunpack.c.h.b16 %v735
    %v2339 = vunpack.c.l.b16 %v736
    %v2340 = vunpack.c.h.b16 %v736
    %v2341 = vunpack.c.l.b16 %v737
    %v2342 = vunpack.c.h.b16 %v737
    %v2343 = vunpack.c.l.b16 %v738
    %v2344 = vunpack.c.h.b16 %v738
    %v2345 = vpack.c.b16 %v1329, %v1321
    %v2346 = vpack.c.b16 %v1330, %v1322
    %v2347 = vpack.c.b16 %v1331, %v1323
    %v2348 = vpack.c.b16 %v1332, %v1324
    %v2349 = vpack.c.b16 %v1333, %v1325
    %v2350 = vpack.c.b16 %v1334, %v1326
    %v2351 = vpack.c.b16 %v1335, %v1327
    %v2352 = vpack.c.b16 %v1336, %v1328
    %v2353 = vpack.c.b16 %v1345, %v1337
    %v2354 = vpack.c.b16 %v1346, %v1338
    %v2355 = vpack.c.b16 %v1347, %v1339
    %v2356 = vpack.c.b16 %v1348, %v1340
    %v2357 = vpack.c.b16 %v1349, %v1341
    %v2358 = vpack.c.b16 %v1350, %v1342
    %v2359 = vpack.c.b16 %v1351, %v1343
    %v2360 = vpack.c.b16 %v1352, %v1344
    %v2361 = vpack.c.b16 %v1361, %v1353
    %v2362 = vpack.c.b16 %v1362, %v1354
    %v2363 = vpack.c.b16 %v1363, %v1355
    %v2364 = vpack.c.b16 %v1364, %v1356
    %v2365 = vpack.c.b16 %v1365, %v1357
    %v2366 = vpack.c.b16 %v1366, %v1358
    %v2367 = vpack.c.b16 %v1367, %v1359
    %v2368 = vpack.c.b16 %v1368, %v1360
    %v2369 = vpack.c.b16 %v1377, %v1369
    %v2370 = vpack.c.b16 %v1378, %v1370
    %v2371 = vpack.c.b16 %v1379, %v1371
    %v2372 = vpack.c.b16 %v1380, %v1372
    %v2373 = vpack.c.b16 %v1381, %v1373
    %v2374 = vpack.c.b16 %v1382, %v1374
    %v2375 = vpack.c.b16 %v1383, %v1375
    %v2376 = vpack.c.b16 %v1384, %v1376
    %v2377 = vpack.c.b16 %v1393, %v1385
    %v2378 = vpack.c.b16 %v1394, %v1386
    %v2379 = vpack.c.b16 %v1395, %v1387
    %v2380 = vpack.c.b16 %v1396, %v1388
    %v2381 = vpack.c.b16 %v1397, %v1389
    %v2382 = vpack.c.b16 %v1398, %v1390
    %v2383 = vpack.c.b16 %v1399, %v1391
    %v2384 = vpack.c.b16 %v1400, %v1392
    %v2385 = vpack.c.b16 %v1409, %v1401
    %v2386 = vpack.c.b16 %v1410, %v1402
    %v2387 = vpack.c.b16 %v1411, %v1403
    %v2388 = vpack.c.b16 %v1412, %v1404
    %v2389 = vpack.c.b16 %v1413, %v1405
    %v2390 = vpack.c.b16 %v1414, %v1406
    %v2391 = vpack.c.b16 %v1415, %v1407
    %v2392 = vpack.c.b16 %v1416, %v1408
    %v2393 = vpack.c.b16 %v1425, %v1417
    %v2394 = vpack.c.b16 %v1426, %v1418
    %v2395 = vpack.c.b16 %v1427, %v1419
    %v2396 = vpack.c.b16 %v1428, %v1420
    %v2397 = vpack.c.b16 %v1429, %v1421
    %v2398 = vpack.c.b16 %v1430, %v1422
    %v2399 = vpack.c.b16 %v1431, %v1423
    %v2400 = vpack.c.b16 %v1432, %v1424
    %v2401 = vpack.c.b16 %v1441, %v1433
    %v2402 = vpack.c.b16 %v1442, %v1434
    %v2403 = vpack.c.b16 %v1443, %v1435
    %v2404 = vpack.c.b16 %v1444, %v1436
    %v2405 = vpack.c.b16 %v1445, %v1437
    %v2406 = vpack.c.b16 %v1446, %v1438
    %v2407 = vpack.c.b16 %v1447, %v1439
    %v2408 = vpack.c.b16 %v1448, %v1440
    %v2409 = vpack.c.b16 %v1457, %v1449
    %v2410 = vpack.c.b16 %v1458, %v1450
    %v2411 = vpack.c.b16 %v1459, %v1451
    %v2412 = vpack.c.b16 %v1460, %v1452
    %v2413 = vpack.c.b16 %v1461, %v1453
    %v2414 = vpack.c.b16 %v1462, %v1454
    %v2415 = vpack.c.b16 %v1463, %v1455
    %v2416 = vpack.c.b16 %v1464, %v1456
    %v2417 = vpack.c.b16 %v1473, %v1465
    %v2418 = vpack.c.b16 %v1474, %v1466
    %v2419 = vpack.c.b16 %v1475, %v1467
    %v2420 = vpack.c.b16 %v1476, %v1468
    %v2421 = vpack.c.b16 %v1477, %v1469
    %v2422 = vpack.c.b16 %v1478, %v1470
    %v2423 = vpack.c.b16 %v1479, %v1471
    %v2424 = vpack.c.b16 %v1480, %v1472
    %v2425 = vpack.c.b16 %v1489, %v1481
    %v2426 = vpack.c.b16 %v1490, %v1482
    %v2427 = vpack.c.b16 %v1491, %v1483
    %v2428 = vpack.c.b16 %v1492, %v1484
    %v2429 = vpack.c.b16 %v1493, %v1485
    %v2430 = vpack.c.b16 %v1494, %v1486
    %v2431 = vpack.c.b16 %v1495, %v1487
    %v2432 = vpack.c.b16 %v1496, %v1488
    %v2433 = vpack.c.b16 %v1505, %v1497
    %v2434 = vpack.c.b16 %v1506, %v1498
    %v2435 = vpack.c.b16 %v1507, %v1499
    %v2436 = vpack.c.b16 %v1508, %v1500
    %v2437 = vpack.c.b16 %v1509, %v1501
    %v2438 = vpack.c.b16 %v1510, %v1502
    %v2439 = vpack.c.b16 %v1511, %v1503
    %v2440 = vpack.c.b16 %v1512, %v1504
    %v2441 = vpack.c.b16 %v1521, %v1513
    %v2442 = vpack.c.b16 %v1522, %v1514
    %v2443 = vpack.c.b16 %v1523, %v1515
    %v2444 = vpack.c.b16 %v1524, %v1516
    %v2445 = vpack.c.b16 %v1525, %v1517
    %v2446 = vpack.c.b16 %v1526, %v1518
    %v2447 = vpack.c.b16 %v1527, %v1519
    %v2448 = vpack.c.b16 %v1528, %v1520
    %v2449 = vpack.c.b16 %v1537, %v1529
    %v2450 = vpack.c.b16 %v1538, %v1530
    %v2451 = vpack.c.b16 %v1539, %v1531
    %v2452 = vpack.c.b16 %v1540, %v1532
    %v2453 = vpack.c.b16 %v1541, %v1533
    %v2454 = vpack.c.b16 %v1542, %v1534
    %v2455 = vpack.c.b16 %v1543, %v1535
    %v2456 = vpack.c.b16 %v1544, %v1536
    %v2457 = vpack.c.b16 %v1553, %v1545
    %v2458 = vpack.c.b16 %v1554, %v1546
    %v2459 = vpack.c.b16 %v1555, %v1547
    %v2460 = vpack.c.b16 %v1556, %v1548
    %v2461 = vpack.c.b16 %v1557, %v1549
    %v2462 = vpack.c.b16 %v1558, %v1550
    %v2463 = vpack.c.b16 %v1559, %v1551
    %v2464 = vpack.c.b16 %v1560, %v1552
    %v2465 = vpack.c.b16 %v1569, %v1561
    %v2466 = vpack.c.b16 %v1570, %v1562
    %v2467 = vpack.c.b16 %v1571, %v1563
    %v2468 = vpack.c.b16 %v1572, %v1564
    %v2469 = vpack.c.b16 %v1573, %v1565
    %v2470 = vpack.c.b16 %v1574, %v1566
    %v2471 = vpack.c.b16 %v1575, %v1567
    %v2472 = vpack.c.b16 %v1576, %v1568
    %v2473 = vpack.c.b16 %v1585, %v1577
    %v2474 = vpack.c.b16 %v1586, %v1578
    %v2475 = vpack.c.b16 %v1587, %v1579
    %v2476 = vpack.c.b16 %v1588, %v1580
    %v2477 = vpack.c.b16 %v1589, %v1581
    %v2478 = vpack.c.b16 %v1590, %v1582
    %v2479 = vpack.c.b16 %v1591, %v1583
    %v2480 = vpack.c.b16 %v1592, %v1584
    %v2481 = vpack.c.b16 %v1601, %v1593
    %v2482 = vpack.c.b16 %v1602, %v1594
    %v2483 = vpack.c.b16 %v1603, %v1595
    %v2484 = vpack.c.b16 %v1604, %v1596
    %v2485 = vpack.c.b16 %v1605, %v1597
    %v2486 = vpack.c.b16 %v1606, %v1598
    %v2487 = vpack.c.b16 %v1607, %v1599
    %v2488 = vpack.c.b16 %v1608, %v1600
    %v2489 = vpack.c.b16 %v1617, %v1609
    %v2490 = vpack.c.b16 %v1618, %v1610
    %v2491 = vpack.c.b16 %v1619, %v1611
    %v2492 = vpack.c.b16 %v1620, %v1612
    %v2493 = vpack.c.b16 %v1621, %v1613
    %v2494 = vpack.c.b16 %v1622, %v1614
    %v2495 = vpack.c.b16 %v1623, %v1615
    %v2496 = vpack.c.b16 %v1624, %v1616
    %v2497 = vpack.c.b16 %v1633, %v1625
    %v2498 = vpack.c.b16 %v1634, %v1626
    %v2499 = vpack.c.b16 %v1635, %v1627
    %v2500 = vpack.c.b16 %v1636, %v1628
    %v2501 = vpack.c.b16 %v1637, %v1629
    %v2502 = vpack.c.b16 %v1638, %v1630
    %v2503 = vpack.c.b16 %v1639, %v1631
    %v2504 = vpack.c.b16 %v1640, %v1632
    %v2505 = vpack.c.b16 %v1649, %v1641
    %v2506 = vpack.c.b16 %v1650, %v1642
    %v2507 = vpack.c.b16 %v1651, %v1643
    %v2508 = vpack.c.b16 %v1652, %v1644
    %v2509 = vpack.c.b16 %v1653, %v1645
    %v2510 = vpack.c.b16 %v1654, %v1646
    %v2511 = vpack.c.b16 %v1655, %v1647
    %v2512 = vpack.c.b16 %v1656, %v1648
    %v2513 = vpack.c.b16 %v1665, %v1657
    %v2514 = vpack.c.b16 %v1666, %v1658
    %v2515 = vpack.c.b16 %v1667, %v1659
    %v2516 = vpack.c.b16 %v1668, %v1660
    %v2517 = vpack.c.b16 %v1669, %v1661
    %v2518 = vpack.c.b16 %v1670, %v1662
    %v2519 = vpack.c.b16 %v1671, %v1663
    %v2520 = vpack.c.b16 %v1672, %v1664
    %v2521 = vpack.c.b16 %v1681, %v1673
    %v2522 = vpack.c.b16 %v1682, %v1674
    %v2523 = vpack.c.b16 %v1683, %v1675
    %v2524 = vpack.c.b16 %v1684, %v1676
    %v2525 = vpack.c.b16 %v1685, %v1677
    %v2526 = vpack.c.b16 %v1686, %v1678
    %v2527 = vpack.c.b16 %v1687, %v1679
    %v2528 = vpack.c.b16 %v1688, %v1680
    %v2529 = vpack.c.b16 %v1697, %v1689
    %v2530 = vpack.c.b16 %v1698, %v1690
    %v2531 = vpack.c.b16 %v1699, %v1691
    %v2532 = vpack.c.b16 %v1700, %v1692
    %v2533 = vpack.c.b16 %v1701, %v1693
    %v2534 = vpack.c.b16 %v1702, %v1694
    %v2535 = vpack.c.b16 %v1703, %v1695
    %v2536 = vpack.c.b16 %v1704, %v1696
    %v2537 = vpack.c.b16 %v1713, %v1705
    %v2538 = vpack.c.b16 %v1714, %v1706
    %v2539 = vpack.c.b16 %v1715, %v1707
    %v2540 = vpack.c.b16 %v1716, %v1708
    %v2541 = vpack.c.b16 %v1717, %v1709
    %v2542 = vpack.c.b16 %v1718, %v1710
    %v2543 = vpack.c.b16 %v1719, %v1711
    %v2544 = vpack.c.b16 %v1720, %v1712
    %v2545 = vpack.c.b16 %v1729, %v1721
    %v2546 = vpack.c.b16 %v1730, %v1722
    %v2547 = vpack.c.b16 %v1731, %v1723
    %v2548 = vpack.c.b16 %v1732, %v1724
    %v2549 = vpack.c.b16 %v1733, %v1725
    %v2550 = vpack.c.b16 %v1734, %v1726
    %v2551 = vpack.c.b16 %v1735, %v1727
    %v2552 = vpack.c.b16 %v1736, %v1728
    %v2553 = vpack.c.b16 %v1745, %v1737
    %v2554 = vpack.c.b16 %v1746, %v1738
    %v2555 = vpack.c.b16 %v1747, %v1739
    %v2556 = vpack.c.b16 %v1748, %v1740
    %v2557 = vpack.c.b16 %v1749, %v1741
    %v2558 = vpack.c.b16 %v1750, %v1742
    %v2559 = vpack.c.b16 %v1751, %v1743
    %v2560 = vpack.c.b16 %v1752, %v1744
    %v2561 = vpack.c.b16 %v1761, %v1753
    %v2562 = vpack.c.b16 %v1762, %v1754
    %v2563 = vpack.c.b16 %v1763, %v1755
    %v2564 = vpack.c.b16 %v1764, %v1756
    %v2565 = vpack.c.b16 %v1765, %v1757
    %v2566 = vpack.c.b16 %v1766, %v1758
    %v2567 = vpack.c.b16 %v1767, %v1759
    %v2568 = vpack.c.b16 %v1768, %v1760
    %v2569 = vpack.c.b16 %v1777, %v1769
    %v2570 = vpack.c.b16 %v1778, %v1770
    %v2571 = vpack.c.b16 %v1779, %v1771
    %v2572 = vpack.c.b16 %v1780, %v1772
    %v2573 = vpack.c.b16 %v1781, %v1773
    %v2574 = vpack.c.b16 %v1782, %v1774
    %v2575 = vpack.c.b16 %v1783, %v1775
    %v2576 = vpack.c.b16 %v1784, %v1776
    %v2577 = vpack.c.b16 %v1793, %v1785
    %v2578 = vpack.c.b16 %v1794, %v1786
    %v2579 = vpack.c.b16 %v1795, %v1787
    %v2580 = vpack.c.b16 %v1796, %v1788
    %v2581 = vpack.c.b16 %v1797, %v1789
    %v2582 = vpack.c.b16 %v1798, %v1790
    %v2583 = vpack.c.b16 %v1799, %v1791
    %v2584 = vpack.c.b16 %v1800, %v1792
    %v2585 = vpack.c.b16 %v1809, %v1801
    %v2586 = vpack.c.b16 %v1810, %v1802
    %v2587 = vpack.c.b16 %v1811, %v1803
    %v2588 = vpack.c.b16 %v1812, %v1804
    %v2589 = vpack.c.b16 %v1813, %v1805
    %v2590 = vpack.c.b16 %v1814, %v1806
    %v2591 = vpack.c.b16 %v1815, %v1807
    %v2592 = vpack.c.b16 %v1816, %v1808
    %v2593 = vpack.c.b16 %v1825, %v1817
    %v2594 = vpack.c.b16 %v1826, %v1818
    %v2595 = vpack.c.b16 %v1827, %v1819
    %v2596 = vpack.c.b16 %v1828, %v1820
    %v2597 = vpack.c.b16 %v1829, %v1821
    %v2598 = vpack.c.b16 %v1830, %v1822
    %v2599 = vpack.c.b16 %v1831, %v1823
    %v2600 = vpack.c.b16 %v1832, %v1824
    %v2601 = vpack.c.b16 %v1841, %v1833
    %v2602 = vpack.c.b16 %v1842, %v1834
    %v2603 = vpack.c.b16 %v1843, %v1835
    %v2604 = vpack.c.b16 %v1844, %v1836
    %v2605 = vpack.c.b16 %v1845, %v1837
    %v2606 = vpack.c.b16 %v1846, %v1838
    %v2607 = vpack.c.b16 %v1847, %v1839
    %v2608 = vpack.c.b16 %v1848, %v1840
    %v2609 = vpack.c.b16 %v1857, %v1849
    %v2610 = vpack.c.b16 %v1858, %v1850
    %v2611 = vpack.c.b16 %v1859, %v1851
    %v2612 = vpack.c.b16 %v1860, %v1852
    %v2613 = vpack.c.b16 %v1861, %v1853
    %v2614 = vpack.c.b16 %v1862, %v1854
    %v2615 = vpack.c.b16 %v1863, %v1855
    %v2616 = vpack.c.b16 %v1864, %v1856
    %v2617 = vpack.c.b16 %v1873, %v1865
    %v2618 = vpack.c.b16 %v1874, %v1866
    %v2619 = vpack.c.b16 %v1875, %v1867
    %v2620 = vpack.c.b16 %v1876, %v1868
    %v2621 = vpack.c.b16 %v1877, %v1869
    %v2622 = vpack.c.b16 %v1878, %v1870
    %v2623 = vpack.c.b16 %v1879, %v1871
    %v2624 = vpack.c.b16 %v1880, %v1872
    %v2625 = vpack.c.b16 %v1889, %v1881
    %v2626 = vpack.c.b16 %v1890, %v1882
    %v2627 = vpack.c.b16 %v1891, %v1883
    %v2628 = vpack.c.b16 %v1892, %v1884
    %v2629 = vpack.c.b16 %v1893, %v1885
    %v2630 = vpack.c.b16 %v1894, %v1886
    %v2631 = vpack.c.b16 %v1895, %v1887
    %v2632 = vpack.c.b16 %v1896, %v1888
    %v2633 = vpack.c.b16 %v1905, %v1897
    %v2634 = vpack.c.b16 %v1906, %v1898
    %v2635 = vpack.c.b16 %v1907, %v1899
    %v2636 = vpack.c.b16 %v1908, %v1900
    %v2637 = vpack.c.b16 %v1909, %v1901
    %v2638 = vpack.c.b16 %v1910, %v1902
    %v2639 = vpack.c.b16 %v1911, %v1903
    %v2640 = vpack.c.b16 %v1912, %v1904
    %v2641 = vpack.c.b16 %v1921, %v1913
    %v2642 = vpack.c.b16 %v1922, %v1914
    %v2643 = vpack.c.b16 %v1923, %v1915
    %v2644 = vpack.c.b16 %v1924, %v1916
    %v2645 = vpack.c.b16 %v1925, %v1917
    %v2646 = vpack.c.b16 %v1926, %v1918
    %v2647 = vpack.c.b16 %v1927, %v1919
    %v2648 = vpack.c.b16 %v1928, %v1920
    %v2649 = vpack.c.b16 %v1937, %v1929
    %v2650 = vpack.c.b16 %v1938, %v1930
    %v2651 = vpack.c.b16 %v1939, %v1931
    %v2652 = vpack.c.b16 %v1940, %v1932
    %v2653 = vpack.c.b16 %v1941, %v1933
    %v2654 = vpack.c.b16 %v1942, %v1934
    %v2655 = vpack.c.b16 %v1943, %v1935
    %v2656 = vpack.c.b16 %v1944, %v1936
    %v2657 = vpack.c.b16 %v1953, %v1945
    %v2658 = vpack.c.b16 %v1954, %v1946
    %v2659 = vpack.c.b16 %v1955, %v1947
    %v2660 = vpack.c.b16 %v1956, %v1948
    %v2661 = vpack.c.b16 %v1957, %v1949
    %v2662 = vpack.c.b16 %v1958, %v1950
    %v2663 = vpack.c.b16 %v1959, %v1951
    %v2664 = vpack.c.b16 %v1960, %v1952
    %v2665 = vpack.c.b16 %v1969, %v1961
    %v2666 = vpack.c.b16 %v1970, %v1962
    %v2667 = vpack.c.b16 %v1971, %v1963
    %v2668 = vpack.c.b16 %v1972, %v1964
    %v2669 = vpack.c.b16 %v1973, %v1965
    %v2670 = vpack.c.b16 %v1974, %v1966
    %v2671 = vpack.c.b16 %v1975, %v1967
    %v2672 = vpack.c.b16 %v1976, %v1968
    %v2673 = vpack.c.b16 %v1985, %v1977
    %v2674 = vpack.c.b16 %v1986, %v1978
    %v2675 = vpack.c.b16 %v1987, %v1979
    %v2676 = vpack.c.b16 %v1988, %v1980
    %v2677 = vpack.c.b16 %v1989, %v1981
    %v2678 = vpack.c.b16 %v1990, %v1982
    %v2679 = vpack.c.b16 %v1991, %v1983
    %v2680 = vpack.c.b16 %v1992, %v1984
    %v2681 = vpack.c.b16 %v2001, %v1993
    %v2682 = vpack.c.b16 %v2002, %v1994
    %v2683 = vpack.c.b16 %v2003, %v1995
    %v2684 = vpack.c.b16 %v2004, %v1996
    %v2685 = vpack.c.b16 %v2005, %v1997
    %v2686 = vpack.c.b16 %v2006, %v1998
    %v2687 = vpack.c.b16 %v2007, %v1999
    %v2688 = vpack.c.b16 %v2008, %v2000
    %v2689 = vpack.c.b16 %v2017, %v2009
    %v2690 = vpack.c.b16 %v2018, %v2010
    %v2691 = vpack.c.b16 %v2019, %v2011
    %v2692 = vpack.c.b16 %v2020, %v2012
    %v2693 = vpack.c.b16 %v2021, %v2013
    %v2694 = vpack.c.b16 %v2022, %v2014
    %v2695 = vpack.c.b16 %v2023, %v2015
    %v2696 = vpack.c.b16 %v2024, %v2016
    %v2697 = vpack.c.b16 %v2033, %v2025
    %v2698 = vpack.c.b16 %v2034, %v2026
    %v2699 = vpack.c.b16 %v2035, %v2027
    %v2700 = vpack.c.b16 %v2036, %v2028
    %v2701 = vpack.c.b16 %v2037, %v2029
    %v2702 = vpack.c.b16 %v2038, %v2030
    %v2703 = vpack.c.b16 %v2039, %v2031
    %v2704 = vpack.c.b16 %v2040, %v2032
    %v2705 = vpack.c.b16 %v2049, %v2041
    %v2706 = vpack.c.b16 %v2050, %v2042
    %v2707 = vpack.c.b16 %v2051, %v2043
    %v2708 = vpack.c.b16 %v2052, %v2044
    %v2709 = vpack.c.b16 %v2053, %v2045
    %v2710 = vpack.c.b16 %v2054, %v2046
    %v2711 = vpack.c.b16 %v2055, %v2047
    %v2712 = vpack.c.b16 %v2056, %v2048
    %v2713 = vpack.c.b16 %v2065, %v2057
    %v2714 = vpack.c.b16 %v2066, %v2058
    %v2715 = vpack.c.b16 %v2067, %v2059
    %v2716 = vpack.c.b16 %v2068, %v2060
    %v2717 = vpack.c.b16 %v2069, %v2061
    %v2718 = vpack.c.b16 %v2070, %v2062
    %v2719 = vpack.c.b16 %v2071, %v2063
    %v2720 = vpack.c.b16 %v2072, %v2064
    %v2721 = vpack.c.b16 %v2081, %v2073
    %v2722 = vpack.c.b16 %v2082, %v2074
    %v2723 = vpack.c.b16 %v2083, %v2075
    %v2724 = vpack.c.b16 %v2084, %v2076
    %v2725 = vpack.c.b16 %v2085, %v2077
    %v2726 = vpack.c.b16 %v2086, %v2078
    %v2727 = vpack.c.b16 %v2087, %v2079
    %v2728 = vpack.c.b16 %v2088, %v2080
    %v2729 = vpack.c.b16 %v2097, %v2089
    %v2730 = vpack.c.b16 %v2098, %v2090
    %v2731 = vpack.c.b16 %v2099, %v2091
    %v2732 = vpack.c.b16 %v2100, %v2092
    %v2733 = vpack.c.b16 %v2101, %v2093
    %v2734 = vpack.c.b16 %v2102, %v2094
    %v2735 = vpack.c.b16 %v2103, %v2095
    %v2736 = vpack.c.b16 %v2104, %v2096
    %v2737 = vpack.c.b16 %v2113, %v2105
    %v2738 = vpack.c.b16 %v2114, %v2106
    %v2739 = vpack.c.b16 %v2115, %v2107
    %v2740 = vpack.c.b16 %v2116, %v2108
    %v2741 = vpack.c.b16 %v2117, %v2109
    %v2742 = vpack.c.b16 %v2118, %v2110
    %v2743 = vpack.c.b16 %v2119, %v2111
    %v2744 = vpack.c.b16 %v2120, %v2112
    %v2745 = vpack.c.b16 %v2129, %v2121
    %v2746 = vpack.c.b16 %v2130, %v2122
    %v2747 = vpack.c.b16 %v2131, %v2123
    %v2748 = vpack.c.b16 %v2132, %v2124
    %v2749 = vpack.c.b16 %v2133, %v2125
    %v2750 = vpack.c.b16 %v2134, %v2126
    %v2751 = vpack.c.b16 %v2135, %v2127
    %v2752 = vpack.c.b16 %v2136, %v2128
    %v2753 = vpack.c.b16 %v2145, %v2137
    %v2754 = vpack.c.b16 %v2146, %v2138
    %v2755 = vpack.c.b16 %v2147, %v2139
    %v2756 = vpack.c.b16 %v2148, %v2140
    %v2757 = vpack.c.b16 %v2149, %v2141
    %v2758 = vpack.c.b16 %v2150, %v2142
    %v2759 = vpack.c.b16 %v2151, %v2143
    %v2760 = vpack.c.b16 %v2152, %v2144
    %v2761 = vpack.c.b16 %v2161, %v2153
    %v2762 = vpack.c.b16 %v2162, %v2154
    %v2763 = vpack.c.b16 %v2163, %v2155
    %v2764 = vpack.c.b16 %v2164, %v2156
    %v2765 = vpack.c.b16 %v2165, %v2157
    %v2766 = vpack.c.b16 %v2166, %v2158
    %v2767 = vpack.c.b16 %v2167, %v2159
    %v2768 = vpack.c.b16 %v2168, %v2160
    %v2769 = vpack.c.b16 %v2177, %v2169
    %v2770 = vpack.c.b16 %v2178, %v2170
    %v2771 = vpack.c.b16 %v2179, %v2171
    %v2772 = vpack.c.b16 %v2180, %v2172
    %v2773 = vpack.c.b16 %v2181, %v2173
    %v2774 = vpack.c.b16 %v2182, %v2174
    %v2775 = vpack.c.b16 %v2183, %v2175
    %v2776 = vpack.c.b16 %v2184, %v2176
    %v2777 = vpack.c.b16 %v2193, %v2185
    %v2778 = vpack.c.b16 %v2194, %v2186
    %v2779 = vpack.c.b16 %v2195, %v2187
    %v2780 = vpack.c.b16 %v2196, %v2188
    %v2781 = vpack.c.b16 %v2197, %v2189
    %v2782 = vpack.c.b16 %v2198, %v2190
    %v2783 = vpack.c.b16 %v2199, %v2191
    %v2784 = vpack.c.b16 %v2200, %v2192
    %v2785 = vpack.c.b16 %v2209, %v2201
    %v2786 = vpack.c.b16 %v2210, %v2202
    %v2787 = vpack.c.b16 %v2211, %v2203
    %v2788 = vpack.c.b16 %v2212, %v2204
    %v2789 = vpack.c.b16 %v2213, %v2205
    %v2790 = vpack.c.b16 %v2214, %v2206
    %v2791 = vpack.c.b16 %v2215, %v2207
    %v2792 = vpack.c.b16 %v2216, %v2208
    %v2793 = vpack.c.b16 %v2225, %v2217
    %v2794 = vpack.c.b16 %v2226, %v2218
    %v2795 = vpack.c.b16 %v2227, %v2219
    %v2796 = vpack.c.b16 %v2228, %v2220
    %v2797 = vpack.c.b16 %v2229, %v2221
    %v2798 = vpack.c.b16 %v2230, %v2222
    %v2799 = vpack.c.b16 %v2231, %v2223
    %v2800 = vpack.c.b16 %v2232, %v2224
    %v2801 = vpack.c.b16 %v2241, %v2233
    %v2802 = vpack.c.b16 %v2242, %v2234
    %v2803 = vpack.c.b16 %v2243, %v2235
    %v2804 = vpack.c.b16 %v2244, %v2236
    %v2805 = vpack.c.b16 %v2245, %v2237
    %v2806 = vpack.c.b16 %v2246, %v2238
    %v2807 = vpack.c.b16 %v2247, %v2239
    %v2808 = vpack.c.b16 %v2248, %v2240
    %v2809 = vpack.c.b16 %v2257, %v2249
    %v2810 = vpack.c.b16 %v2258, %v2250
    %v2811 = vpack.c.b16 %v2259, %v2251
    %v2812 = vpack.c.b16 %v2260, %v2252
    %v2813 = vpack.c.b16 %v2261, %v2253
    %v2814 = vpack.c.b16 %v2262, %v2254
    %v2815 = vpack.c.b16 %v2263, %v2255
    %v2816 = vpack.c.b16 %v2264, %v2256
    %v2817 = vpack.c.b16 %v2273, %v2265
    %v2818 = vpack.c.b16 %v2274, %v2266
    %v2819 = vpack.c.b16 %v2275, %v2267
    %v2820 = vpack.c.b16 %v2276, %v2268
    %v2821 = vpack.c.b16 %v2277, %v2269
    %v2822 = vpack.c.b16 %v2278, %v2270
    %v2823 = vpack.c.b16 %v2279, %v2271
    %v2824 = vpack.c.b16 %v2280, %v2272
    %v2825 = vpack.c.b16 %v2289, %v2281
    %v2826 = vpack.c.b16 %v2290, %v2282
    %v2827 = vpack.c.b16 %v2291, %v2283
    %v2828 = vpack.c.b16 %v2292, %v2284
    %v2829 = vpack.c.b16 %v2293, %v2285
    %v2830 = vpack.c.b16 %v2294, %v2286
    %v2831 = vpack.c.b16 %v2295, %v2287
    %v2832 = vpack.c.b16 %v2296, %v2288
    %v2833 = vpack.c.b16 %v2305, %v2297
    %v2834 = vpack.c.b16 %v2306, %v2298
    %v2835 = vpack.c.b16 %v2307, %v2299
    %v2836 = vpack.c.b16 %v2308, %v2300
    %v2837 = vpack.c.b16 %v2309, %v2301
    %v2838 = vpack.c.b16 %v2310, %v2302
    %v2839 = vpack.c.b16 %v2311, %v2303
    %v2840 = vpack.c.b16 %v2312, %v2304
    %v2841 = vpack.c.b16 %v2321, %v2313
    %v2842 = vpack.c.b16 %v2322, %v2314
    %v2843 = vpack.c.b16 %v2323, %v2315
    %v2844 = vpack.c.b16 %v2324, %v2316
    %v2845 = vpack.c.b16 %v2325, %v2317
    %v2846 = vpack.c.b16 %v2326, %v2318
    %v2847 = vpack.c.b16 %v2327, %v2319
    %v2848 = vpack.c.b16 %v2328, %v2320
    %v2849 = vpack.c.b16 %v2337, %v2329
    %v2850 = vpack.c.b16 %v2338, %v2330
    %v2851 = vpack.c.b16 %v2339, %v2331
    %v2852 = vpack.c.b16 %v2340, %v2332
    %v2853 = vpack.c.b16 %v2341, %v2333
    %v2854 = vpack.c.b16 %v2342, %v2334
    %v2855 = vpack.c.b16 %v2343, %v2335
    %v2856 = vpack.c.b16 %v2344, %v2336
    %3369 = vmatprep.subr.bf16.mxu0 %v2346
    %3370 = vmatpush1.bf16.msra.mxu0 %v2345
    %3371 = vmatprep.subr.bf16.mxu0 %v2354
    %3372 = vmatpush1.bf16.msra.mxu0 %v2353
    %3373 = vmatprep.subr.bf16.mxu0 %v2362
    %3374 = vmatpush1.bf16.msra.mxu0 %v2361
    %3375 = vmatprep.subr.bf16.mxu0 %v2370
    %3376 = vmatpush1.bf16.msra.mxu0 %v2369
    %3377 = vmatprep.subr.bf16.mxu0 %v2378
    %3378 = vmatpush1.bf16.msra.mxu0 %v2377
    %3379 = vmatprep.subr.bf16.mxu0 %v2386
    %3380 = vmatpush1.bf16.msra.mxu0 %v2385
    %3381 = vmatprep.subr.bf16.mxu0 %v2394
    %3382 = vmatpush1.bf16.msra.mxu0 %v2393
    %3383 = vmatprep.subr.bf16.mxu0 %v2402
    %3384 = vmatpush1.bf16.msra.mxu0 %v2401
    %3385 = vmatprep.subr.bf16.mxu0 %v2410
    %3386 = vmatpush1.bf16.msra.mxu0 %v2409
    %3387 = vmatprep.subr.bf16.mxu0 %v2418
    %3388 = vmatpush1.bf16.msra.mxu0 %v2417
    %3389 = vmatprep.subr.bf16.mxu0 %v2426
    %3390 = vmatpush1.bf16.msra.mxu0 %v2425
    %3391 = vmatprep.subr.bf16.mxu0 %v2434
    %3392 = vmatpush1.bf16.msra.mxu0 %v2433
    %3393 = vmatprep.subr.bf16.mxu0 %v2442
    %3394 = vmatpush1.bf16.msra.mxu0 %v2441
    %3395 = vmatprep.subr.bf16.mxu0 %v2450
    %3396 = vmatpush1.bf16.msra.mxu0 %v2449
    %3397 = vmatprep.subr.bf16.mxu0 %v2458
    %3398 = vmatpush1.bf16.msra.mxu0 %v2457
    %3399 = vmatprep.subr.bf16.mxu0 %v2466
    %3400 = vmatpush1.bf16.msra.mxu0 %v2465
    %3401 = vmatprep.mubr.bf16.mxu0 %v794
    %3402 = vmatmul.mubr.bf16.gmra.mrb[0].mxu0 %v793
    %v3403 = vpop.f32.mrb[0].mxu0
    %v3404 = vadd.f32 %v744, %v3403
    %v3405 = vpop.f32.mrb[0].mxu0
    %v3406 = vadd.f32 %v748, %v3405
    %v3407 = vpop.f32.mrb[0].mxu0
    %v3408 = vpop.f32.mrb[0].mxu0
    %3409 = vdwg.mxu0
    %3410 = vmatprep.subr.bf16.mxu0 %v2474
    %3411 = vmatpush1.bf16.msra.mxu0 %v2473
    %3412 = vmatprep.subr.bf16.mxu0 %v2482
    %3413 = vmatpush1.bf16.msra.mxu0 %v2481
    %3414 = vmatprep.subr.bf16.mxu0 %v2490
    %3415 = vmatpush1.bf16.msra.mxu0 %v2489
    %3416 = vmatprep.subr.bf16.mxu0 %v2498
    %3417 = vmatpush1.bf16.msra.mxu0 %v2497
    %3418 = vmatprep.subr.bf16.mxu0 %v2506
    %3419 = vmatpush1.bf16.msra.mxu0 %v2505
    %3420 = vmatprep.subr.bf16.mxu0 %v2514
    %3421 = vmatpush1.bf16.msra.mxu0 %v2513
    %3422 = vmatprep.subr.bf16.mxu0 %v2522
    %3423 = vmatpush1.bf16.msra.mxu0 %v2521
    %3424 = vmatprep.subr.bf16.mxu0 %v2530
    %3425 = vmatpush1.bf16.msra.mxu0 %v2529
    %3426 = vmatprep.subr.bf16.mxu0 %v2538
    %3427 = vmatpush1.bf16.msra.mxu0 %v2537
    %3428 = vmatprep.subr.bf16.mxu0 %v2546
    %3429 = vmatpush1.bf16.msra.mxu0 %v2545
    %3430 = vmatprep.subr.bf16.mxu0 %v2554
    %3431 = vmatpush1.bf16.msra.mxu0 %v2553
    %3432 = vmatprep.subr.bf16.mxu0 %v2562
    %3433 = vmatpush1.bf16.msra.mxu0 %v2561
    %3434 = vmatprep.subr.bf16.mxu0 %v2570
    %3435 = vmatpush1.bf16.msra.mxu0 %v2569
    %3436 = vmatprep.subr.bf16.mxu0 %v2578
    %3437 = vmatpush1.bf16.msra.mxu0 %v2577
    %3438 = vmatprep.subr.bf16.mxu0 %v2586
    %3439 = vmatpush1.bf16.msra.mxu0 %v2585
    %3440 = vmatprep.subr.bf16.mxu0 %v2594
    %3441 = vmatpush1.bf16.msra.mxu0 %v2593
    %3442 = vmatprep.mubr.bf16.mxu0 %v796
    %3443 = vmatmul.mubr.bf16.gmra.mrb[0].mxu0 %v795
    %v3444 = vpop.f32.mrb[0].mxu0
    %v3445 = vadd.f32 %v3404, %v3444
    %v3446 = vpop.f32.mrb[0].mxu0
    %v3447 = vadd.f32 %v3406, %v3446
    %v3448 = vpop.f32.mrb[0].mxu0
    %v3449 = vpop.f32.mrb[0].mxu0
    %3450 = vdwg.mxu0
    %3451 = vmatprep.subr.bf16.mxu0 %v2602
    %3452 = vmatpush1.bf16.msra.mxu0 %v2601
    %3453 = vmatprep.subr.bf16.mxu0 %v2610
    %3454 = vmatpush1.bf16.msra.mxu0 %v2609
    %3455 = vmatprep.subr.bf16.mxu0 %v2618
    %3456 = vmatpush1.bf16.msra.mxu0 %v2617
    %3457 = vmatprep.subr.bf16.mxu0 %v2626
    %3458 = vmatpush1.bf16.msra.mxu0 %v2625
    %3459 = vmatprep.subr.bf16.mxu0 %v2634
    %3460 = vmatpush1.bf16.msra.mxu0 %v2633
    %3461 = vmatprep.subr.bf16.mxu0 %v2642
    %3462 = vmatpush1.bf16.msra.mxu0 %v2641
    %3463 = vmatprep.subr.bf16.mxu0 %v2650
    %3464 = vmatpush1.bf16.msra.mxu0 %v2649
    %3465 = vmatprep.subr.bf16.mxu0 %v2658
    %3466 = vmatpush1.bf16.msra.mxu0 %v2657
    %3467 = vmatprep.subr.bf16.mxu0 %v2666
    %3468 = vmatpush1.bf16.msra.mxu0 %v2665
    %3469 = vmatprep.subr.bf16.mxu0 %v2674
    %3470 = vmatpush1.bf16.msra.mxu0 %v2673
    %3471 = vmatprep.subr.bf16.mxu0 %v2682
    %3472 = vmatpush1.bf16.msra.mxu0 %v2681
    %3473 = vmatprep.subr.bf16.mxu0 %v2690
    %3474 = vmatpush1.bf16.msra.mxu0 %v2689
    %3475 = vmatprep.subr.bf16.mxu0 %v2698
    %3476 = vmatpush1.bf16.msra.mxu0 %v2697
    %3477 = vmatprep.subr.bf16.mxu0 %v2706
    %3478 = vmatpush1.bf16.msra.mxu0 %v2705
    %3479 = vmatprep.subr.bf16.mxu0 %v2714
    %3480 = vmatpush1.bf16.msra.mxu0 %v2713
    %3481 = vmatprep.subr.bf16.mxu0 %v2722
    %3482 = vmatpush1.bf16.msra.mxu0 %v2721
    %3483 = vmatprep.mubr.bf16.mxu0 %v798
    %3484 = vmatmul.mubr.bf16.gmra.mrb[0].mxu0 %v797
    %v3485 = vpop.f32.mrb[0].mxu0
    %v3486 = vadd.f32 %v3445, %v3485
    %v3487 = vpop.f32.mrb[0].mxu0
    %v3488 = vadd.f32 %v3447, %v3487
    %v3489 = vpop.f32.mrb[0].mxu0
    %v3490 = vpop.f32.mrb[0].mxu0
    %3491 = vdwg.mxu0
    %3492 = vmatprep.subr.bf16.mxu0 %v2730
    %3493 = vmatpush1.bf16.msra.mxu0 %v2729
    %3494 = vmatprep.subr.bf16.mxu0 %v2738
    %3495 = vmatpush1.bf16.msra.mxu0 %v2737
    %3496 = vmatprep.subr.bf16.mxu0 %v2746
    %3497 = vmatpush1.bf16.msra.mxu0 %v2745
    %3498 = vmatprep.subr.bf16.mxu0 %v2754
    %3499 = vmatpush1.bf16.msra.mxu0 %v2753
    %3500 = vmatprep.subr.bf16.mxu0 %v2762
    %3501 = vmatpush1.bf16.msra.mxu0 %v2761
    %3502 = vmatprep.subr.bf16.mxu0 %v2770
    %3503 = vmatpush1.bf16.msra.mxu0 %v2769
    %3504 = vmatprep.subr.bf16.mxu0 %v2778
    %3505 = vmatpush1.bf16.msra.mxu0 %v2777
    %3506 = vmatprep.subr.bf16.mxu0 %v2786
    %3507 = vmatpush1.bf16.msra.mxu0 %v2785
    %3508 = vmatprep.subr.bf16.mxu0 %v2794
    %3509 = vmatpush1.bf16.msra.mxu0 %v2793
    %3510 = vmatprep.subr.bf16.mxu0 %v2802
    %3511 = vmatpush1.bf16.msra.mxu0 %v2801
    %3512 = vmatprep.subr.bf16.mxu0 %v2810
    %3513 = vmatpush1.bf16.msra.mxu0 %v2809
    %3514 = vmatprep.subr.bf16.mxu0 %v2818
    %3515 = vmatpush1.bf16.msra.mxu0 %v2817
    %3516 = vmatprep.subr.bf16.mxu0 %v2826
    %3517 = vmatpush1.bf16.msra.mxu0 %v2825
    %3518 = vmatprep.subr.bf16.mxu0 %v2834
    %3519 = vmatpush1.bf16.msra.mxu0 %v2833
    %3520 = vmatprep.subr.bf16.mxu0 %v2842
    %3521 = vmatpush1.bf16.msra.mxu0 %v2841
    %3522 = vmatprep.subr.bf16.mxu0 %v2850
    %3523 = vmatpush1.bf16.msra.mxu0 %v2849
    %3524 = vmatprep.mubr.bf16.mxu0 %v800
    %3525 = vmatmul.mubr.bf16.gmra.mrb[0].mxu0 %v799
    %v3526 = vpop.f32.mrb[0].mxu0
    %v3527 = vadd.f32 %v3486, %v3526
    %v3528 = vpop.f32.mrb[0].mxu0
    %v3529 = vadd.f32 %v3488, %v3528
    %v3530 = vpop.f32.mrb[0].mxu0
    %v3531 = vpop.f32.mrb[0].mxu0
    %3532 = vdwg.mxu0
    %3533 = vmatprep.subr.bf16.mxu0 %v2348
    %3534 = vmatpush1.bf16.msra.mxu0 %v2347
    %3535 = vmatprep.subr.bf16.mxu0 %v2356
    %3536 = vmatpush1.bf16.msra.mxu0 %v2355
    %3537 = vmatprep.subr.bf16.mxu0 %v2364
    %3538 = vmatpush1.bf16.msra.mxu0 %v2363
    %3539 = vmatprep.subr.bf16.mxu0 %v2372
    %3540 = vmatpush1.bf16.msra.mxu0 %v2371
    %3541 = vmatprep.subr.bf16.mxu0 %v2380
    %3542 = vmatpush1.bf16.msra.mxu0 %v2379
    %3543 = vmatprep.subr.bf16.mxu0 %v2388
    %3544 = vmatpush1.bf16.msra.mxu0 %v2387
    %3545 = vmatprep.subr.bf16.mxu0 %v2396
    %3546 = vmatpush1.bf16.msra.mxu0 %v2395
    %3547 = vmatprep.subr.bf16.mxu0 %v2404
    %3548 = vmatpush1.bf16.msra.mxu0 %v2403
    %3549 = vmatprep.subr.bf16.mxu0 %v2412
    %3550 = vmatpush1.bf16.msra.mxu0 %v2411
    %3551 = vmatprep.subr.bf16.mxu0 %v2420
    %3552 = vmatpush1.bf16.msra.mxu0 %v2419
    %3553 = vmatprep.subr.bf16.mxu0 %v2428
    %3554 = vmatpush1.bf16.msra.mxu0 %v2427
    %3555 = vmatprep.subr.bf16.mxu0 %v2436
    %3556 = vmatpush1.bf16.msra.mxu0 %v2435
    %3557 = vmatprep.subr.bf16.mxu0 %v2444
    %3558 = vmatpush1.bf16.msra.mxu0 %v2443
    %3559 = vmatprep.subr.bf16.mxu0 %v2452
    %3560 = vmatpush1.bf16.msra.mxu0 %v2451
    %3561 = vmatprep.subr.bf16.mxu0 %v2460
    %3562 = vmatpush1.bf16.msra.mxu0 %v2459
    %3563 = vmatprep.subr.bf16.mxu0 %v2468
    %3564 = vmatpush1.bf16.msra.mxu0 %v2467
    %3565 = vmatprep.mubr.bf16.mxu0 %v794
    %3566 = vmatmul.mubr.bf16.gmra.mrb[0].mxu0 %v793
    %v3567 = vpop.f32.mrb[0].mxu0
    %v3568 = vadd.f32 %v752, %v3567
    %v3569 = vpop.f32.mrb[0].mxu0
    %v3570 = vadd.f32 %v756, %v3569
    %v3571 = vpop.f32.mrb[0].mxu0
    %v3572 = vpop.f32.mrb[0].mxu0
    %3573 = vdwg.mxu0
    %3574 = vmatprep.subr.bf16.mxu0 %v2476
    %3575 = vmatpush1.bf16.msra.mxu0 %v2475
    %3576 = vmatprep.subr.bf16.mxu0 %v2484
    %3577 = vmatpush1.bf16.msra.mxu0 %v2483
    %3578 = vmatprep.subr.bf16.mxu0 %v2492
    %3579 = vmatpush1.bf16.msra.mxu0 %v2491
    %3580 = vmatprep.subr.bf16.mxu0 %v2500
    %3581 = vmatpush1.bf16.msra.mxu0 %v2499
    %3582 = vmatprep.subr.bf16.mxu0 %v2508
    %3583 = vmatpush1.bf16.msra.mxu0 %v2507
    %3584 = vmatprep.subr.bf16.mxu0 %v2516
    %3585 = vmatpush1.bf16.msra.mxu0 %v2515
    %3586 = vmatprep.subr.bf16.mxu0 %v2524
    %3587 = vmatpush1.bf16.msra.mxu0 %v2523
    %3588 = vmatprep.subr.bf16.mxu0 %v2532
    %3589 = vmatpush1.bf16.msra.mxu0 %v2531
    %3590 = vmatprep.subr.bf16.mxu0 %v2540
    %3591 = vmatpush1.bf16.msra.mxu0 %v2539
    %3592 = vmatprep.subr.bf16.mxu0 %v2548
    %3593 = vmatpush1.bf16.msra.mxu0 %v2547
    %3594 = vmatprep.subr.bf16.mxu0 %v2556
    %3595 = vmatpush1.bf16.msra.mxu0 %v2555
    %3596 = vmatprep.subr.bf16.mxu0 %v2564
    %3597 = vmatpush1.bf16.msra.mxu0 %v2563
    %3598 = vmatprep.subr.bf16.mxu0 %v2572
    %3599 = vmatpush1.bf16.msra.mxu0 %v2571
    %3600 = vmatprep.subr.bf16.mxu0 %v2580
    %3601 = vmatpush1.bf16.msra.mxu0 %v2579
    %3602 = vmatprep.subr.bf16.mxu0 %v2588
    %3603 = vmatpush1.bf16.msra.mxu0 %v2587
    %3604 = vmatprep.subr.bf16.mxu0 %v2596
    %3605 = vmatpush1.bf16.msra.mxu0 %v2595
    %3606 = vmatprep.mubr.bf16.mxu0 %v796
    %3607 = vmatmul.mubr.bf16.gmra.mrb[0].mxu0 %v795
    %v3608 = vpop.f32.mrb[0].mxu0
    %v3609 = vadd.f32 %v3568, %v3608
    %v3610 = vpop.f32.mrb[0].mxu0
    %v3611 = vadd.f32 %v3570, %v3610
    %v3612 = vpop.f32.mrb[0].mxu0
    %v3613 = vpop.f32.mrb[0].mxu0
    %3614 = vdwg.mxu0
    %3615 = vmatprep.subr.bf16.mxu0 %v2604
    %3616 = vmatpush1.bf16.msra.mxu0 %v2603
    %3617 = vmatprep.subr.bf16.mxu0 %v2612
    %3618 = vmatpush1.bf16.msra.mxu0 %v2611
    %3619 = vmatprep.subr.bf16.mxu0 %v2620
    %3620 = vmatpush1.bf16.msra.mxu0 %v2619
    %3621 = vmatprep.subr.bf16.mxu0 %v2628
    %3622 = vmatpush1.bf16.msra.mxu0 %v2627
    %3623 = vmatprep.subr.bf16.mxu0 %v2636
    %3624 = vmatpush1.bf16.msra.mxu0 %v2635
    %3625 = vmatprep.subr.bf16.mxu0 %v2644
    %3626 = vmatpush1.bf16.msra.mxu0 %v2643
    %3627 = vmatprep.subr.bf16.mxu0 %v2652
    %3628 = vmatpush1.bf16.msra.mxu0 %v2651
    %3629 = vmatprep.subr.bf16.mxu0 %v2660
    %3630 = vmatpush1.bf16.msra.mxu0 %v2659
    %3631 = vmatprep.subr.bf16.mxu0 %v2668
    %3632 = vmatpush1.bf16.msra.mxu0 %v2667
    %3633 = vmatprep.subr.bf16.mxu0 %v2676
    %3634 = vmatpush1.bf16.msra.mxu0 %v2675
    %3635 = vmatprep.subr.bf16.mxu0 %v2684
    %3636 = vmatpush1.bf16.msra.mxu0 %v2683
    %3637 = vmatprep.subr.bf16.mxu0 %v2692
    %3638 = vmatpush1.bf16.msra.mxu0 %v2691
    %3639 = vmatprep.subr.bf16.mxu0 %v2700
    %3640 = vmatpush1.bf16.msra.mxu0 %v2699
    %3641 = vmatprep.subr.bf16.mxu0 %v2708
    %3642 = vmatpush1.bf16.msra.mxu0 %v2707
    %3643 = vmatprep.subr.bf16.mxu0 %v2716
    %3644 = vmatpush1.bf16.msra.mxu0 %v2715
    %3645 = vmatprep.subr.bf16.mxu0 %v2724
    %3646 = vmatpush1.bf16.msra.mxu0 %v2723
    %3647 = vmatprep.mubr.bf16.mxu0 %v798
    %3648 = vmatmul.mubr.bf16.gmra.mrb[0].mxu0 %v797
    %v3649 = vpop.f32.mrb[0].mxu0
    %v3650 = vadd.f32 %v3609, %v3649
    %v3651 = vpop.f32.mrb[0].mxu0
    %v3652 = vadd.f32 %v3611, %v3651
    %v3653 = vpop.f32.mrb[0].mxu0
    %v3654 = vpop.f32.mrb[0].mxu0
    %3655 = vdwg.mxu0
    %3656 = vmatprep.subr.bf16.mxu0 %v2732
    %3657 = vmatpush1.bf16.msra.mxu0 %v2731
    %3658 = vmatprep.subr.bf16.mxu0 %v2740
    %3659 = vmatpush1.bf16.msra.mxu0 %v2739
    %3660 = vmatprep.subr.bf16.mxu0 %v2748
    %3661 = vmatpush1.bf16.msra.mxu0 %v2747
    %3662 = vmatprep.subr.bf16.mxu0 %v2756
    %3663 = vmatpush1.bf16.msra.mxu0 %v2755
    %3664 = vmatprep.subr.bf16.mxu0 %v2764
    %3665 = vmatpush1.bf16.msra.mxu0 %v2763
    %3666 = vmatprep.subr.bf16.mxu0 %v2772
    %3667 = vmatpush1.bf16.msra.mxu0 %v2771
    %3668 = vmatprep.subr.bf16.mxu0 %v2780
    %3669 = vmatpush1.bf16.msra.mxu0 %v2779
    %3670 = vmatprep.subr.bf16.mxu0 %v2788
    %3671 = vmatpush1.bf16.msra.mxu0 %v2787
    %3672 = vmatprep.subr.bf16.mxu0 %v2796
    %3673 = vmatpush1.bf16.msra.mxu0 %v2795
    %3674 = vmatprep.subr.bf16.mxu0 %v2804
    %3675 = vmatpush1.bf16.msra.mxu0 %v2803
    %3676 = vmatprep.subr.bf16.mxu0 %v2812
    %3677 = vmatpush1.bf16.msra.mxu0 %v2811
    %3678 = vmatprep.subr.bf16.mxu0 %v2820
    %3679 = vmatpush1.bf16.msra.mxu0 %v2819
    %3680 = vmatprep.subr.bf16.mxu0 %v2828
    %3681 = vmatpush1.bf16.msra.mxu0 %v2827
    %3682 = vmatprep.subr.bf16.mxu0 %v2836
    %3683 = vmatpush1.bf16.msra.mxu0 %v2835
    %3684 = vmatprep.subr.bf16.mxu0 %v2844
    %3685 = vmatpush1.bf16.msra.mxu0 %v2843
    %3686 = vmatprep.subr.bf16.mxu0 %v2852
    %3687 = vmatpush1.bf16.msra.mxu0 %v2851
    %3688 = vmatprep.mubr.bf16.mxu0 %v800
    %3689 = vmatmul.mubr.bf16.gmra.mrb[0].mxu0 %v799
    %v3690 = vpop.f32.mrb[0].mxu0
    %v3691 = vadd.f32 %v3650, %v3690
    %v3692 = vpop.f32.mrb[0].mxu0
    %v3693 = vadd.f32 %v3652, %v3692
    %v3694 = vpop.f32.mrb[0].mxu0
    %v3695 = vpop.f32.mrb[0].mxu0
    %3696 = vdwg.mxu0
    %3697 = vmatprep.subr.bf16.mxu0 %v2350
    %3698 = vmatpush1.bf16.msra.mxu0 %v2349
    %3699 = vmatprep.subr.bf16.mxu0 %v2358
    %3700 = vmatpush1.bf16.msra.mxu0 %v2357
    %3701 = vmatprep.subr.bf16.mxu0 %v2366
    %3702 = vmatpush1.bf16.msra.mxu0 %v2365
    %3703 = vmatprep.subr.bf16.mxu0 %v2374
    %3704 = vmatpush1.bf16.msra.mxu0 %v2373
    %3705 = vmatprep.subr.bf16.mxu0 %v2382
    %3706 = vmatpush1.bf16.msra.mxu0 %v2381
    %3707 = vmatprep.subr.bf16.mxu0 %v2390
    %3708 = vmatpush1.bf16.msra.mxu0 %v2389
    %3709 = vmatprep.subr.bf16.mxu0 %v2398
    %3710 = vmatpush1.bf16.msra.mxu0 %v2397
    %3711 = vmatprep.subr.bf16.mxu0 %v2406
    %3712 = vmatpush1.bf16.msra.mxu0 %v2405
    %3713 = vmatprep.subr.bf16.mxu0 %v2414
    %3714 = vmatpush1.bf16.msra.mxu0 %v2413
    %3715 = vmatprep.subr.bf16.mxu0 %v2422
    %3716 = vmatpush1.bf16.msra.mxu0 %v2421
    %3717 = vmatprep.subr.bf16.mxu0 %v2430
    %3718 = vmatpush1.bf16.msra.mxu0 %v2429
    %3719 = vmatprep.subr.bf16.mxu0 %v2438
    %3720 = vmatpush1.bf16.msra.mxu0 %v2437
    %3721 = vmatprep.subr.bf16.mxu0 %v2446
    %3722 = vmatpush1.bf16.msra.mxu0 %v2445
    %3723 = vmatprep.subr.bf16.mxu0 %v2454
    %3724 = vmatpush1.bf16.msra.mxu0 %v2453
    %3725 = vmatprep.subr.bf16.mxu0 %v2462
    %3726 = vmatpush1.bf16.msra.mxu0 %v2461
    %3727 = vmatprep.subr.bf16.mxu0 %v2470
    %3728 = vmatpush1.bf16.msra.mxu0 %v2469
    %3729 = vmatprep.mubr.bf16.mxu0 %v794
    %3730 = vmatmul.mubr.bf16.gmra.mrb[0].mxu0 %v793
    %v3731 = vpop.f32.mrb[0].mxu0
    %v3732 = vadd.f32 %v760, %v3731
    %v3733 = vpop.f32.mrb[0].mxu0
    %v3734 = vadd.f32 %v764, %v3733
    %v3735 = vpop.f32.mrb[0].mxu0
    %v3736 = vpop.f32.mrb[0].mxu0
    %3737 = vdwg.mxu0
    %3738 = vmatprep.subr.bf16.mxu0 %v2478
    %3739 = vmatpush1.bf16.msra.mxu0 %v2477
    %3740 = vmatprep.subr.bf16.mxu0 %v2486
    %3741 = vmatpush1.bf16.msra.mxu0 %v2485
    %3742 = vmatprep.subr.bf16.mxu0 %v2494
    %3743 = vmatpush1.bf16.msra.mxu0 %v2493
    %3744 = vmatprep.subr.bf16.mxu0 %v2502
    %3745 = vmatpush1.bf16.msra.mxu0 %v2501
    %3746 = vmatprep.subr.bf16.mxu0 %v2510
    %3747 = vmatpush1.bf16.msra.mxu0 %v2509
    %3748 = vmatprep.subr.bf16.mxu0 %v2518
    %3749 = vmatpush1.bf16.msra.mxu0 %v2517
    %3750 = vmatprep.subr.bf16.mxu0 %v2526
    %3751 = vmatpush1.bf16.msra.mxu0 %v2525
    %3752 = vmatprep.subr.bf16.mxu0 %v2534
    %3753 = vmatpush1.bf16.msra.mxu0 %v2533
    %3754 = vmatprep.subr.bf16.mxu0 %v2542
    %3755 = vmatpush1.bf16.msra.mxu0 %v2541
    %3756 = vmatprep.subr.bf16.mxu0 %v2550
    %3757 = vmatpush1.bf16.msra.mxu0 %v2549
    %3758 = vmatprep.subr.bf16.mxu0 %v2558
    %3759 = vmatpush1.bf16.msra.mxu0 %v2557
    %3760 = vmatprep.subr.bf16.mxu0 %v2566
    %3761 = vmatpush1.bf16.msra.mxu0 %v2565
    %3762 = vmatprep.subr.bf16.mxu0 %v2574
    %3763 = vmatpush1.bf16.msra.mxu0 %v2573
    %3764 = vmatprep.subr.bf16.mxu0 %v2582
    %3765 = vmatpush1.bf16.msra.mxu0 %v2581
    %3766 = vmatprep.subr.bf16.mxu0 %v2590
    %3767 = vmatpush1.bf16.msra.mxu0 %v2589
    %3768 = vmatprep.subr.bf16.mxu0 %v2598
    %3769 = vmatpush1.bf16.msra.mxu0 %v2597
    %3770 = vmatprep.mubr.bf16.mxu0 %v796
    %3771 = vmatmul.mubr.bf16.gmra.mrb[0].mxu0 %v795
    %v3772 = vpop.f32.mrb[0].mxu0
    %v3773 = vadd.f32 %v3732, %v3772
    %v3774 = vpop.f32.mrb[0].mxu0
    %v3775 = vadd.f32 %v3734, %v3774
    %v3776 = vpop.f32.mrb[0].mxu0
    %v3777 = vpop.f32.mrb[0].mxu0
    %3778 = vdwg.mxu0
    %3779 = vmatprep.subr.bf16.mxu0 %v2606
    %3780 = vmatpush1.bf16.msra.mxu0 %v2605
    %3781 = vmatprep.subr.bf16.mxu0 %v2614
    %3782 = vmatpush1.bf16.msra.mxu0 %v2613
    %3783 = vmatprep.subr.bf16.mxu0 %v2622
    %3784 = vmatpush1.bf16.msra.mxu0 %v2621
    %3785 = vmatprep.subr.bf16.mxu0 %v2630
    %3786 = vmatpush1.bf16.msra.mxu0 %v2629
    %3787 = vmatprep.subr.bf16.mxu0 %v2638
    %3788 = vmatpush1.bf16.msra.mxu0 %v2637
    %3789 = vmatprep.subr.bf16.mxu0 %v2646
    %3790 = vmatpush1.bf16.msra.mxu0 %v2645
    %3791 = vmatprep.subr.bf16.mxu0 %v2654
    %3792 = vmatpush1.bf16.msra.mxu0 %v2653
    %3793 = vmatprep.subr.bf16.mxu0 %v2662
    %3794 = vmatpush1.bf16.msra.mxu0 %v2661
    %3795 = vmatprep.subr.bf16.mxu0 %v2670
    %3796 = vmatpush1.bf16.msra.mxu0 %v2669
    %3797 = vmatprep.subr.bf16.mxu0 %v2678
    %3798 = vmatpush1.bf16.msra.mxu0 %v2677
    %3799 = vmatprep.subr.bf16.mxu0 %v2686
    %3800 = vmatpush1.bf16.msra.mxu0 %v2685
    %3801 = vmatprep.subr.bf16.mxu0 %v2694
    %3802 = vmatpush1.bf16.msra.mxu0 %v2693
    %3803 = vmatprep.subr.bf16.mxu0 %v2702
    %3804 = vmatpush1.bf16.msra.mxu0 %v2701
    %3805 = vmatprep.subr.bf16.mxu0 %v2710
    %3806 = vmatpush1.bf16.msra.mxu0 %v2709
    %3807 = vmatprep.subr.bf16.mxu0 %v2718
    %3808 = vmatpush1.bf16.msra.mxu0 %v2717
    %3809 = vmatprep.subr.bf16.mxu0 %v2726
    %3810 = vmatpush1.bf16.msra.mxu0 %v2725
    %3811 = vmatprep.mubr.bf16.mxu0 %v798
    %3812 = vmatmul.mubr.bf16.gmra.mrb[0].mxu0 %v797
    %v3813 = vpop.f32.mrb[0].mxu0
    %v3814 = vadd.f32 %v3773, %v3813
    %v3815 = vpop.f32.mrb[0].mxu0
    %v3816 = vadd.f32 %v3775, %v3815
    %v3817 = vpop.f32.mrb[0].mxu0
    %v3818 = vpop.f32.mrb[0].mxu0
    %3819 = vdwg.mxu0
    %3820 = vmatprep.subr.bf16.mxu0 %v2734
    %3821 = vmatpush1.bf16.msra.mxu0 %v2733
    %3822 = vmatprep.subr.bf16.mxu0 %v2742
    %3823 = vmatpush1.bf16.msra.mxu0 %v2741
    %3824 = vmatprep.subr.bf16.mxu0 %v2750
    %3825 = vmatpush1.bf16.msra.mxu0 %v2749
    %3826 = vmatprep.subr.bf16.mxu0 %v2758
    %3827 = vmatpush1.bf16.msra.mxu0 %v2757
    %3828 = vmatprep.subr.bf16.mxu0 %v2766
    %3829 = vmatpush1.bf16.msra.mxu0 %v2765
    %3830 = vmatprep.subr.bf16.mxu0 %v2774
    %3831 = vmatpush1.bf16.msra.mxu0 %v2773
    %3832 = vmatprep.subr.bf16.mxu0 %v2782
    %3833 = vmatpush1.bf16.msra.mxu0 %v2781
    %3834 = vmatprep.subr.bf16.mxu0 %v2790
    %3835 = vmatpush1.bf16.msra.mxu0 %v2789
    %3836 = vmatprep.subr.bf16.mxu0 %v2798
    %3837 = vmatpush1.bf16.msra.mxu0 %v2797
    %3838 = vmatprep.subr.bf16.mxu0 %v2806
    %3839 = vmatpush1.bf16.msra.mxu0 %v2805
    %3840 = vmatprep.subr.bf16.mxu0 %v2814
    %3841 = vmatpush1.bf16.msra.mxu0 %v2813
    %3842 = vmatprep.subr.bf16.mxu0 %v2822
    %3843 = vmatpush1.bf16.msra.mxu0 %v2821
    %3844 = vmatprep.subr.bf16.mxu0 %v2830
    %3845 = vmatpush1.bf16.msra.mxu0 %v2829
    %3846 = vmatprep.subr.bf16.mxu0 %v2838
    %3847 = vmatpush1.bf16.msra.mxu0 %v2837
    %3848 = vmatprep.subr.bf16.mxu0 %v2846
    %3849 = vmatpush1.bf16.msra.mxu0 %v2845
    %3850 = vmatprep.subr.bf16.mxu0 %v2854
    %3851 = vmatpush1.bf16.msra.mxu0 %v2853
    %3852 = vmatprep.mubr.bf16.mxu0 %v800
    %3853 = vmatmul.mubr.bf16.gmra.mrb[0].mxu0 %v799
    %v3854 = vpop.f32.mrb[0].mxu0
    %v3855 = vadd.f32 %v3814, %v3854
    %v3856 = vpop.f32.mrb[0].mxu0
    %v3857 = vadd.f32 %v3816, %v3856
    %v3858 = vpop.f32.mrb[0].mxu0
    %v3859 = vpop.f32.mrb[0].mxu0
    %3860 = vdwg.mxu0
    %3861 = vmatprep.subr.bf16.mxu0 %v2352
    %3862 = vmatpush1.bf16.msra.mxu0 %v2351
    %3863 = vmatprep.subr.bf16.mxu0 %v2360
    %3864 = vmatpush1.bf16.msra.mxu0 %v2359
    %3865 = vmatprep.subr.bf16.mxu0 %v2368
    %3866 = vmatpush1.bf16.msra.mxu0 %v2367
    %3867 = vmatprep.subr.bf16.mxu0 %v2376
    %3868 = vmatpush1.bf16.msra.mxu0 %v2375
    %3869 = vmatprep.subr.bf16.mxu0 %v2384
    %3870 = vmatpush1.bf16.msra.mxu0 %v2383
    %3871 = vmatprep.subr.bf16.mxu0 %v2392
    %3872 = vmatpush1.bf16.msra.mxu0 %v2391
    %3873 = vmatprep.subr.bf16.mxu0 %v2400
    %3874 = vmatpush1.bf16.msra.mxu0 %v2399
    %3875 = vmatprep.subr.bf16.mxu0 %v2408
    %3876 = vmatpush1.bf16.msra.mxu0 %v2407
    %3877 = vmatprep.subr.bf16.mxu0 %v2416
    %3878 = vmatpush1.bf16.msra.mxu0 %v2415
    %3879 = vmatprep.subr.bf16.mxu0 %v2424
    %3880 = vmatpush1.bf16.msra.mxu0 %v2423
    %3881 = vmatprep.subr.bf16.mxu0 %v2432
    %3882 = vmatpush1.bf16.msra.mxu0 %v2431
    %3883 = vmatprep.subr.bf16.mxu0 %v2440
    %3884 = vmatpush1.bf16.msra.mxu0 %v2439
    %3885 = vmatprep.subr.bf16.mxu0 %v2448
    %3886 = vmatpush1.bf16.msra.mxu0 %v2447
    %3887 = vmatprep.subr.bf16.mxu0 %v2456
    %3888 = vmatpush1.bf16.msra.mxu0 %v2455
    %3889 = vmatprep.subr.bf16.mxu0 %v2464
    %3890 = vmatpush1.bf16.msra.mxu0 %v2463
    %3891 = vmatprep.subr.bf16.mxu0 %v2472
    %3892 = vmatpush1.bf16.msra.mxu0 %v2471
    %3893 = vmatprep.mubr.bf16.mxu0 %v794
    %3894 = vmatmul.mubr.bf16.gmra.mrb[0].mxu0 %v793
    %v3895 = vpop.f32.mrb[0].mxu0
    %v3896 = vadd.f32 %v768, %v3895
    %v3897 = vpop.f32.mrb[0].mxu0
    %v3898 = vadd.f32 %v772, %v3897
    %v3899 = vpop.f32.mrb[0].mxu0
    %v3900 = vpop.f32.mrb[0].mxu0
    %3901 = vdwg.mxu0
    %3902 = vmatprep.subr.bf16.mxu0 %v2480
    %3903 = vmatpush1.bf16.msra.mxu0 %v2479
    %3904 = vmatprep.subr.bf16.mxu0 %v2488
    %3905 = vmatpush1.bf16.msra.mxu0 %v2487
    %3906 = vmatprep.subr.bf16.mxu0 %v2496
    %3907 = vmatpush1.bf16.msra.mxu0 %v2495
    %3908 = vmatprep.subr.bf16.mxu0 %v2504
    %3909 = vmatpush1.bf16.msra.mxu0 %v2503
    %3910 = vmatprep.subr.bf16.mxu0 %v2512
    %3911 = vmatpush1.bf16.msra.mxu0 %v2511
    %3912 = vmatprep.subr.bf16.mxu0 %v2520
    %3913 = vmatpush1.bf16.msra.mxu0 %v2519
    %3914 = vmatprep.subr.bf16.mxu0 %v2528
    %3915 = vmatpush1.bf16.msra.mxu0 %v2527
    %3916 = vmatprep.subr.bf16.mxu0 %v2536
    %3917 = vmatpush1.bf16.msra.mxu0 %v2535
    %3918 = vmatprep.subr.bf16.mxu0 %v2544
    %3919 = vmatpush1.bf16.msra.mxu0 %v2543
    %3920 = vmatprep.subr.bf16.mxu0 %v2552
    %3921 = vmatpush1.bf16.msra.mxu0 %v2551
    %3922 = vmatprep.subr.bf16.mxu0 %v2560
    %3923 = vmatpush1.bf16.msra.mxu0 %v2559
    %3924 = vmatprep.subr.bf16.mxu0 %v2568
    %3925 = vmatpush1.bf16.msra.mxu0 %v2567
    %3926 = vmatprep.subr.bf16.mxu0 %v2576
    %3927 = vmatpush1.bf16.msra.mxu0 %v2575
    %3928 = vmatprep.subr.bf16.mxu0 %v2584
    %3929 = vmatpush1.bf16.msra.mxu0 %v2583
    %3930 = vmatprep.subr.bf16.mxu0 %v2592
    %3931 = vmatpush1.bf16.msra.mxu0 %v2591
    %3932 = vmatprep.subr.bf16.mxu0 %v2600
    %3933 = vmatpush1.bf16.msra.mxu0 %v2599
    %3934 = vmatprep.mubr.bf16.mxu0 %v796
    %3935 = vmatmul.mubr.bf16.gmra.mrb[0].mxu0 %v795
    %v3936 = vpop.f32.mrb[0].mxu0
    %v3937 = vadd.f32 %v3896, %v3936
    %v3938 = vpop.f32.mrb[0].mxu0
    %v3939 = vadd.f32 %v3898, %v3938
    %v3940 = vpop.f32.mrb[0].mxu0
    %v3941 = vpop.f32.mrb[0].mxu0
    %3942 = vdwg.mxu0
    %3943 = vmatprep.subr.bf16.mxu0 %v2608
    %3944 = vmatpush1.bf16.msra.mxu0 %v2607
    %3945 = vmatprep.subr.bf16.mxu0 %v2616
    %3946 = vmatpush1.bf16.msra.mxu0 %v2615
    %3947 = vmatprep.subr.bf16.mxu0 %v2624
    %3948 = vmatpush1.bf16.msra.mxu0 %v2623
    %3949 = vmatprep.subr.bf16.mxu0 %v2632
    %3950 = vmatpush1.bf16.msra.mxu0 %v2631
    %3951 = vmatprep.subr.bf16.mxu0 %v2640
    %3952 = vmatpush1.bf16.msra.mxu0 %v2639
    %3953 = vmatprep.subr.bf16.mxu0 %v2648
    %3954 = vmatpush1.bf16.msra.mxu0 %v2647
    %3955 = vmatprep.subr.bf16.mxu0 %v2656
    %3956 = vmatpush1.bf16.msra.mxu0 %v2655
    %3957 = vmatprep.subr.bf16.mxu0 %v2664
    %3958 = vmatpush1.bf16.msra.mxu0 %v2663
    %3959 = vmatprep.subr.bf16.mxu0 %v2672
    %3960 = vmatpush1.bf16.msra.mxu0 %v2671
    %3961 = vmatprep.subr.bf16.mxu0 %v2680
    %3962 = vmatpush1.bf16.msra.mxu0 %v2679
    %3963 = vmatprep.subr.bf16.mxu0 %v2688
    %3964 = vmatpush1.bf16.msra.mxu0 %v2687
    %3965 = vmatprep.subr.bf16.mxu0 %v2696
    %3966 = vmatpush1.bf16.msra.mxu0 %v2695
    %3967 = vmatprep.subr.bf16.mxu0 %v2704
    %3968 = vmatpush1.bf16.msra.mxu0 %v2703
    %3969 = vmatprep.subr.bf16.mxu0 %v2712
    %3970 = vmatpush1.bf16.msra.mxu0 %v2711
    %3971 = vmatprep.subr.bf16.mxu0 %v2720
    %3972 = vmatpush1.bf16.msra.mxu0 %v2719
    %3973 = vmatprep.subr.bf16.mxu0 %v2728
    %3974 = vmatpush1.bf16.msra.mxu0 %v2727
    %3975 = vmatprep.mubr.bf16.mxu0 %v798
    %3976 = vmatmul.mubr.bf16.gmra.mrb[0].mxu0 %v797
    %v3977 = vpop.f32.mrb[0].mxu0
    %v3978 = vadd.f32 %v3937, %v3977
    %v3979 = vpop.f32.mrb[0].mxu0
    %v3980 = vadd.f32 %v3939, %v3979
    %v3981 = vpop.f32.mrb[0].mxu0
    %v3982 = vpop.f32.mrb[0].mxu0
    %3983 = vdwg.mxu0
    %3984 = vmatprep.subr.bf16.mxu0 %v2736
    %3985 = vmatpush1.bf16.msra.mxu0 %v2735
    %3986 = vmatprep.subr.bf16.mxu0 %v2744
    %3987 = vmatpush1.bf16.msra.mxu0 %v2743
    %3988 = vmatprep.subr.bf16.mxu0 %v2752
    %3989 = vmatpush1.bf16.msra.mxu0 %v2751
    %3990 = vmatprep.subr.bf16.mxu0 %v2760
    %3991 = vmatpush1.bf16.msra.mxu0 %v2759
    %3992 = vmatprep.subr.bf16.mxu0 %v2768
    %3993 = vmatpush1.bf16.msra.mxu0 %v2767
    %3994 = vmatprep.subr.bf16.mxu0 %v2776
    %3995 = vmatpush1.bf16.msra.mxu0 %v2775
    %3996 = vmatprep.subr.bf16.mxu0 %v2784
    %3997 = vmatpush1.bf16.msra.mxu0 %v2783
    %3998 = vmatprep.subr.bf16.mxu0 %v2792
    %3999 = vmatpush1.bf16.msra.mxu0 %v2791
    %4000 = vmatprep.subr.bf16.mxu0 %v2800
    %4001 = vmatpush1.bf16.msra.mxu0 %v2799
    %4002 = vmatprep.subr.bf16.mxu0 %v2808
    %4003 = vmatpush1.bf16.msra.mxu0 %v2807
    %4004 = vmatprep.subr.bf16.mxu0 %v2816
    %4005 = vmatpush1.bf16.msra.mxu0 %v2815
    %4006 = vmatprep.subr.bf16.mxu0 %v2824
    %4007 = vmatpush1.bf16.msra.mxu0 %v2823
    %4008 = vmatprep.subr.bf16.mxu0 %v2832
    %4009 = vmatpush1.bf16.msra.mxu0 %v2831
    %4010 = vmatprep.subr.bf16.mxu0 %v2840
    %4011 = vmatpush1.bf16.msra.mxu0 %v2839
    %4012 = vmatprep.subr.bf16.mxu0 %v2848
    %4013 = vmatpush1.bf16.msra.mxu0 %v2847
    %4014 = vmatprep.subr.bf16.mxu0 %v2856
    %4015 = vmatpush1.bf16.msra.mxu0 %v2855
    %4016 = vmatprep.mubr.bf16.mxu0 %v800
    %4017 = vmatmul.mubr.bf16.gmra.mrb[0].mxu0 %v799
    %v4018 = vpop.f32.mrb[0].mxu0
    %v4019 = vadd.f32 %v3978, %v4018
    %v4020 = vpop.f32.mrb[0].mxu0
    %v4021 = vadd.f32 %v3980, %v4020
    %v4022 = vpop.f32.mrb[0].mxu0
    %v4023 = vpop.f32.mrb[0].mxu0
    %4024 = vdwg.mxu0
    %vm4025 = vcmp.gt.f32.partialorder %v3527, 0.0
    %vm4026 = vcmp.gt.f32.partialorder %v3529, 0.0
    %vm4027 = vcmp.gt.f32.partialorder %v3691, 0.0
    %vm4028 = vcmp.gt.f32.partialorder %v3693, 0.0
    %vm4029 = vcmp.gt.f32.partialorder %v3855, 0.0
    %vm4030 = vcmp.gt.f32.partialorder %v3857, 0.0
    %vm4031 = vcmp.gt.f32.partialorder %v4019, 0.0
    %vm4032 = vcmp.gt.f32.partialorder %v4021, 0.0
    %v4033 = vmul.f32 %v3527, 0.2
    %v4034 = vmul.f32 %v3529, 0.2
    %v4035 = vmul.f32 %v3691, 0.2
    %v4036 = vmul.f32 %v3693, 0.2
    %v4037 = vmul.f32 %v3855, 0.2
    %v4038 = vmul.f32 %v3857, 0.2
    %v4039 = vmul.f32 %v4019, 0.2
    %v4040 = vmul.f32 %v4021, 0.2
    %v4041 = vsel %vm4025, %v3527, %v4033
    %v4042 = vsel %vm4026, %v3529, %v4034
    %v4043 = vsel %vm4027, %v3691, %v4035
    %v4044 = vsel %vm4028, %v3693, %v4036
    %v4045 = vsel %vm4029, %v3855, %v4037
    %v4046 = vsel %vm4030, %v3857, %v4038
    %v4047 = vsel %vm4031, %v4019, %v4039
    %v4048 = vsel %vm4032, %v4021, %v4040
    %v4049 = vld [vmem:[#allocation6] sm:$0xff]
    %v4051 = vlaneseq
    %v4052 = vshrl.u32 %v4051, 7
    %v4053 = vsub.s32 0, %v4052
    %v4054 = vrot.slane %v4049, %v4053
    %v4055 = vlaneseq
    %v4056 = vshrl.u32 %v4055, 7
    %v4057 = vsub.s32 1, %v4056
    %v4058 = vrot.slane %v4049, %v4057
    %v4059 = vlaneseq
    %v4060 = vshrl.u32 %v4059, 7
    %v4061 = vsub.s32 2, %v4060
    %v4062 = vrot.slane %v4049, %v4061
    %v4063 = vlaneseq
    %v4064 = vshrl.u32 %v4063, 7
    %v4065 = vsub.s32 3, %v4064
    %v4066 = vrot.slane %v4049, %v4065
    %v4067 = vlaneseq
    %v4068 = vshrl.u32 %v4067, 7
    %v4069 = vsub.s32 4, %v4068
    %v4070 = vrot.slane %v4049, %v4069
    %v4071 = vlaneseq
    %v4072 = vshrl.u32 %v4071, 7
    %v4073 = vsub.s32 5, %v4072
    %v4074 = vrot.slane %v4049, %v4073
    %v4075 = vlaneseq
    %v4076 = vshrl.u32 %v4075, 7
    %v4077 = vsub.s32 6, %v4076
    %v4078 = vrot.slane %v4049, %v4077
    %v4079 = vlaneseq
    %v4080 = vshrl.u32 %v4079, 7
    %v4081 = vsub.s32 7, %v4080
    %v4082 = vrot.slane %v4049, %v4081
    %v4091 = vadd.f32 %v4041, %v4054
    %v4092 = vadd.f32 %v4042, %v4058
    %v4093 = vadd.f32 %v4043, %v4062
    %v4094 = vadd.f32 %v4044, %v4066
    %v4095 = vadd.f32 %v4045, %v4070
    %v4096 = vadd.f32 %v4046, %v4074
    %v4097 = vadd.f32 %v4047, %v4078
    %v4098 = vadd.f32 %v4048, %v4082
    %v4099 = vpack.c.bf16 %v4091, %v4091
    %v4100 = vpack.c.bf16 %v4092, %v4092
    %v4101 = vpack.c.bf16 %v4093, %v4093
    %v4102 = vpack.c.bf16 %v4094, %v4094
    %v4103 = vpack.c.bf16 %v4095, %v4095
    %v4104 = vpack.c.bf16 %v4096, %v4096
    %v4105 = vpack.c.bf16 %v4097, %v4097
    %v4106 = vpack.c.bf16 %v4098, %v4098
    %v4107 = vld [vmem:[#allocation7] sm:$0xff]
    %v4108 = vld [vmem:[#allocation7 + $0x8] sm:$0xff]
    %v4109 = vld [vmem:[#allocation7 + $0x10] sm:$0xff]
    %v4110 = vld [vmem:[#allocation7 + $0x18] sm:$0xff]
    %v4111 = vld [vmem:[#allocation7 + $0x20] sm:$0xff]
    %v4112 = vld [vmem:[#allocation7 + $0x28] sm:$0xff]
    %v4113 = vld [vmem:[#allocation7 + $0x30] sm:$0xff]
    %v4114 = vld [vmem:[#allocation7 + $0x38] sm:$0xff]
    %v4115 = vld [vmem:[#allocation7 + $0x40] sm:$0xff]
    %v4116 = vld [vmem:[#allocation7 + $0x48] sm:$0xff]
    %v4117 = vld [vmem:[#allocation7 + $0x50] sm:$0xff]
    %v4118 = vld [vmem:[#allocation7 + $0x58] sm:$0xff]
    %v4119 = vld [vmem:[#allocation7 + $0x60] sm:$0xff]
    %v4120 = vld [vmem:[#allocation7 + $0x68] sm:$0xff]
    %v4121 = vld [vmem:[#allocation7 + $0x70] sm:$0xff]
    %v4122 = vld [vmem:[#allocation7 + $0x78] sm:$0xff]
    %v4123 = vld [vmem:[#allocation7 + $0x80] sm:$0xff]
    %v4124 = vld [vmem:[#allocation7 + $0x88] sm:$0xff]
    %v4125 = vld [vmem:[#allocation7 + $0x90] sm:$0xff]
    %v4126 = vld [vmem:[#allocation7 + $0x98] sm:$0xff]
    %v4127 = vld [vmem:[#allocation7 + $0xa0] sm:$0xff]
    %v4128 = vld [vmem:[#allocation7 + $0xa8] sm:$0xff]
    %v4129 = vld [vmem:[#allocation7 + $0xb0] sm:$0xff]
    %v4130 = vld [vmem:[#allocation7 + $0xb8] sm:$0xff]
    %v4131 = vld [vmem:[#allocation7 + $0xc0] sm:$0xff]
    %v4132 = vld [vmem:[#allocation7 + $0xc8] sm:$0xff]
    %v4133 = vld [vmem:[#allocation7 + $0xd0] sm:$0xff]
    %v4134 = vld [vmem:[#allocation7 + $0xd8] sm:$0xff]
    %v4135 = vld [vmem:[#allocation7 + $0xe0] sm:$0xff]
    %v4136 = vld [vmem:[#allocation7 + $0xe8] sm:$0xff]
    %v4137 = vld [vmem:[#allocation7 + $0xf0] sm:$0xff]
    %v4138 = vld [vmem:[#allocation7 + $0xf8] sm:$0xff]
    %v4139 = vld [vmem:[#allocation7 + $0x100] sm:$0xff]
    %v4140 = vld [vmem:[#allocation7 + $0x108] sm:$0xff]
    %v4141 = vld [vmem:[#allocation7 + $0x110] sm:$0xff]
    %v4142 = vld [vmem:[#allocation7 + $0x118] sm:$0xff]
    %v4143 = vld [vmem:[#allocation7 + $0x120] sm:$0xff]
    %v4144 = vld [vmem:[#allocation7 + $0x128] sm:$0xff]
    %v4145 = vld [vmem:[#allocation7 + $0x130] sm:$0xff]
    %v4146 = vld [vmem:[#allocation7 + $0x138] sm:$0xff]
    %v4147 = vld [vmem:[#allocation7 + $0x140] sm:$0xff]
    %v4148 = vld [vmem:[#allocation7 + $0x148] sm:$0xff]
    %v4149 = vld [vmem:[#allocation7 + $0x150] sm:$0xff]
    %v4150 = vld [vmem:[#allocation7 + $0x158] sm:$0xff]
    %v4151 = vld [vmem:[#allocation7 + $0x160] sm:$0xff]
    %v4152 = vld [vmem:[#allocation7 + $0x168] sm:$0xff]
    %v4153 = vld [vmem:[#allocation7 + $0x170] sm:$0xff]
    %v4154 = vld [vmem:[#allocation7 + $0x178] sm:$0xff]
    %v4155 = vld [vmem:[#allocation7 + $0x180] sm:$0xff]
    %v4156 = vld [vmem:[#allocation7 + $0x188] sm:$0xff]
    %v4157 = vld [vmem:[#allocation7 + $0x190] sm:$0xff]
    %v4158 = vld [vmem:[#allocation7 + $0x198] sm:$0xff]
    %v4159 = vld [vmem:[#allocation7 + $0x1a0] sm:$0xff]
    %v4160 = vld [vmem:[#allocation7 + $0x1a8] sm:$0xff]
    %v4161 = vld [vmem:[#allocation7 + $0x1b0] sm:$0xff]
    %v4162 = vld [vmem:[#allocation7 + $0x1b8] sm:$0xff]
    %v4163 = vld [vmem:[#allocation7 + $0x1c0] sm:$0xff]
    %v4164 = vld [vmem:[#allocation7 + $0x1c8] sm:$0xff]
    %v4165 = vld [vmem:[#allocation7 + $0x1d0] sm:$0xff]
    %v4166 = vld [vmem:[#allocation7 + $0x1d8] sm:$0xff]
    %v4167 = vld [vmem:[#allocation7 + $0x1e0] sm:$0xff]
    %v4168 = vld [vmem:[#allocation7 + $0x1e8] sm:$0xff]
    %v4169 = vld [vmem:[#allocation7 + $0x1f0] sm:$0xff]
    %v4170 = vld [vmem:[#allocation7 + $0x1f8] sm:$0xff]
    %v4171 = vld [vmem:[#allocation7 + $0x200] sm:$0xff]
    %v4172 = vld [vmem:[#allocation7 + $0x208] sm:$0xff]
    %v4173 = vld [vmem:[#allocation7 + $0x210] sm:$0xff]
    %v4174 = vld [vmem:[#allocation7 + $0x218] sm:$0xff]
    %v4175 = vld [vmem:[#allocation7 + $0x220] sm:$0xff]
    %v4176 = vld [vmem:[#allocation7 + $0x228] sm:$0xff]
    %v4177 = vld [vmem:[#allocation7 + $0x230] sm:$0xff]
    %v4178 = vld [vmem:[#allocation7 + $0x238] sm:$0xff]
    %v4179 = vld [vmem:[#allocation7 + $0x240] sm:$0xff]
    %v4180 = vld [vmem:[#allocation7 + $0x248] sm:$0xff]
    %v4181 = vld [vmem:[#allocation7 + $0x250] sm:$0xff]
    %v4182 = vld [vmem:[#allocation7 + $0x258] sm:$0xff]
    %v4183 = vld [vmem:[#allocation7 + $0x260] sm:$0xff]
    %v4184 = vld [vmem:[#allocation7 + $0x268] sm:$0xff]
    %v4185 = vld [vmem:[#allocation7 + $0x270] sm:$0xff]
    %v4186 = vld [vmem:[#allocation7 + $0x278] sm:$0xff]
    %v4187 = vld [vmem:[#allocation7 + $0x280] sm:$0xff]
    %v4188 = vld [vmem:[#allocation7 + $0x288] sm:$0xff]
    %v4189 = vld [vmem:[#allocation7 + $0x290] sm:$0xff]
    %v4190 = vld [vmem:[#allocation7 + $0x298] sm:$0xff]
    %v4191 = vld [vmem:[#allocation7 + $0x2a0] sm:$0xff]
    %v4192 = vld [vmem:[#allocation7 + $0x2a8] sm:$0xff]
    %v4193 = vld [vmem:[#allocation7 + $0x2b0] sm:$0xff]
    %v4194 = vld [vmem:[#allocation7 + $0x2b8] sm:$0xff]
    %v4195 = vld [vmem:[#allocation7 + $0x2c0] sm:$0xff]
    %v4196 = vld [vmem:[#allocation7 + $0x2c8] sm:$0xff]
    %v4197 = vld [vmem:[#allocation7 + $0x2d0] sm:$0xff]
    %v4198 = vld [vmem:[#allocation7 + $0x2d8] sm:$0xff]
    %v4199 = vld [vmem:[#allocation7 + $0x2e0] sm:$0xff]
    %v4200 = vld [vmem:[#allocation7 + $0x2e8] sm:$0xff]
    %v4201 = vld [vmem:[#allocation7 + $0x2f0] sm:$0xff]
    %v4202 = vld [vmem:[#allocation7 + $0x2f8] sm:$0xff]
    %v4203 = vld [vmem:[#allocation7 + $0x300] sm:$0xff]
    %v4204 = vld [vmem:[#allocation7 + $0x308] sm:$0xff]
    %v4205 = vld [vmem:[#allocation7 + $0x310] sm:$0xff]
    %v4206 = vld [vmem:[#allocation7 + $0x318] sm:$0xff]
    %v4207 = vld [vmem:[#allocation7 + $0x320] sm:$0xff]
    %v4208 = vld [vmem:[#allocation7 + $0x328] sm:$0xff]
    %v4209 = vld [vmem:[#allocation7 + $0x330] sm:$0xff]
    %v4210 = vld [vmem:[#allocation7 + $0x338] sm:$0xff]
    %v4211 = vld [vmem:[#allocation7 + $0x340] sm:$0xff]
    %v4212 = vld [vmem:[#allocation7 + $0x348] sm:$0xff]
    %v4213 = vld [vmem:[#allocation7 + $0x350] sm:$0xff]
    %v4214 = vld [vmem:[#allocation7 + $0x358] sm:$0xff]
    %v4215 = vld [vmem:[#allocation7 + $0x360] sm:$0xff]
    %v4216 = vld [vmem:[#allocation7 + $0x368] sm:$0xff]
    %v4217 = vld [vmem:[#allocation7 + $0x370] sm:$0xff]
    %v4218 = vld [vmem:[#allocation7 + $0x378] sm:$0xff]
    %v4219 = vld [vmem:[#allocation7 + $0x380] sm:$0xff]
    %v4220 = vld [vmem:[#allocation7 + $0x388] sm:$0xff]
    %v4221 = vld [vmem:[#allocation7 + $0x390] sm:$0xff]
    %v4222 = vld [vmem:[#allocation7 + $0x398] sm:$0xff]
    %v4223 = vld [vmem:[#allocation7 + $0x3a0] sm:$0xff]
    %v4224 = vld [vmem:[#allocation7 + $0x3a8] sm:$0xff]
    %v4225 = vld [vmem:[#allocation7 + $0x3b0] sm:$0xff]
    %v4226 = vld [vmem:[#allocation7 + $0x3b8] sm:$0xff]
    %v4227 = vld [vmem:[#allocation7 + $0x3c0] sm:$0xff]
    %v4228 = vld [vmem:[#allocation7 + $0x3c8] sm:$0xff]
    %v4229 = vld [vmem:[#allocation7 + $0x3d0] sm:$0xff]
    %v4230 = vld [vmem:[#allocation7 + $0x3d8] sm:$0xff]
    %v4231 = vld [vmem:[#allocation7 + $0x3e0] sm:$0xff]
    %v4232 = vld [vmem:[#allocation7 + $0x3e8] sm:$0xff]
    %v4233 = vld [vmem:[#allocation7 + $0x3f0] sm:$0xff]
    %v4234 = vld [vmem:[#allocation7 + $0x3f8] sm:$0xff]
    %v4235 = vld [vmem:[#allocation7 + $0x400] sm:$0xff]
    %v4236 = vld [vmem:[#allocation7 + $0x408] sm:$0xff]
    %v4237 = vld [vmem:[#allocation7 + $0x410] sm:$0xff]
    %v4238 = vld [vmem:[#allocation7 + $0x418] sm:$0xff]
    %v4239 = vld [vmem:[#allocation7 + $0x420] sm:$0xff]
    %v4240 = vld [vmem:[#allocation7 + $0x428] sm:$0xff]
    %v4241 = vld [vmem:[#allocation7 + $0x430] sm:$0xff]
    %v4242 = vld [vmem:[#allocation7 + $0x438] sm:$0xff]
    %v4243 = vld [vmem:[#allocation7 + $0x440] sm:$0xff]
    %v4244 = vld [vmem:[#allocation7 + $0x448] sm:$0xff]
    %v4245 = vld [vmem:[#allocation7 + $0x450] sm:$0xff]
    %v4246 = vld [vmem:[#allocation7 + $0x458] sm:$0xff]
    %v4247 = vld [vmem:[#allocation7 + $0x460] sm:$0xff]
    %v4248 = vld [vmem:[#allocation7 + $0x468] sm:$0xff]
    %v4249 = vld [vmem:[#allocation7 + $0x470] sm:$0xff]
    %v4250 = vld [vmem:[#allocation7 + $0x478] sm:$0xff]
    %v4251 = vld [vmem:[#allocation7 + $0x480] sm:$0xff]
    %v4252 = vld [vmem:[#allocation7 + $0x488] sm:$0xff]
    %v4253 = vld [vmem:[#allocation7 + $0x490] sm:$0xff]
    %v4254 = vld [vmem:[#allocation7 + $0x498] sm:$0xff]
    %v4255 = vld [vmem:[#allocation7 + $0x4a0] sm:$0xff]
    %v4256 = vld [vmem:[#allocation7 + $0x4a8] sm:$0xff]
    %v4257 = vld [vmem:[#allocation7 + $0x4b0] sm:$0xff]
    %v4258 = vld [vmem:[#allocation7 + $0x4b8] sm:$0xff]
    %v4259 = vld [vmem:[#allocation7 + $0x4c0] sm:$0xff]
    %v4260 = vld [vmem:[#allocation7 + $0x4c8] sm:$0xff]
    %v4261 = vld [vmem:[#allocation7 + $0x4d0] sm:$0xff]
    %v4262 = vld [vmem:[#allocation7 + $0x4d8] sm:$0xff]
    %v4263 = vld [vmem:[#allocation7 + $0x4e0] sm:$0xff]
    %v4264 = vld [vmem:[#allocation7 + $0x4e8] sm:$0xff]
    %v4265 = vld [vmem:[#allocation7 + $0x4f0] sm:$0xff]
    %v4266 = vld [vmem:[#allocation7 + $0x4f8] sm:$0xff]
    %v4267 = vld [vmem:[#allocation7 + $0x500] sm:$0xff]
    %v4268 = vld [vmem:[#allocation7 + $0x508] sm:$0xff]
    %v4269 = vld [vmem:[#allocation7 + $0x510] sm:$0xff]
    %v4270 = vld [vmem:[#allocation7 + $0x518] sm:$0xff]
    %v4271 = vld [vmem:[#allocation7 + $0x520] sm:$0xff]
    %v4272 = vld [vmem:[#allocation7 + $0x528] sm:$0xff]
    %v4273 = vld [vmem:[#allocation7 + $0x530] sm:$0xff]
    %v4274 = vld [vmem:[#allocation7 + $0x538] sm:$0xff]
    %v4275 = vld [vmem:[#allocation7 + $0x540] sm:$0xff]
    %v4276 = vld [vmem:[#allocation7 + $0x548] sm:$0xff]
    %v4277 = vld [vmem:[#allocation7 + $0x550] sm:$0xff]
    %v4278 = vld [vmem:[#allocation7 + $0x558] sm:$0xff]
    %v4279 = vld [vmem:[#allocation7 + $0x560] sm:$0xff]
    %v4280 = vld [vmem:[#allocation7 + $0x568] sm:$0xff]
    %v4281 = vld [vmem:[#allocation7 + $0x570] sm:$0xff]
    %v4282 = vld [vmem:[#allocation7 + $0x578] sm:$0xff]
    %v4283 = vld [vmem:[#allocation7 + $0x580] sm:$0xff]
    %v4284 = vld [vmem:[#allocation7 + $0x588] sm:$0xff]
    %v4285 = vld [vmem:[#allocation7 + $0x590] sm:$0xff]
    %v4286 = vld [vmem:[#allocation7 + $0x598] sm:$0xff]
    %v4287 = vld [vmem:[#allocation7 + $0x5a0] sm:$0xff]
    %v4288 = vld [vmem:[#allocation7 + $0x5a8] sm:$0xff]
    %v4289 = vld [vmem:[#allocation7 + $0x5b0] sm:$0xff]
    %v4290 = vld [vmem:[#allocation7 + $0x5b8] sm:$0xff]
    %v4291 = vld [vmem:[#allocation7 + $0x5c0] sm:$0xff]
    %v4292 = vld [vmem:[#allocation7 + $0x5c8] sm:$0xff]
    %v4293 = vld [vmem:[#allocation7 + $0x5d0] sm:$0xff]
    %v4294 = vld [vmem:[#allocation7 + $0x5d8] sm:$0xff]
    %v4295 = vld [vmem:[#allocation7 + $0x5e0] sm:$0xff]
    %v4296 = vld [vmem:[#allocation7 + $0x5e8] sm:$0xff]
    %v4297 = vld [vmem:[#allocation7 + $0x5f0] sm:$0xff]
    %v4298 = vld [vmem:[#allocation7 + $0x5f8] sm:$0xff]
    %v4299 = vld [vmem:[#allocation7 + $0x600] sm:$0xff]
    %v4300 = vld [vmem:[#allocation7 + $0x608] sm:$0xff]
    %v4301 = vld [vmem:[#allocation7 + $0x610] sm:$0xff]
    %v4302 = vld [vmem:[#allocation7 + $0x618] sm:$0xff]
    %v4303 = vld [vmem:[#allocation7 + $0x620] sm:$0xff]
    %v4304 = vld [vmem:[#allocation7 + $0x628] sm:$0xff]
    %v4305 = vld [vmem:[#allocation7 + $0x630] sm:$0xff]
    %v4306 = vld [vmem:[#allocation7 + $0x638] sm:$0xff]
    %v4307 = vld [vmem:[#allocation7 + $0x640] sm:$0xff]
    %v4308 = vld [vmem:[#allocation7 + $0x648] sm:$0xff]
    %v4309 = vld [vmem:[#allocation7 + $0x650] sm:$0xff]
    %v4310 = vld [vmem:[#allocation7 + $0x658] sm:$0xff]
    %v4311 = vld [vmem:[#allocation7 + $0x660] sm:$0xff]
    %v4312 = vld [vmem:[#allocation7 + $0x668] sm:$0xff]
    %v4313 = vld [vmem:[#allocation7 + $0x670] sm:$0xff]
    %v4314 = vld [vmem:[#allocation7 + $0x678] sm:$0xff]
    %v4315 = vld [vmem:[#allocation7 + $0x680] sm:$0xff]
    %v4316 = vld [vmem:[#allocation7 + $0x688] sm:$0xff]
    %v4317 = vld [vmem:[#allocation7 + $0x690] sm:$0xff]
    %v4318 = vld [vmem:[#allocation7 + $0x698] sm:$0xff]
    %v4319 = vld [vmem:[#allocation7 + $0x6a0] sm:$0xff]
    %v4320 = vld [vmem:[#allocation7 + $0x6a8] sm:$0xff]
    %v4321 = vld [vmem:[#allocation7 + $0x6b0] sm:$0xff]
    %v4322 = vld [vmem:[#allocation7 + $0x6b8] sm:$0xff]
    %v4323 = vld [vmem:[#allocation7 + $0x6c0] sm:$0xff]
    %v4324 = vld [vmem:[#allocation7 + $0x6c8] sm:$0xff]
    %v4325 = vld [vmem:[#allocation7 + $0x6d0] sm:$0xff]
    %v4326 = vld [vmem:[#allocation7 + $0x6d8] sm:$0xff]
    %v4327 = vld [vmem:[#allocation7 + $0x6e0] sm:$0xff]
    %v4328 = vld [vmem:[#allocation7 + $0x6e8] sm:$0xff]
    %v4329 = vld [vmem:[#allocation7 + $0x6f0] sm:$0xff]
    %v4330 = vld [vmem:[#allocation7 + $0x6f8] sm:$0xff]
    %v4331 = vld [vmem:[#allocation7 + $0x700] sm:$0xff]
    %v4332 = vld [vmem:[#allocation7 + $0x708] sm:$0xff]
    %v4333 = vld [vmem:[#allocation7 + $0x710] sm:$0xff]
    %v4334 = vld [vmem:[#allocation7 + $0x718] sm:$0xff]
    %v4335 = vld [vmem:[#allocation7 + $0x720] sm:$0xff]
    %v4336 = vld [vmem:[#allocation7 + $0x728] sm:$0xff]
    %v4337 = vld [vmem:[#allocation7 + $0x730] sm:$0xff]
    %v4338 = vld [vmem:[#allocation7 + $0x738] sm:$0xff]
    %v4339 = vld [vmem:[#allocation7 + $0x740] sm:$0xff]
    %v4340 = vld [vmem:[#allocation7 + $0x748] sm:$0xff]
    %v4341 = vld [vmem:[#allocation7 + $0x750] sm:$0xff]
    %v4342 = vld [vmem:[#allocation7 + $0x758] sm:$0xff]
    %v4343 = vld [vmem:[#allocation7 + $0x760] sm:$0xff]
    %v4344 = vld [vmem:[#allocation7 + $0x768] sm:$0xff]
    %v4345 = vld [vmem:[#allocation7 + $0x770] sm:$0xff]
    %v4346 = vld [vmem:[#allocation7 + $0x778] sm:$0xff]
    %v4347 = vld [vmem:[#allocation7 + $0x780] sm:$0xff]
    %v4348 = vld [vmem:[#allocation7 + $0x788] sm:$0xff]
    %v4349 = vld [vmem:[#allocation7 + $0x790] sm:$0xff]
    %v4350 = vld [vmem:[#allocation7 + $0x798] sm:$0xff]
    %v4351 = vld [vmem:[#allocation7 + $0x7a0] sm:$0xff]
    %v4352 = vld [vmem:[#allocation7 + $0x7a8] sm:$0xff]
    %v4353 = vld [vmem:[#allocation7 + $0x7b0] sm:$0xff]
    %v4354 = vld [vmem:[#allocation7 + $0x7b8] sm:$0xff]
    %v4355 = vld [vmem:[#allocation7 + $0x7c0] sm:$0xff]
    %v4356 = vld [vmem:[#allocation7 + $0x7c8] sm:$0xff]
    %v4357 = vld [vmem:[#allocation7 + $0x7d0] sm:$0xff]
    %v4358 = vld [vmem:[#allocation7 + $0x7d8] sm:$0xff]
    %v4359 = vld [vmem:[#allocation7 + $0x7e0] sm:$0xff]
    %v4360 = vld [vmem:[#allocation7 + $0x7e8] sm:$0xff]
    %v4361 = vld [vmem:[#allocation7 + $0x7f0] sm:$0xff]
    %v4362 = vld [vmem:[#allocation7 + $0x7f8] sm:$0xff]
    %v4363 = vld [vmem:[#allocation9] sm:$0xf]
    %v4365 = vlaneseq
    %v4366 = vshrl.u32 %v4365, 7
    %v4367 = vsub.s32 0, %v4366
    %v4368 = vrot.slane %v4363, %v4367
    %v4369 = vlaneseq
    %v4370 = vshrl.u32 %v4369, 7
    %v4371 = vsub.s32 1, %v4370
    %v4372 = vrot.slane %v4363, %v4371
    %v4373 = vlaneseq
    %v4374 = vshrl.u32 %v4373, 7
    %v4375 = vsub.s32 2, %v4374
    %v4376 = vrot.slane %v4363, %v4375
    %v4377 = vlaneseq
    %v4378 = vshrl.u32 %v4377, 7
    %v4379 = vsub.s32 3, %v4378
    %v4380 = vrot.slane %v4363, %v4379
    %v4641 = vunpack.c.l.b16 %v4107
    %v4642 = vunpack.c.h.b16 %v4107
    %v4643 = vunpack.c.l.b16 %v4108
    %v4644 = vunpack.c.h.b16 %v4108
    %v4645 = vunpack.c.l.b16 %v4109
    %v4646 = vunpack.c.h.b16 %v4109
    %v4647 = vunpack.c.l.b16 %v4110
    %v4648 = vunpack.c.h.b16 %v4110
    %v4649 = vunpack.c.l.b16 %v4111
    %v4650 = vunpack.c.h.b16 %v4111
    %v4651 = vunpack.c.l.b16 %v4112
    %v4652 = vunpack.c.h.b16 %v4112
    %v4653 = vunpack.c.l.b16 %v4113
    %v4654 = vunpack.c.h.b16 %v4113
    %v4655 = vunpack.c.l.b16 %v4114
    %v4656 = vunpack.c.h.b16 %v4114
    %v4657 = vunpack.c.l.b16 %v4115
    %v4658 = vunpack.c.h.b16 %v4115
    %v4659 = vunpack.c.l.b16 %v4116
    %v4660 = vunpack.c.h.b16 %v4116
    %v4661 = vunpack.c.l.b16 %v4117
    %v4662 = vunpack.c.h.b16 %v4117
    %v4663 = vunpack.c.l.b16 %v4118
    %v4664 = vunpack.c.h.b16 %v4118
    %v4665 = vunpack.c.l.b16 %v4119
    %v4666 = vunpack.c.h.b16 %v4119
    %v4667 = vunpack.c.l.b16 %v4120
    %v4668 = vunpack.c.h.b16 %v4120
    %v4669 = vunpack.c.l.b16 %v4121
    %v4670 = vunpack.c.h.b16 %v4121
    %v4671 = vunpack.c.l.b16 %v4122
    %v4672 = vunpack.c.h.b16 %v4122
    %v4673 = vunpack.c.l.b16 %v4123
    %v4674 = vunpack.c.h.b16 %v4123
    %v4675 = vunpack.c.l.b16 %v4124
    %v4676 = vunpack.c.h.b16 %v4124
    %v4677 = vunpack.c.l.b16 %v4125
    %v4678 = vunpack.c.h.b16 %v4125
    %v4679 = vunpack.c.l.b16 %v4126
    %v4680 = vunpack.c.h.b16 %v4126
    %v4681 = vunpack.c.l.b16 %v4127
    %v4682 = vunpack.c.h.b16 %v4127
    %v4683 = vunpack.c.l.b16 %v4128
    %v4684 = vunpack.c.h.b16 %v4128
    %v4685 = vunpack.c.l.b16 %v4129
    %v4686 = vunpack.c.h.b16 %v4129
    %v4687 = vunpack.c.l.b16 %v4130
    %v4688 = vunpack.c.h.b16 %v4130
    %v4689 = vunpack.c.l.b16 %v4131
    %v4690 = vunpack.c.h.b16 %v4131
    %v4691 = vunpack.c.l.b16 %v4132
    %v4692 = vunpack.c.h.b16 %v4132
    %v4693 = vunpack.c.l.b16 %v4133
    %v4694 = vunpack.c.h.b16 %v4133
    %v4695 = vunpack.c.l.b16 %v4134
    %v4696 = vunpack.c.h.b16 %v4134
    %v4697 = vunpack.c.l.b16 %v4135
    %v4698 = vunpack.c.h.b16 %v4135
    %v4699 = vunpack.c.l.b16 %v4136
    %v4700 = vunpack.c.h.b16 %v4136
    %v4701 = vunpack.c.l.b16 %v4137
    %v4702 = vunpack.c.h.b16 %v4137
    %v4703 = vunpack.c.l.b16 %v4138
    %v4704 = vunpack.c.h.b16 %v4138
    %v4705 = vunpack.c.l.b16 %v4139
    %v4706 = vunpack.c.h.b16 %v4139
    %v4707 = vunpack.c.l.b16 %v4140
    %v4708 = vunpack.c.h.b16 %v4140
    %v4709 = vunpack.c.l.b16 %v4141
    %v4710 = vunpack.c.h.b16 %v4141
    %v4711 = vunpack.c.l.b16 %v4142
    %v4712 = vunpack.c.h.b16 %v4142
    %v4713 = vunpack.c.l.b16 %v4143
    %v4714 = vunpack.c.h.b16 %v4143
    %v4715 = vunpack.c.l.b16 %v4144
    %v4716 = vunpack.c.h.b16 %v4144
    %v4717 = vunpack.c.l.b16 %v4145
    %v4718 = vunpack.c.h.b16 %v4145
    %v4719 = vunpack.c.l.b16 %v4146
    %v4720 = vunpack.c.h.b16 %v4146
    %v4721 = vunpack.c.l.b16 %v4147
    %v4722 = vunpack.c.h.b16 %v4147
    %v4723 = vunpack.c.l.b16 %v4148
    %v4724 = vunpack.c.h.b16 %v4148
    %v4725 = vunpack.c.l.b16 %v4149
    %v4726 = vunpack.c.h.b16 %v4149
    %v4727 = vunpack.c.l.b16 %v4150
    %v4728 = vunpack.c.h.b16 %v4150
    %v4729 = vunpack.c.l.b16 %v4151
    %v4730 = vunpack.c.h.b16 %v4151
    %v4731 = vunpack.c.l.b16 %v4152
    %v4732 = vunpack.c.h.b16 %v4152
    %v4733 = vunpack.c.l.b16 %v4153
    %v4734 = vunpack.c.h.b16 %v4153
    %v4735 = vunpack.c.l.b16 %v4154
    %v4736 = vunpack.c.h.b16 %v4154
    %v4737 = vunpack.c.l.b16 %v4155
    %v4738 = vunpack.c.h.b16 %v4155
    %v4739 = vunpack.c.l.b16 %v4156
    %v4740 = vunpack.c.h.b16 %v4156
    %v4741 = vunpack.c.l.b16 %v4157
    %v4742 = vunpack.c.h.b16 %v4157
    %v4743 = vunpack.c.l.b16 %v4158
    %v4744 = vunpack.c.h.b16 %v4158
    %v4745 = vunpack.c.l.b16 %v4159
    %v4746 = vunpack.c.h.b16 %v4159
    %v4747 = vunpack.c.l.b16 %v4160
    %v4748 = vunpack.c.h.b16 %v4160
    %v4749 = vunpack.c.l.b16 %v4161
    %v4750 = vunpack.c.h.b16 %v4161
    %v4751 = vunpack.c.l.b16 %v4162
    %v4752 = vunpack.c.h.b16 %v4162
    %v4753 = vunpack.c.l.b16 %v4163
    %v4754 = vunpack.c.h.b16 %v4163
    %v4755 = vunpack.c.l.b16 %v4164
    %v4756 = vunpack.c.h.b16 %v4164
    %v4757 = vunpack.c.l.b16 %v4165
    %v4758 = vunpack.c.h.b16 %v4165
    %v4759 = vunpack.c.l.b16 %v4166
    %v4760 = vunpack.c.h.b16 %v4166
    %v4761 = vunpack.c.l.b16 %v4167
    %v4762 = vunpack.c.h.b16 %v4167
    %v4763 = vunpack.c.l.b16 %v4168
    %v4764 = vunpack.c.h.b16 %v4168
    %v4765 = vunpack.c.l.b16 %v4169
    %v4766 = vunpack.c.h.b16 %v4169
    %v4767 = vunpack.c.l.b16 %v4170
    %v4768 = vunpack.c.h.b16 %v4170
    %v4769 = vunpack.c.l.b16 %v4171
    %v4770 = vunpack.c.h.b16 %v4171
    %v4771 = vunpack.c.l.b16 %v4172
    %v4772 = vunpack.c.h.b16 %v4172
    %v4773 = vunpack.c.l.b16 %v4173
    %v4774 = vunpack.c.h.b16 %v4173
    %v4775 = vunpack.c.l.b16 %v4174
    %v4776 = vunpack.c.h.b16 %v4174
    %v4777 = vunpack.c.l.b16 %v4175
    %v4778 = vunpack.c.h.b16 %v4175
    %v4779 = vunpack.c.l.b16 %v4176
    %v4780 = vunpack.c.h.b16 %v4176
    %v4781 = vunpack.c.l.b16 %v4177
    %v4782 = vunpack.c.h.b16 %v4177
    %v4783 = vunpack.c.l.b16 %v4178
    %v4784 = vunpack.c.h.b16 %v4178
    %v4785 = vunpack.c.l.b16 %v4179
    %v4786 = vunpack.c.h.b16 %v4179
    %v4787 = vunpack.c.l.b16 %v4180
    %v4788 = vunpack.c.h.b16 %v4180
    %v4789 = vunpack.c.l.b16 %v4181
    %v4790 = vunpack.c.h.b16 %v4181
    %v4791 = vunpack.c.l.b16 %v4182
    %v4792 = vunpack.c.h.b16 %v4182
    %v4793 = vunpack.c.l.b16 %v4183
    %v4794 = vunpack.c.h.b16 %v4183
    %v4795 = vunpack.c.l.b16 %v4184
    %v4796 = vunpack.c.h.b16 %v4184
    %v4797 = vunpack.c.l.b16 %v4185
    %v4798 = vunpack.c.h.b16 %v4185
    %v4799 = vunpack.c.l.b16 %v4186
    %v4800 = vunpack.c.h.b16 %v4186
    %v4801 = vunpack.c.l.b16 %v4187
    %v4802 = vunpack.c.h.b16 %v4187
    %v4803 = vunpack.c.l.b16 %v4188
    %v4804 = vunpack.c.h.b16 %v4188
    %v4805 = vunpack.c.l.b16 %v4189
    %v4806 = vunpack.c.h.b16 %v4189
    %v4807 = vunpack.c.l.b16 %v4190
    %v4808 = vunpack.c.h.b16 %v4190
    %v4809 = vunpack.c.l.b16 %v4191
    %v4810 = vunpack.c.h.b16 %v4191
    %v4811 = vunpack.c.l.b16 %v4192
    %v4812 = vunpack.c.h.b16 %v4192
    %v4813 = vunpack.c.l.b16 %v4193
    %v4814 = vunpack.c.h.b16 %v4193
    %v4815 = vunpack.c.l.b16 %v4194
    %v4816 = vunpack.c.h.b16 %v4194
    %v4817 = vunpack.c.l.b16 %v4195
    %v4818 = vunpack.c.h.b16 %v4195
    %v4819 = vunpack.c.l.b16 %v4196
    %v4820 = vunpack.c.h.b16 %v4196
    %v4821 = vunpack.c.l.b16 %v4197
    %v4822 = vunpack.c.h.b16 %v4197
    %v4823 = vunpack.c.l.b16 %v4198
    %v4824 = vunpack.c.h.b16 %v4198
    %v4825 = vunpack.c.l.b16 %v4199
    %v4826 = vunpack.c.h.b16 %v4199
    %v4827 = vunpack.c.l.b16 %v4200
    %v4828 = vunpack.c.h.b16 %v4200
    %v4829 = vunpack.c.l.b16 %v4201
    %v4830 = vunpack.c.h.b16 %v4201
    %v4831 = vunpack.c.l.b16 %v4202
    %v4832 = vunpack.c.h.b16 %v4202
    %v4833 = vunpack.c.l.b16 %v4203
    %v4834 = vunpack.c.h.b16 %v4203
    %v4835 = vunpack.c.l.b16 %v4204
    %v4836 = vunpack.c.h.b16 %v4204
    %v4837 = vunpack.c.l.b16 %v4205
    %v4838 = vunpack.c.h.b16 %v4205
    %v4839 = vunpack.c.l.b16 %v4206
    %v4840 = vunpack.c.h.b16 %v4206
    %v4841 = vunpack.c.l.b16 %v4207
    %v4842 = vunpack.c.h.b16 %v4207
    %v4843 = vunpack.c.l.b16 %v4208
    %v4844 = vunpack.c.h.b16 %v4208
    %v4845 = vunpack.c.l.b16 %v4209
    %v4846 = vunpack.c.h.b16 %v4209
    %v4847 = vunpack.c.l.b16 %v4210
    %v4848 = vunpack.c.h.b16 %v4210
    %v4849 = vunpack.c.l.b16 %v4211
    %v4850 = vunpack.c.h.b16 %v4211
    %v4851 = vunpack.c.l.b16 %v4212
    %v4852 = vunpack.c.h.b16 %v4212
    %v4853 = vunpack.c.l.b16 %v4213
    %v4854 = vunpack.c.h.b16 %v4213
    %v4855 = vunpack.c.l.b16 %v4214
    %v4856 = vunpack.c.h.b16 %v4214
    %v4857 = vunpack.c.l.b16 %v4215
    %v4858 = vunpack.c.h.b16 %v4215
    %v4859 = vunpack.c.l.b16 %v4216
    %v4860 = vunpack.c.h.b16 %v4216
    %v4861 = vunpack.c.l.b16 %v4217
    %v4862 = vunpack.c.h.b16 %v4217
    %v4863 = vunpack.c.l.b16 %v4218
    %v4864 = vunpack.c.h.b16 %v4218
    %v4865 = vunpack.c.l.b16 %v4219
    %v4866 = vunpack.c.h.b16 %v4219
    %v4867 = vunpack.c.l.b16 %v4220
    %v4868 = vunpack.c.h.b16 %v4220
    %v4869 = vunpack.c.l.b16 %v4221
    %v4870 = vunpack.c.h.b16 %v4221
    %v4871 = vunpack.c.l.b16 %v4222
    %v4872 = vunpack.c.h.b16 %v4222
    %v4873 = vunpack.c.l.b16 %v4223
    %v4874 = vunpack.c.h.b16 %v4223
    %v4875 = vunpack.c.l.b16 %v4224
    %v4876 = vunpack.c.h.b16 %v4224
    %v4877 = vunpack.c.l.b16 %v4225
    %v4878 = vunpack.c.h.b16 %v4225
    %v4879 = vunpack.c.l.b16 %v4226
    %v4880 = vunpack.c.h.b16 %v4226
    %v4881 = vunpack.c.l.b16 %v4227
    %v4882 = vunpack.c.h.b16 %v4227
    %v4883 = vunpack.c.l.b16 %v4228
    %v4884 = vunpack.c.h.b16 %v4228
    %v4885 = vunpack.c.l.b16 %v4229
    %v4886 = vunpack.c.h.b16 %v4229
    %v4887 = vunpack.c.l.b16 %v4230
    %v4888 = vunpack.c.h.b16 %v4230
    %v4889 = vunpack.c.l.b16 %v4231
    %v4890 = vunpack.c.h.b16 %v4231
    %v4891 = vunpack.c.l.b16 %v4232
    %v4892 = vunpack.c.h.b16 %v4232
    %v4893 = vunpack.c.l.b16 %v4233
    %v4894 = vunpack.c.h.b16 %v4233
    %v4895 = vunpack.c.l.b16 %v4234
    %v4896 = vunpack.c.h.b16 %v4234
    %v4897 = vunpack.c.l.b16 %v4235
    %v4898 = vunpack.c.h.b16 %v4235
    %v4899 = vunpack.c.l.b16 %v4236
    %v4900 = vunpack.c.h.b16 %v4236
    %v4901 = vunpack.c.l.b16 %v4237
    %v4902 = vunpack.c.h.b16 %v4237
    %v4903 = vunpack.c.l.b16 %v4238
    %v4904 = vunpack.c.h.b16 %v4238
    %v4905 = vunpack.c.l.b16 %v4239
    %v4906 = vunpack.c.h.b16 %v4239
    %v4907 = vunpack.c.l.b16 %v4240
    %v4908 = vunpack.c.h.b16 %v4240
    %v4909 = vunpack.c.l.b16 %v4241
    %v4910 = vunpack.c.h.b16 %v4241
    %v4911 = vunpack.c.l.b16 %v4242
    %v4912 = vunpack.c.h.b16 %v4242
    %v4913 = vunpack.c.l.b16 %v4243
    %v4914 = vunpack.c.h.b16 %v4243
    %v4915 = vunpack.c.l.b16 %v4244
    %v4916 = vunpack.c.h.b16 %v4244
    %v4917 = vunpack.c.l.b16 %v4245
    %v4918 = vunpack.c.h.b16 %v4245
    %v4919 = vunpack.c.l.b16 %v4246
    %v4920 = vunpack.c.h.b16 %v4246
    %v4921 = vunpack.c.l.b16 %v4247
    %v4922 = vunpack.c.h.b16 %v4247
    %v4923 = vunpack.c.l.b16 %v4248
    %v4924 = vunpack.c.h.b16 %v4248
    %v4925 = vunpack.c.l.b16 %v4249
    %v4926 = vunpack.c.h.b16 %v4249
    %v4927 = vunpack.c.l.b16 %v4250
    %v4928 = vunpack.c.h.b16 %v4250
    %v4929 = vunpack.c.l.b16 %v4251
    %v4930 = vunpack.c.h.b16 %v4251
    %v4931 = vunpack.c.l.b16 %v4252
    %v4932 = vunpack.c.h.b16 %v4252
    %v4933 = vunpack.c.l.b16 %v4253
    %v4934 = vunpack.c.h.b16 %v4253
    %v4935 = vunpack.c.l.b16 %v4254
    %v4936 = vunpack.c.h.b16 %v4254
    %v4937 = vunpack.c.l.b16 %v4255
    %v4938 = vunpack.c.h.b16 %v4255
    %v4939 = vunpack.c.l.b16 %v4256
    %v4940 = vunpack.c.h.b16 %v4256
    %v4941 = vunpack.c.l.b16 %v4257
    %v4942 = vunpack.c.h.b16 %v4257
    %v4943 = vunpack.c.l.b16 %v4258
    %v4944 = vunpack.c.h.b16 %v4258
    %v4945 = vunpack.c.l.b16 %v4259
    %v4946 = vunpack.c.h.b16 %v4259
    %v4947 = vunpack.c.l.b16 %v4260
    %v4948 = vunpack.c.h.b16 %v4260
    %v4949 = vunpack.c.l.b16 %v4261
    %v4950 = vunpack.c.h.b16 %v4261
    %v4951 = vunpack.c.l.b16 %v4262
    %v4952 = vunpack.c.h.b16 %v4262
    %v4953 = vunpack.c.l.b16 %v4263
    %v4954 = vunpack.c.h.b16 %v4263
    %v4955 = vunpack.c.l.b16 %v4264
    %v4956 = vunpack.c.h.b16 %v4264
    %v4957 = vunpack.c.l.b16 %v4265
    %v4958 = vunpack.c.h.b16 %v4265
    %v4959 = vunpack.c.l.b16 %v4266
    %v4960 = vunpack.c.h.b16 %v4266
    %v4961 = vunpack.c.l.b16 %v4267
    %v4962 = vunpack.c.h.b16 %v4267
    %v4963 = vunpack.c.l.b16 %v4268
    %v4964 = vunpack.c.h.b16 %v4268
    %v4965 = vunpack.c.l.b16 %v4269
    %v4966 = vunpack.c.h.b16 %v4269
    %v4967 = vunpack.c.l.b16 %v4270
    %v4968 = vunpack.c.h.b16 %v4270
    %v4969 = vunpack.c.l.b16 %v4271
    %v4970 = vunpack.c.h.b16 %v4271
    %v4971 = vunpack.c.l.b16 %v4272
    %v4972 = vunpack.c.h.b16 %v4272
    %v4973 = vunpack.c.l.b16 %v4273
    %v4974 = vunpack.c.h.b16 %v4273
    %v4975 = vunpack.c.l.b16 %v4274
    %v4976 = vunpack.c.h.b16 %v4274
    %v4977 = vunpack.c.l.b16 %v4275
    %v4978 = vunpack.c.h.b16 %v4275
    %v4979 = vunpack.c.l.b16 %v4276
    %v4980 = vunpack.c.h.b16 %v4276
    %v4981 = vunpack.c.l.b16 %v4277
    %v4982 = vunpack.c.h.b16 %v4277
    %v4983 = vunpack.c.l.b16 %v4278
    %v4984 = vunpack.c.h.b16 %v4278
    %v4985 = vunpack.c.l.b16 %v4279
    %v4986 = vunpack.c.h.b16 %v4279
    %v4987 = vunpack.c.l.b16 %v4280
    %v4988 = vunpack.c.h.b16 %v4280
    %v4989 = vunpack.c.l.b16 %v4281
    %v4990 = vunpack.c.h.b16 %v4281
    %v4991 = vunpack.c.l.b16 %v4282
    %v4992 = vunpack.c.h.b16 %v4282
    %v4993 = vunpack.c.l.b16 %v4283
    %v4994 = vunpack.c.h.b16 %v4283
    %v4995 = vunpack.c.l.b16 %v4284
    %v4996 = vunpack.c.h.b16 %v4284
    %v4997 = vunpack.c.l.b16 %v4285
    %v4998 = vunpack.c.h.b16 %v4285
    %v4999 = vunpack.c.l.b16 %v4286
    %v5000 = vunpack.c.h.b16 %v4286
    %v5001 = vunpack.c.l.b16 %v4287
    %v5002 = vunpack.c.h.b16 %v4287
    %v5003 = vunpack.c.l.b16 %v4288
    %v5004 = vunpack.c.h.b16 %v4288
    %v5005 = vunpack.c.l.b16 %v4289
    %v5006 = vunpack.c.h.b16 %v4289
    %v5007 = vunpack.c.l.b16 %v4290
    %v5008 = vunpack.c.h.b16 %v4290
    %v5009 = vunpack.c.l.b16 %v4291
    %v5010 = vunpack.c.h.b16 %v4291
    %v5011 = vunpack.c.l.b16 %v4292
    %v5012 = vunpack.c.h.b16 %v4292
    %v5013 = vunpack.c.l.b16 %v4293
    %v5014 = vunpack.c.h.b16 %v4293
    %v5015 = vunpack.c.l.b16 %v4294
    %v5016 = vunpack.c.h.b16 %v4294
    %v5017 = vunpack.c.l.b16 %v4295
    %v5018 = vunpack.c.h.b16 %v4295
    %v5019 = vunpack.c.l.b16 %v4296
    %v5020 = vunpack.c.h.b16 %v4296
    %v5021 = vunpack.c.l.b16 %v4297
    %v5022 = vunpack.c.h.b16 %v4297
    %v5023 = vunpack.c.l.b16 %v4298
    %v5024 = vunpack.c.h.b16 %v4298
    %v5025 = vunpack.c.l.b16 %v4299
    %v5026 = vunpack.c.h.b16 %v4299
    %v5027 = vunpack.c.l.b16 %v4300
    %v5028 = vunpack.c.h.b16 %v4300
    %v5029 = vunpack.c.l.b16 %v4301
    %v5030 = vunpack.c.h.b16 %v4301
    %v5031 = vunpack.c.l.b16 %v4302
    %v5032 = vunpack.c.h.b16 %v4302
    %v5033 = vunpack.c.l.b16 %v4303
    %v5034 = vunpack.c.h.b16 %v4303
    %v5035 = vunpack.c.l.b16 %v4304
    %v5036 = vunpack.c.h.b16 %v4304
    %v5037 = vunpack.c.l.b16 %v4305
    %v5038 = vunpack.c.h.b16 %v4305
    %v5039 = vunpack.c.l.b16 %v4306
    %v5040 = vunpack.c.h.b16 %v4306
    %v5041 = vunpack.c.l.b16 %v4307
    %v5042 = vunpack.c.h.b16 %v4307
    %v5043 = vunpack.c.l.b16 %v4308
    %v5044 = vunpack.c.h.b16 %v4308
    %v5045 = vunpack.c.l.b16 %v4309
    %v5046 = vunpack.c.h.b16 %v4309
    %v5047 = vunpack.c.l.b16 %v4310
    %v5048 = vunpack.c.h.b16 %v4310
    %v5049 = vunpack.c.l.b16 %v4311
    %v5050 = vunpack.c.h.b16 %v4311
    %v5051 = vunpack.c.l.b16 %v4312
    %v5052 = vunpack.c.h.b16 %v4312
    %v5053 = vunpack.c.l.b16 %v4313
    %v5054 = vunpack.c.h.b16 %v4313
    %v5055 = vunpack.c.l.b16 %v4314
    %v5056 = vunpack.c.h.b16 %v4314
    %v5057 = vunpack.c.l.b16 %v4315
    %v5058 = vunpack.c.h.b16 %v4315
    %v5059 = vunpack.c.l.b16 %v4316
    %v5060 = vunpack.c.h.b16 %v4316
    %v5061 = vunpack.c.l.b16 %v4317
    %v5062 = vunpack.c.h.b16 %v4317
    %v5063 = vunpack.c.l.b16 %v4318
    %v5064 = vunpack.c.h.b16 %v4318
    %v5065 = vunpack.c.l.b16 %v4319
    %v5066 = vunpack.c.h.b16 %v4319
    %v5067 = vunpack.c.l.b16 %v4320
    %v5068 = vunpack.c.h.b16 %v4320
    %v5069 = vunpack.c.l.b16 %v4321
    %v5070 = vunpack.c.h.b16 %v4321
    %v5071 = vunpack.c.l.b16 %v4322
    %v5072 = vunpack.c.h.b16 %v4322
    %v5073 = vunpack.c.l.b16 %v4323
    %v5074 = vunpack.c.h.b16 %v4323
    %v5075 = vunpack.c.l.b16 %v4324
    %v5076 = vunpack.c.h.b16 %v4324
    %v5077 = vunpack.c.l.b16 %v4325
    %v5078 = vunpack.c.h.b16 %v4325
    %v5079 = vunpack.c.l.b16 %v4326
    %v5080 = vunpack.c.h.b16 %v4326
    %v5081 = vunpack.c.l.b16 %v4327
    %v5082 = vunpack.c.h.b16 %v4327
    %v5083 = vunpack.c.l.b16 %v4328
    %v5084 = vunpack.c.h.b16 %v4328
    %v5085 = vunpack.c.l.b16 %v4329
    %v5086 = vunpack.c.h.b16 %v4329
    %v5087 = vunpack.c.l.b16 %v4330
    %v5088 = vunpack.c.h.b16 %v4330
    %v5089 = vunpack.c.l.b16 %v4331
    %v5090 = vunpack.c.h.b16 %v4331
    %v5091 = vunpack.c.l.b16 %v4332
    %v5092 = vunpack.c.h.b16 %v4332
    %v5093 = vunpack.c.l.b16 %v4333
    %v5094 = vunpack.c.h.b16 %v4333
    %v5095 = vunpack.c.l.b16 %v4334
    %v5096 = vunpack.c.h.b16 %v4334
    %v5097 = vunpack.c.l.b16 %v4335
    %v5098 = vunpack.c.h.b16 %v4335
    %v5099 = vunpack.c.l.b16 %v4336
    %v5100 = vunpack.c.h.b16 %v4336
    %v5101 = vunpack.c.l.b16 %v4337
    %v5102 = vunpack.c.h.b16 %v4337
    %v5103 = vunpack.c.l.b16 %v4338
    %v5104 = vunpack.c.h.b16 %v4338
    %v5105 = vunpack.c.l.b16 %v4339
    %v5106 = vunpack.c.h.b16 %v4339
    %v5107 = vunpack.c.l.b16 %v4340
    %v5108 = vunpack.c.h.b16 %v4340
    %v5109 = vunpack.c.l.b16 %v4341
    %v5110 = vunpack.c.h.b16 %v4341
    %v5111 = vunpack.c.l.b16 %v4342
    %v5112 = vunpack.c.h.b16 %v4342
    %v5113 = vunpack.c.l.b16 %v4343
    %v5114 = vunpack.c.h.b16 %v4343
    %v5115 = vunpack.c.l.b16 %v4344
    %v5116 = vunpack.c.h.b16 %v4344
    %v5117 = vunpack.c.l.b16 %v4345
    %v5118 = vunpack.c.h.b16 %v4345
    %v5119 = vunpack.c.l.b16 %v4346
    %v5120 = vunpack.c.h.b16 %v4346
    %v5121 = vunpack.c.l.b16 %v4347
    %v5122 = vunpack.c.h.b16 %v4347
    %v5123 = vunpack.c.l.b16 %v4348
    %v5124 = vunpack.c.h.b16 %v4348
    %v5125 = vunpack.c.l.b16 %v4349
    %v5126 = vunpack.c.h.b16 %v4349
    %v5127 = vunpack.c.l.b16 %v4350
    %v5128 = vunpack.c.h.b16 %v4350
    %v5129 = vunpack.c.l.b16 %v4351
    %v5130 = vunpack.c.h.b16 %v4351
    %v5131 = vunpack.c.l.b16 %v4352
    %v5132 = vunpack.c.h.b16 %v4352
    %v5133 = vunpack.c.l.b16 %v4353
    %v5134 = vunpack.c.h.b16 %v4353
    %v5135 = vunpack.c.l.b16 %v4354
    %v5136 = vunpack.c.h.b16 %v4354
    %v5137 = vunpack.c.l.b16 %v4355
    %v5138 = vunpack.c.h.b16 %v4355
    %v5139 = vunpack.c.l.b16 %v4356
    %v5140 = vunpack.c.h.b16 %v4356
    %v5141 = vunpack.c.l.b16 %v4357
    %v5142 = vunpack.c.h.b16 %v4357
    %v5143 = vunpack.c.l.b16 %v4358
    %v5144 = vunpack.c.h.b16 %v4358
    %v5145 = vunpack.c.l.b16 %v4359
    %v5146 = vunpack.c.h.b16 %v4359
    %v5147 = vunpack.c.l.b16 %v4360
    %v5148 = vunpack.c.h.b16 %v4360
    %v5149 = vunpack.c.l.b16 %v4361
    %v5150 = vunpack.c.h.b16 %v4361
    %v5151 = vunpack.c.l.b16 %v4362
    %v5152 = vunpack.c.h.b16 %v4362
    %v5153 = vpack.c.b16 %v4645, %v4641
    %v5154 = vpack.c.b16 %v4646, %v4642
    %v5155 = vpack.c.b16 %v4647, %v4643
    %v5156 = vpack.c.b16 %v4648, %v4644
    %v5157 = vpack.c.b16 %v4653, %v4649
    %v5158 = vpack.c.b16 %v4654, %v4650
    %v5159 = vpack.c.b16 %v4655, %v4651
    %v5160 = vpack.c.b16 %v4656, %v4652
    %v5161 = vpack.c.b16 %v4661, %v4657
    %v5162 = vpack.c.b16 %v4662, %v4658
    %v5163 = vpack.c.b16 %v4663, %v4659
    %v5164 = vpack.c.b16 %v4664, %v4660
    %v5165 = vpack.c.b16 %v4669, %v4665
    %v5166 = vpack.c.b16 %v4670, %v4666
    %v5167 = vpack.c.b16 %v4671, %v4667
    %v5168 = vpack.c.b16 %v4672, %v4668
    %v5169 = vpack.c.b16 %v4677, %v4673
    %v5170 = vpack.c.b16 %v4678, %v4674
    %v5171 = vpack.c.b16 %v4679, %v4675
    %v5172 = vpack.c.b16 %v4680, %v4676
    %v5173 = vpack.c.b16 %v4685, %v4681
    %v5174 = vpack.c.b16 %v4686, %v4682
    %v5175 = vpack.c.b16 %v4687, %v4683
    %v5176 = vpack.c.b16 %v4688, %v4684
    %v5177 = vpack.c.b16 %v4693, %v4689
    %v5178 = vpack.c.b16 %v4694, %v4690
    %v5179 = vpack.c.b16 %v4695, %v4691
    %v5180 = vpack.c.b16 %v4696, %v4692
    %v5181 = vpack.c.b16 %v4701, %v4697
    %v5182 = vpack.c.b16 %v4702, %v4698
    %v5183 = vpack.c.b16 %v4703, %v4699
    %v5184 = vpack.c.b16 %v4704, %v4700
    %v5185 = vpack.c.b16 %v4709, %v4705
    %v5186 = vpack.c.b16 %v4710, %v4706
    %v5187 = vpack.c.b16 %v4711, %v4707
    %v5188 = vpack.c.b16 %v4712, %v4708
    %v5189 = vpack.c.b16 %v4717, %v4713
    %v5190 = vpack.c.b16 %v4718, %v4714
    %v5191 = vpack.c.b16 %v4719, %v4715
    %v5192 = vpack.c.b16 %v4720, %v4716
    %v5193 = vpack.c.b16 %v4725, %v4721
    %v5194 = vpack.c.b16 %v4726, %v4722
    %v5195 = vpack.c.b16 %v4727, %v4723
    %v5196 = vpack.c.b16 %v4728, %v4724
    %v5197 = vpack.c.b16 %v4733, %v4729
    %v5198 = vpack.c.b16 %v4734, %v4730
    %v5199 = vpack.c.b16 %v4735, %v4731
    %v5200 = vpack.c.b16 %v4736, %v4732
    %v5201 = vpack.c.b16 %v4741, %v4737
    %v5202 = vpack.c.b16 %v4742, %v4738
    %v5203 = vpack.c.b16 %v4743, %v4739
    %v5204 = vpack.c.b16 %v4744, %v4740
    %v5205 = vpack.c.b16 %v4749, %v4745
    %v5206 = vpack.c.b16 %v4750, %v4746
    %v5207 = vpack.c.b16 %v4751, %v4747
    %v5208 = vpack.c.b16 %v4752, %v4748
    %v5209 = vpack.c.b16 %v4757, %v4753
    %v5210 = vpack.c.b16 %v4758, %v4754
    %v5211 = vpack.c.b16 %v4759, %v4755
    %v5212 = vpack.c.b16 %v4760, %v4756
    %v5213 = vpack.c.b16 %v4765, %v4761
    %v5214 = vpack.c.b16 %v4766, %v4762
    %v5215 = vpack.c.b16 %v4767, %v4763
    %v5216 = vpack.c.b16 %v4768, %v4764
    %v5217 = vpack.c.b16 %v4773, %v4769
    %v5218 = vpack.c.b16 %v4774, %v4770
    %v5219 = vpack.c.b16 %v4775, %v4771
    %v5220 = vpack.c.b16 %v4776, %v4772
    %v5221 = vpack.c.b16 %v4781, %v4777
    %v5222 = vpack.c.b16 %v4782, %v4778
    %v5223 = vpack.c.b16 %v4783, %v4779
    %v5224 = vpack.c.b16 %v4784, %v4780
    %v5225 = vpack.c.b16 %v4789, %v4785
    %v5226 = vpack.c.b16 %v4790, %v4786
    %v5227 = vpack.c.b16 %v4791, %v4787
    %v5228 = vpack.c.b16 %v4792, %v4788
    %v5229 = vpack.c.b16 %v4797, %v4793
    %v5230 = vpack.c.b16 %v4798, %v4794
    %v5231 = vpack.c.b16 %v4799, %v4795
    %v5232 = vpack.c.b16 %v4800, %v4796
    %v5233 = vpack.c.b16 %v4805, %v4801
    %v5234 = vpack.c.b16 %v4806, %v4802
    %v5235 = vpack.c.b16 %v4807, %v4803
    %v5236 = vpack.c.b16 %v4808, %v4804
    %v5237 = vpack.c.b16 %v4813, %v4809
    %v5238 = vpack.c.b16 %v4814, %v4810
    %v5239 = vpack.c.b16 %v4815, %v4811
    %v5240 = vpack.c.b16 %v4816, %v4812
    %v5241 = vpack.c.b16 %v4821, %v4817
    %v5242 = vpack.c.b16 %v4822, %v4818
    %v5243 = vpack.c.b16 %v4823, %v4819
    %v5244 = vpack.c.b16 %v4824, %v4820
    %v5245 = vpack.c.b16 %v4829, %v4825
    %v5246 = vpack.c.b16 %v4830, %v4826
    %v5247 = vpack.c.b16 %v4831, %v4827
    %v5248 = vpack.c.b16 %v4832, %v4828
    %v5249 = vpack.c.b16 %v4837, %v4833
    %v5250 = vpack.c.b16 %v4838, %v4834
    %v5251 = vpack.c.b16 %v4839, %v4835
    %v5252 = vpack.c.b16 %v4840, %v4836
    %v5253 = vpack.c.b16 %v4845, %v4841
    %v5254 = vpack.c.b16 %v4846, %v4842
    %v5255 = vpack.c.b16 %v4847, %v4843
    %v5256 = vpack.c.b16 %v4848, %v4844
    %v5257 = vpack.c.b16 %v4853, %v4849
    %v5258 = vpack.c.b16 %v4854, %v4850
    %v5259 = vpack.c.b16 %v4855, %v4851
    %v5260 = vpack.c.b16 %v4856, %v4852
    %v5261 = vpack.c.b16 %v4861, %v4857
    %v5262 = vpack.c.b16 %v4862, %v4858
    %v5263 = vpack.c.b16 %v4863, %v4859
    %v5264 = vpack.c.b16 %v4864, %v4860
    %v5265 = vpack.c.b16 %v4869, %v4865
    %v5266 = vpack.c.b16 %v4870, %v4866
    %v5267 = vpack.c.b16 %v4871, %v4867
    %v5268 = vpack.c.b16 %v4872, %v4868
    %v5269 = vpack.c.b16 %v4877, %v4873
    %v5270 = vpack.c.b16 %v4878, %v4874
    %v5271 = vpack.c.b16 %v4879, %v4875
    %v5272 = vpack.c.b16 %v4880, %v4876
    %v5273 = vpack.c.b16 %v4885, %v4881
    %v5274 = vpack.c.b16 %v4886, %v4882
    %v5275 = vpack.c.b16 %v4887, %v4883
    %v5276 = vpack.c.b16 %v4888, %v4884
    %v5277 = vpack.c.b16 %v4893, %v4889
    %v5278 = vpack.c.b16 %v4894, %v4890
    %v5279 = vpack.c.b16 %v4895, %v4891
    %v5280 = vpack.c.b16 %v4896, %v4892
    %v5281 = vpack.c.b16 %v4901, %v4897
    %v5282 = vpack.c.b16 %v4902, %v4898
    %v5283 = vpack.c.b16 %v4903, %v4899
    %v5284 = vpack.c.b16 %v4904, %v4900
    %v5285 = vpack.c.b16 %v4909, %v4905
    %v5286 = vpack.c.b16 %v4910, %v4906
    %v5287 = vpack.c.b16 %v4911, %v4907
    %v5288 = vpack.c.b16 %v4912, %v4908
    %v5289 = vpack.c.b16 %v4917, %v4913
    %v5290 = vpack.c.b16 %v4918, %v4914
    %v5291 = vpack.c.b16 %v4919, %v4915
    %v5292 = vpack.c.b16 %v4920, %v4916
    %v5293 = vpack.c.b16 %v4925, %v4921
    %v5294 = vpack.c.b16 %v4926, %v4922
    %v5295 = vpack.c.b16 %v4927, %v4923
    %v5296 = vpack.c.b16 %v4928, %v4924
    %v5297 = vpack.c.b16 %v4933, %v4929
    %v5298 = vpack.c.b16 %v4934, %v4930
    %v5299 = vpack.c.b16 %v4935, %v4931
    %v5300 = vpack.c.b16 %v4936, %v4932
    %v5301 = vpack.c.b16 %v4941, %v4937
    %v5302 = vpack.c.b16 %v4942, %v4938
    %v5303 = vpack.c.b16 %v4943, %v4939
    %v5304 = vpack.c.b16 %v4944, %v4940
    %v5305 = vpack.c.b16 %v4949, %v4945
    %v5306 = vpack.c.b16 %v4950, %v4946
    %v5307 = vpack.c.b16 %v4951, %v4947
    %v5308 = vpack.c.b16 %v4952, %v4948
    %v5309 = vpack.c.b16 %v4957, %v4953
    %v5310 = vpack.c.b16 %v4958, %v4954
    %v5311 = vpack.c.b16 %v4959, %v4955
    %v5312 = vpack.c.b16 %v4960, %v4956
    %v5313 = vpack.c.b16 %v4965, %v4961
    %v5314 = vpack.c.b16 %v4966, %v4962
    %v5315 = vpack.c.b16 %v4967, %v4963
    %v5316 = vpack.c.b16 %v4968, %v4964
    %v5317 = vpack.c.b16 %v4973, %v4969
    %v5318 = vpack.c.b16 %v4974, %v4970
    %v5319 = vpack.c.b16 %v4975, %v4971
    %v5320 = vpack.c.b16 %v4976, %v4972
    %v5321 = vpack.c.b16 %v4981, %v4977
    %v5322 = vpack.c.b16 %v4982, %v4978
    %v5323 = vpack.c.b16 %v4983, %v4979
    %v5324 = vpack.c.b16 %v4984, %v4980
    %v5325 = vpack.c.b16 %v4989, %v4985
    %v5326 = vpack.c.b16 %v4990, %v4986
    %v5327 = vpack.c.b16 %v4991, %v4987
    %v5328 = vpack.c.b16 %v4992, %v4988
    %v5329 = vpack.c.b16 %v4997, %v4993
    %v5330 = vpack.c.b16 %v4998, %v4994
    %v5331 = vpack.c.b16 %v4999, %v4995
    %v5332 = vpack.c.b16 %v5000, %v4996
    %v5333 = vpack.c.b16 %v5005, %v5001
    %v5334 = vpack.c.b16 %v5006, %v5002
    %v5335 = vpack.c.b16 %v5007, %v5003
    %v5336 = vpack.c.b16 %v5008, %v5004
    %v5337 = vpack.c.b16 %v5013, %v5009
    %v5338 = vpack.c.b16 %v5014, %v5010
    %v5339 = vpack.c.b16 %v5015, %v5011
    %v5340 = vpack.c.b16 %v5016, %v5012
    %v5341 = vpack.c.b16 %v5021, %v5017
    %v5342 = vpack.c.b16 %v5022, %v5018
    %v5343 = vpack.c.b16 %v5023, %v5019
    %v5344 = vpack.c.b16 %v5024, %v5020
    %v5345 = vpack.c.b16 %v5029, %v5025
    %v5346 = vpack.c.b16 %v5030, %v5026
    %v5347 = vpack.c.b16 %v5031, %v5027
    %v5348 = vpack.c.b16 %v5032, %v5028
    %v5349 = vpack.c.b16 %v5037, %v5033
    %v5350 = vpack.c.b16 %v5038, %v5034
    %v5351 = vpack.c.b16 %v5039, %v5035
    %v5352 = vpack.c.b16 %v5040, %v5036
    %v5353 = vpack.c.b16 %v5045, %v5041
    %v5354 = vpack.c.b16 %v5046, %v5042
    %v5355 = vpack.c.b16 %v5047, %v5043
    %v5356 = vpack.c.b16 %v5048, %v5044
    %v5357 = vpack.c.b16 %v5053, %v5049
    %v5358 = vpack.c.b16 %v5054, %v5050
    %v5359 = vpack.c.b16 %v5055, %v5051
    %v5360 = vpack.c.b16 %v5056, %v5052
    %v5361 = vpack.c.b16 %v5061, %v5057
    %v5362 = vpack.c.b16 %v5062, %v5058
    %v5363 = vpack.c.b16 %v5063, %v5059
    %v5364 = vpack.c.b16 %v5064, %v5060
    %v5365 = vpack.c.b16 %v5069, %v5065
    %v5366 = vpack.c.b16 %v5070, %v5066
    %v5367 = vpack.c.b16 %v5071, %v5067
    %v5368 = vpack.c.b16 %v5072, %v5068
    %v5369 = vpack.c.b16 %v5077, %v5073
    %v5370 = vpack.c.b16 %v5078, %v5074
    %v5371 = vpack.c.b16 %v5079, %v5075
    %v5372 = vpack.c.b16 %v5080, %v5076
    %v5373 = vpack.c.b16 %v5085, %v5081
    %v5374 = vpack.c.b16 %v5086, %v5082
    %v5375 = vpack.c.b16 %v5087, %v5083
    %v5376 = vpack.c.b16 %v5088, %v5084
    %v5377 = vpack.c.b16 %v5093, %v5089
    %v5378 = vpack.c.b16 %v5094, %v5090
    %v5379 = vpack.c.b16 %v5095, %v5091
    %v5380 = vpack.c.b16 %v5096, %v5092
    %v5381 = vpack.c.b16 %v5101, %v5097
    %v5382 = vpack.c.b16 %v5102, %v5098
    %v5383 = vpack.c.b16 %v5103, %v5099
    %v5384 = vpack.c.b16 %v5104, %v5100
    %v5385 = vpack.c.b16 %v5109, %v5105
    %v5386 = vpack.c.b16 %v5110, %v5106
    %v5387 = vpack.c.b16 %v5111, %v5107
    %v5388 = vpack.c.b16 %v5112, %v5108
    %v5389 = vpack.c.b16 %v5117, %v5113
    %v5390 = vpack.c.b16 %v5118, %v5114
    %v5391 = vpack.c.b16 %v5119, %v5115
    %v5392 = vpack.c.b16 %v5120, %v5116
    %v5393 = vpack.c.b16 %v5125, %v5121
    %v5394 = vpack.c.b16 %v5126, %v5122
    %v5395 = vpack.c.b16 %v5127, %v5123
    %v5396 = vpack.c.b16 %v5128, %v5124
    %v5397 = vpack.c.b16 %v5133, %v5129
    %v5398 = vpack.c.b16 %v5134, %v5130
    %v5399 = vpack.c.b16 %v5135, %v5131
    %v5400 = vpack.c.b16 %v5136, %v5132
    %v5401 = vpack.c.b16 %v5141, %v5137
    %v5402 = vpack.c.b16 %v5142, %v5138
    %v5403 = vpack.c.b16 %v5143, %v5139
    %v5404 = vpack.c.b16 %v5144, %v5140
    %v5405 = vpack.c.b16 %v5149, %v5145
    %v5406 = vpack.c.b16 %v5150, %v5146
    %v5407 = vpack.c.b16 %v5151, %v5147
    %v5408 = vpack.c.b16 %v5152, %v5148
    %5665 = vmatprep.subr.bf16.mxu0 %v5154
    %5666 = vmatpush1.bf16.msra.mxu0 %v5153
    %5667 = vmatprep.subr.bf16.mxu0 %v5158
    %5668 = vmatpush1.bf16.msra.mxu0 %v5157
    %5669 = vmatprep.subr.bf16.mxu0 %v5162
    %5670 = vmatpush1.bf16.msra.mxu0 %v5161
    %5671 = vmatprep.subr.bf16.mxu0 %v5166
    %5672 = vmatpush1.bf16.msra.mxu0 %v5165
    %5673 = vmatprep.subr.bf16.mxu0 %v5170
    %5674 = vmatpush1.bf16.msra.mxu0 %v5169
    %5675 = vmatprep.subr.bf16.mxu0 %v5174
    %5676 = vmatpush1.bf16.msra.mxu0 %v5173
    %5677 = vmatprep.subr.bf16.mxu0 %v5178
    %5678 = vmatpush1.bf16.msra.mxu0 %v5177
    %5679 = vmatprep.subr.bf16.mxu0 %v5182
    %5680 = vmatpush1.bf16.msra.mxu0 %v5181
    %5681 = vmatprep.subr.bf16.mxu0 %v5186
    %5682 = vmatpush1.bf16.msra.mxu0 %v5185
    %5683 = vmatprep.subr.bf16.mxu0 %v5190
    %5684 = vmatpush1.bf16.msra.mxu0 %v5189
    %5685 = vmatprep.subr.bf16.mxu0 %v5194
    %5686 = vmatpush1.bf16.msra.mxu0 %v5193
    %5687 = vmatprep.subr.bf16.mxu0 %v5198
    %5688 = vmatpush1.bf16.msra.mxu0 %v5197
    %5689 = vmatprep.subr.bf16.mxu0 %v5202
    %5690 = vmatpush1.bf16.msra.mxu0 %v5201
    %5691 = vmatprep.subr.bf16.mxu0 %v5206
    %5692 = vmatpush1.bf16.msra.mxu0 %v5205
    %5693 = vmatprep.subr.bf16.mxu0 %v5210
    %5694 = vmatpush1.bf16.msra.mxu0 %v5209
    %5695 = vmatprep.subr.bf16.mxu0 %v5214
    %5696 = vmatpush1.bf16.msra.mxu0 %v5213
    %5697 = vmatprep.mubr.bf16.mxu0 %v4100
    %5698 = vmatmul.mubr.bf16.gmra.mrb[0].mxu0 %v4099
    %v5699 = vpop.f32.mrb[0].mxu0
    %v5700 = vadd.f32 %v4368, %v5699
    %v5701 = vpop.f32.mrb[0].mxu0
    %v5702 = vadd.f32 %v4372, %v5701
    %v5703 = vpop.f32.mrb[0].mxu0
    %v5704 = vpop.f32.mrb[0].mxu0
    %5705 = vdwg.mxu0
    %5706 = vmatprep.subr.bf16.mxu0 %v5218
    %5707 = vmatpush1.bf16.msra.mxu0 %v5217
    %5708 = vmatprep.subr.bf16.mxu0 %v5222
    %5709 = vmatpush1.bf16.msra.mxu0 %v5221
    %5710 = vmatprep.subr.bf16.mxu0 %v5226
    %5711 = vmatpush1.bf16.msra.mxu0 %v5225
    %5712 = vmatprep.subr.bf16.mxu0 %v5230
    %5713 = vmatpush1.bf16.msra.mxu0 %v5229
    %5714 = vmatprep.subr.bf16.mxu0 %v5234
    %5715 = vmatpush1.bf16.msra.mxu0 %v5233
    %5716 = vmatprep.subr.bf16.mxu0 %v5238
    %5717 = vmatpush1.bf16.msra.mxu0 %v5237
    %5718 = vmatprep.subr.bf16.mxu0 %v5242
    %5719 = vmatpush1.bf16.msra.mxu0 %v5241
    %5720 = vmatprep.subr.bf16.mxu0 %v5246
    %5721 = vmatpush1.bf16.msra.mxu0 %v5245
    %5722 = vmatprep.subr.bf16.mxu0 %v5250
    %5723 = vmatpush1.bf16.msra.mxu0 %v5249
    %5724 = vmatprep.subr.bf16.mxu0 %v5254
    %5725 = vmatpush1.bf16.msra.mxu0 %v5253
    %5726 = vmatprep.subr.bf16.mxu0 %v5258
    %5727 = vmatpush1.bf16.msra.mxu0 %v5257
    %5728 = vmatprep.subr.bf16.mxu0 %v5262
    %5729 = vmatpush1.bf16.msra.mxu0 %v5261
    %5730 = vmatprep.subr.bf16.mxu0 %v5266
    %5731 = vmatpush1.bf16.msra.mxu0 %v5265
    %5732 = vmatprep.subr.bf16.mxu0 %v5270
    %5733 = vmatpush1.bf16.msra.mxu0 %v5269
    %5734 = vmatprep.subr.bf16.mxu0 %v5274
    %5735 = vmatpush1.bf16.msra.mxu0 %v5273
    %5736 = vmatprep.subr.bf16.mxu0 %v5278
    %5737 = vmatpush1.bf16.msra.mxu0 %v5277
    %5738 = vmatprep.mubr.bf16.mxu0 %v4102
    %5739 = vmatmul.mubr.bf16.gmra.mrb[0].mxu0 %v4101
    %v5740 = vpop.f32.mrb[0].mxu0
    %v5741 = vadd.f32 %v5700, %v5740
    %v5742 = vpop.f32.mrb[0].mxu0
    %v5743 = vadd.f32 %v5702, %v5742
    %v5744 = vpop.f32.mrb[0].mxu0
    %v5745 = vpop.f32.mrb[0].mxu0
    %5746 = vdwg.mxu0
    %5747 = vmatprep.subr.bf16.mxu0 %v5282
    %5748 = vmatpush1.bf16.msra.mxu0 %v5281
    %5749 = vmatprep.subr.bf16.mxu0 %v5286
    %5750 = vmatpush1.bf16.msra.mxu0 %v5285
    %5751 = vmatprep.subr.bf16.mxu0 %v5290
    %5752 = vmatpush1.bf16.msra.mxu0 %v5289
    %5753 = vmatprep.subr.bf16.mxu0 %v5294
    %5754 = vmatpush1.bf16.msra.mxu0 %v5293
    %5755 = vmatprep.subr.bf16.mxu0 %v5298
    %5756 = vmatpush1.bf16.msra.mxu0 %v5297
    %5757 = vmatprep.subr.bf16.mxu0 %v5302
    %5758 = vmatpush1.bf16.msra.mxu0 %v5301
    %5759 = vmatprep.subr.bf16.mxu0 %v5306
    %5760 = vmatpush1.bf16.msra.mxu0 %v5305
    %5761 = vmatprep.subr.bf16.mxu0 %v5310
    %5762 = vmatpush1.bf16.msra.mxu0 %v5309
    %5763 = vmatprep.subr.bf16.mxu0 %v5314
    %5764 = vmatpush1.bf16.msra.mxu0 %v5313
    %5765 = vmatprep.subr.bf16.mxu0 %v5318
    %5766 = vmatpush1.bf16.msra.mxu0 %v5317
    %5767 = vmatprep.subr.bf16.mxu0 %v5322
    %5768 = vmatpush1.bf16.msra.mxu0 %v5321
    %5769 = vmatprep.subr.bf16.mxu0 %v5326
    %5770 = vmatpush1.bf16.msra.mxu0 %v5325
    %5771 = vmatprep.subr.bf16.mxu0 %v5330
    %5772 = vmatpush1.bf16.msra.mxu0 %v5329
    %5773 = vmatprep.subr.bf16.mxu0 %v5334
    %5774 = vmatpush1.bf16.msra.mxu0 %v5333
    %5775 = vmatprep.subr.bf16.mxu0 %v5338
    %5776 = vmatpush1.bf16.msra.mxu0 %v5337
    %5777 = vmatprep.subr.bf16.mxu0 %v5342
    %5778 = vmatpush1.bf16.msra.mxu0 %v5341
    %5779 = vmatprep.mubr.bf16.mxu0 %v4104
    %5780 = vmatmul.mubr.bf16.gmra.mrb[0].mxu0 %v4103
    %v5781 = vpop.f32.mrb[0].mxu0
    %v5782 = vadd.f32 %v5741, %v5781
    %v5783 = vpop.f32.mrb[0].mxu0
    %v5784 = vadd.f32 %v5743, %v5783
    %v5785 = vpop.f32.mrb[0].mxu0
    %v5786 = vpop.f32.mrb[0].mxu0
    %5787 = vdwg.mxu0
    %5788 = vmatprep.subr.bf16.mxu0 %v5346
    %5789 = vmatpush1.bf16.msra.mxu0 %v5345
    %5790 = vmatprep.subr.bf16.mxu0 %v5350
    %5791 = vmatpush1.bf16.msra.mxu0 %v5349
    %5792 = vmatprep.subr.bf16.mxu0 %v5354
    %5793 = vmatpush1.bf16.msra.mxu0 %v5353
    %5794 = vmatprep.subr.bf16.mxu0 %v5358
    %5795 = vmatpush1.bf16.msra.mxu0 %v5357
    %5796 = vmatprep.subr.bf16.mxu0 %v5362
    %5797 = vmatpush1.bf16.msra.mxu0 %v5361
    %5798 = vmatprep.subr.bf16.mxu0 %v5366
    %5799 = vmatpush1.bf16.msra.mxu0 %v5365
    %5800 = vmatprep.subr.bf16.mxu0 %v5370
    %5801 = vmatpush1.bf16.msra.mxu0 %v5369
    %5802 = vmatprep.subr.bf16.mxu0 %v5374
    %5803 = vmatpush1.bf16.msra.mxu0 %v5373
    %5804 = vmatprep.subr.bf16.mxu0 %v5378
    %5805 = vmatpush1.bf16.msra.mxu0 %v5377
    %5806 = vmatprep.subr.bf16.mxu0 %v5382
    %5807 = vmatpush1.bf16.msra.mxu0 %v5381
    %5808 = vmatprep.subr.bf16.mxu0 %v5386
    %5809 = vmatpush1.bf16.msra.mxu0 %v5385
    %5810 = vmatprep.subr.bf16.mxu0 %v5390
    %5811 = vmatpush1.bf16.msra.mxu0 %v5389
    %5812 = vmatprep.subr.bf16.mxu0 %v5394
    %5813 = vmatpush1.bf16.msra.mxu0 %v5393
    %5814 = vmatprep.subr.bf16.mxu0 %v5398
    %5815 = vmatpush1.bf16.msra.mxu0 %v5397
    %5816 = vmatprep.subr.bf16.mxu0 %v5402
    %5817 = vmatpush1.bf16.msra.mxu0 %v5401
    %5818 = vmatprep.subr.bf16.mxu0 %v5406
    %5819 = vmatpush1.bf16.msra.mxu0 %v5405
    %5820 = vmatprep.mubr.bf16.mxu0 %v4106
    %5821 = vmatmul.mubr.bf16.gmra.mrb[0].mxu0 %v4105
    %v5822 = vpop.f32.mrb[0].mxu0
    %v5823 = vadd.f32 %v5782, %v5822
    %v5824 = vpop.f32.mrb[0].mxu0
    %v5825 = vadd.f32 %v5784, %v5824
    %v5826 = vpop.f32.mrb[0].mxu0
    %v5827 = vpop.f32.mrb[0].mxu0
    %5828 = vdwg.mxu0
    %5829 = vmatprep.subr.bf16.mxu0 %v5156
    %5830 = vmatpush1.bf16.msra.mxu0 %v5155
    %5831 = vmatprep.subr.bf16.mxu0 %v5160
    %5832 = vmatpush1.bf16.msra.mxu0 %v5159
    %5833 = vmatprep.subr.bf16.mxu0 %v5164
    %5834 = vmatpush1.bf16.msra.mxu0 %v5163
    %5835 = vmatprep.subr.bf16.mxu0 %v5168
    %5836 = vmatpush1.bf16.msra.mxu0 %v5167
    %5837 = vmatprep.subr.bf16.mxu0 %v5172
    %5838 = vmatpush1.bf16.msra.mxu0 %v5171
    %5839 = vmatprep.subr.bf16.mxu0 %v5176
    %5840 = vmatpush1.bf16.msra.mxu0 %v5175
    %5841 = vmatprep.subr.bf16.mxu0 %v5180
    %5842 = vmatpush1.bf16.msra.mxu0 %v5179
    %5843 = vmatprep.subr.bf16.mxu0 %v5184
    %5844 = vmatpush1.bf16.msra.mxu0 %v5183
    %5845 = vmatprep.subr.bf16.mxu0 %v5188
    %5846 = vmatpush1.bf16.msra.mxu0 %v5187
    %5847 = vmatprep.subr.bf16.mxu0 %v5192
    %5848 = vmatpush1.bf16.msra.mxu0 %v5191
    %5849 = vmatprep.subr.bf16.mxu0 %v5196
    %5850 = vmatpush1.bf16.msra.mxu0 %v5195
    %5851 = vmatprep.subr.bf16.mxu0 %v5200
    %5852 = vmatpush1.bf16.msra.mxu0 %v5199
    %5853 = vmatprep.subr.bf16.mxu0 %v5204
    %5854 = vmatpush1.bf16.msra.mxu0 %v5203
    %5855 = vmatprep.subr.bf16.mxu0 %v5208
    %5856 = vmatpush1.bf16.msra.mxu0 %v5207
    %5857 = vmatprep.subr.bf16.mxu0 %v5212
    %5858 = vmatpush1.bf16.msra.mxu0 %v5211
    %5859 = vmatprep.subr.bf16.mxu0 %v5216
    %5860 = vmatpush1.bf16.msra.mxu0 %v5215
    %5861 = vmatprep.mubr.bf16.mxu0 %v4100
    %5862 = vmatmul.mubr.bf16.gmra.mrb[0].mxu0 %v4099
    %v5863 = vpop.f32.mrb[0].mxu0
    %v5864 = vadd.f32 %v4376, %v5863
    %v5865 = vpop.f32.mrb[0].mxu0
    %v5866 = vadd.f32 %v4380, %v5865
    %v5867 = vpop.f32.mrb[0].mxu0
    %v5868 = vpop.f32.mrb[0].mxu0
    %5869 = vdwg.mxu0
    %5870 = vmatprep.subr.bf16.mxu0 %v5220
    %5871 = vmatpush1.bf16.msra.mxu0 %v5219
    %5872 = vmatprep.subr.bf16.mxu0 %v5224
    %5873 = vmatpush1.bf16.msra.mxu0 %v5223
    %5874 = vmatprep.subr.bf16.mxu0 %v5228
    %5875 = vmatpush1.bf16.msra.mxu0 %v5227
    %5876 = vmatprep.subr.bf16.mxu0 %v5232
    %5877 = vmatpush1.bf16.msra.mxu0 %v5231
    %5878 = vmatprep.subr.bf16.mxu0 %v5236
    %5879 = vmatpush1.bf16.msra.mxu0 %v5235
    %5880 = vmatprep.subr.bf16.mxu0 %v5240
    %5881 = vmatpush1.bf16.msra.mxu0 %v5239
    %5882 = vmatprep.subr.bf16.mxu0 %v5244
    %5883 = vmatpush1.bf16.msra.mxu0 %v5243
    %5884 = vmatprep.subr.bf16.mxu0 %v5248
    %5885 = vmatpush1.bf16.msra.mxu0 %v5247
    %5886 = vmatprep.subr.bf16.mxu0 %v5252
    %5887 = vmatpush1.bf16.msra.mxu0 %v5251
    %5888 = vmatprep.subr.bf16.mxu0 %v5256
    %5889 = vmatpush1.bf16.msra.mxu0 %v5255
    %5890 = vmatprep.subr.bf16.mxu0 %v5260
    %5891 = vmatpush1.bf16.msra.mxu0 %v5259
    %5892 = vmatprep.subr.bf16.mxu0 %v5264
    %5893 = vmatpush1.bf16.msra.mxu0 %v5263
    %5894 = vmatprep.subr.bf16.mxu0 %v5268
    %5895 = vmatpush1.bf16.msra.mxu0 %v5267
    %5896 = vmatprep.subr.bf16.mxu0 %v5272
    %5897 = vmatpush1.bf16.msra.mxu0 %v5271
    %5898 = vmatprep.subr.bf16.mxu0 %v5276
    %5899 = vmatpush1.bf16.msra.mxu0 %v5275
    %5900 = vmatprep.subr.bf16.mxu0 %v5280
    %5901 = vmatpush1.bf16.msra.mxu0 %v5279
    %5902 = vmatprep.mubr.bf16.mxu0 %v4102
    %5903 = vmatmul.mubr.bf16.gmra.mrb[0].mxu0 %v4101
    %v5904 = vpop.f32.mrb[0].mxu0
    %v5905 = vadd.f32 %v5864, %v5904
    %v5906 = vpop.f32.mrb[0].mxu0
    %v5907 = vadd.f32 %v5866, %v5906
    %v5908 = vpop.f32.mrb[0].mxu0
    %v5909 = vpop.f32.mrb[0].mxu0
    %5910 = vdwg.mxu0
    %5911 = vmatprep.subr.bf16.mxu0 %v5284
    %5912 = vmatpush1.bf16.msra.mxu0 %v5283
    %5913 = vmatprep.subr.bf16.mxu0 %v5288
    %5914 = vmatpush1.bf16.msra.mxu0 %v5287
    %5915 = vmatprep.subr.bf16.mxu0 %v5292
    %5916 = vmatpush1.bf16.msra.mxu0 %v5291
    %5917 = vmatprep.subr.bf16.mxu0 %v5296
    %5918 = vmatpush1.bf16.msra.mxu0 %v5295
    %5919 = vmatprep.subr.bf16.mxu0 %v5300
    %5920 = vmatpush1.bf16.msra.mxu0 %v5299
    %5921 = vmatprep.subr.bf16.mxu0 %v5304
    %5922 = vmatpush1.bf16.msra.mxu0 %v5303
    %5923 = vmatprep.subr.bf16.mxu0 %v5308
    %5924 = vmatpush1.bf16.msra.mxu0 %v5307
    %5925 = vmatprep.subr.bf16.mxu0 %v5312
    %5926 = vmatpush1.bf16.msra.mxu0 %v5311
    %5927 = vmatprep.subr.bf16.mxu0 %v5316
    %5928 = vmatpush1.bf16.msra.mxu0 %v5315
    %5929 = vmatprep.subr.bf16.mxu0 %v5320
    %5930 = vmatpush1.bf16.msra.mxu0 %v5319
    %5931 = vmatprep.subr.bf16.mxu0 %v5324
    %5932 = vmatpush1.bf16.msra.mxu0 %v5323
    %5933 = vmatprep.subr.bf16.mxu0 %v5328
    %5934 = vmatpush1.bf16.msra.mxu0 %v5327
    %5935 = vmatprep.subr.bf16.mxu0 %v5332
    %5936 = vmatpush1.bf16.msra.mxu0 %v5331
    %5937 = vmatprep.subr.bf16.mxu0 %v5336
    %5938 = vmatpush1.bf16.msra.mxu0 %v5335
    %5939 = vmatprep.subr.bf16.mxu0 %v5340
    %5940 = vmatpush1.bf16.msra.mxu0 %v5339
    %5941 = vmatprep.subr.bf16.mxu0 %v5344
    %5942 = vmatpush1.bf16.msra.mxu0 %v5343
    %5943 = vmatprep.mubr.bf16.mxu0 %v4104
    %5944 = vmatmul.mubr.bf16.gmra.mrb[0].mxu0 %v4103
    %v5945 = vpop.f32.mrb[0].mxu0
    %v5946 = vadd.f32 %v5905, %v5945
    %v5947 = vpop.f32.mrb[0].mxu0
    %v5948 = vadd.f32 %v5907, %v5947
    %v5949 = vpop.f32.mrb[0].mxu0
    %v5950 = vpop.f32.mrb[0].mxu0
    %5951 = vdwg.mxu0
    %5952 = vmatprep.subr.bf16.mxu0 %v5348
    %5953 = vmatpush1.bf16.msra.mxu0 %v5347
    %5954 = vmatprep.subr.bf16.mxu0 %v5352
    %5955 = vmatpush1.bf16.msra.mxu0 %v5351
    %5956 = vmatprep.subr.bf16.mxu0 %v5356
    %5957 = vmatpush1.bf16.msra.mxu0 %v5355
    %5958 = vmatprep.subr.bf16.mxu0 %v5360
    %5959 = vmatpush1.bf16.msra.mxu0 %v5359
    %5960 = vmatprep.subr.bf16.mxu0 %v5364
    %5961 = vmatpush1.bf16.msra.mxu0 %v5363
    %5962 = vmatprep.subr.bf16.mxu0 %v5368
    %5963 = vmatpush1.bf16.msra.mxu0 %v5367
    %5964 = vmatprep.subr.bf16.mxu0 %v5372
    %5965 = vmatpush1.bf16.msra.mxu0 %v5371
    %5966 = vmatprep.subr.bf16.mxu0 %v5376
    %5967 = vmatpush1.bf16.msra.mxu0 %v5375
    %5968 = vmatprep.subr.bf16.mxu0 %v5380
    %5969 = vmatpush1.bf16.msra.mxu0 %v5379
    %5970 = vmatprep.subr.bf16.mxu0 %v5384
    %5971 = vmatpush1.bf16.msra.mxu0 %v5383
    %5972 = vmatprep.subr.bf16.mxu0 %v5388
    %5973 = vmatpush1.bf16.msra.mxu0 %v5387
    %5974 = vmatprep.subr.bf16.mxu0 %v5392
    %5975 = vmatpush1.bf16.msra.mxu0 %v5391
    %5976 = vmatprep.subr.bf16.mxu0 %v5396
    %5977 = vmatpush1.bf16.msra.mxu0 %v5395
    %5978 = vmatprep.subr.bf16.mxu0 %v5400
    %5979 = vmatpush1.bf16.msra.mxu0 %v5399
    %5980 = vmatprep.subr.bf16.mxu0 %v5404
    %5981 = vmatpush1.bf16.msra.mxu0 %v5403
    %5982 = vmatprep.subr.bf16.mxu0 %v5408
    %5983 = vmatpush1.bf16.msra.mxu0 %v5407
    %5984 = vmatprep.mubr.bf16.mxu0 %v4106
    %5985 = vmatmul.mubr.bf16.gmra.mrb[0].mxu0 %v4105
    %v5986 = vpop.f32.mrb[0].mxu0
    %v5987 = vadd.f32 %v5946, %v5986
    %v5988 = vpop.f32.mrb[0].mxu0
    %v5989 = vadd.f32 %v5948, %v5988
    %v5990 = vpop.f32.mrb[0].mxu0
    %v5991 = vpop.f32.mrb[0].mxu0
    %5992 = vdwg.mxu0
    %vm5993 = vcmp.gt.f32.partialorder %v5823, 0.0
    %vm5994 = vcmp.gt.f32.partialorder %v5825, 0.0
    %vm5995 = vcmp.gt.f32.partialorder %v5987, 0.0
    %vm5996 = vcmp.gt.f32.partialorder %v5989, 0.0
    %v5997 = vmul.f32 %v5823, 0.2
    %v5998 = vmul.f32 %v5825, 0.2
    %v5999 = vmul.f32 %v5987, 0.2
    %v6000 = vmul.f32 %v5989, 0.2
    %v6001 = vsel %vm5993, %v5823, %v5997
    %v6002 = vsel %vm5994, %v5825, %v5998
    %v6003 = vsel %vm5995, %v5987, %v5999
    %v6004 = vsel %vm5996, %v5989, %v6000
    %v6005 = vld [vmem:[#allocation10] sm:$0xf]
    %v6007 = vlaneseq
    %v6008 = vshrl.u32 %v6007, 7
    %v6009 = vsub.s32 0, %v6008
    %v6010 = vrot.slane %v6005, %v6009
    %v6011 = vlaneseq
    %v6012 = vshrl.u32 %v6011, 7
    %v6013 = vsub.s32 1, %v6012
    %v6014 = vrot.slane %v6005, %v6013
    %v6015 = vlaneseq
    %v6016 = vshrl.u32 %v6015, 7
    %v6017 = vsub.s32 2, %v6016
    %v6018 = vrot.slane %v6005, %v6017
    %v6019 = vlaneseq
    %v6020 = vshrl.u32 %v6019, 7
    %v6021 = vsub.s32 3, %v6020
    %v6022 = vrot.slane %v6005, %v6021
    %v6027 = vadd.f32 %v6001, %v6010
    %v6028 = vadd.f32 %v6002, %v6014
    %v6029 = vadd.f32 %v6003, %v6018
    %v6030 = vadd.f32 %v6004, %v6022
    %v6031 = vpack.c.bf16 %v6027, %v6027
    %v6032 = vpack.c.bf16 %v6028, %v6028
    %v6033 = vpack.c.bf16 %v6029, %v6029
    %v6034 = vpack.c.bf16 %v6030, %v6030
    %v6035 = vld [vmem:[#allocation12] sm:$0xff]
    %v6036 = vld [vmem:[#allocation12 + $0x8] sm:$0xff]
    %v6037 = vld [vmem:[#allocation12 + $0x10] sm:$0xff]
    %v6038 = vld [vmem:[#allocation12 + $0x18] sm:$0xff]
    %v6039 = vld [vmem:[#allocation12 + $0x20] sm:$0xff]
    %v6040 = vld [vmem:[#allocation12 + $0x28] sm:$0xff]
    %v6041 = vld [vmem:[#allocation12 + $0x30] sm:$0xff]
    %v6042 = vld [vmem:[#allocation12 + $0x38] sm:$0xff]
    %v6043 = vld [vmem:[#allocation12 + $0x40] sm:$0xff]
    %v6044 = vld [vmem:[#allocation12 + $0x48] sm:$0xff]
    %v6045 = vld [vmem:[#allocation12 + $0x50] sm:$0xff]
    %v6046 = vld [vmem:[#allocation12 + $0x58] sm:$0xff]
    %v6047 = vld [vmem:[#allocation12 + $0x60] sm:$0xff]
    %v6048 = vld [vmem:[#allocation12 + $0x68] sm:$0xff]
    %v6049 = vld [vmem:[#allocation12 + $0x70] sm:$0xff]
    %v6050 = vld [vmem:[#allocation12 + $0x78] sm:$0xff]
    %v6051 = vld [vmem:[#allocation12 + $0x80] sm:$0xff]
    %v6052 = vld [vmem:[#allocation12 + $0x88] sm:$0xff]
    %v6053 = vld [vmem:[#allocation12 + $0x90] sm:$0xff]
    %v6054 = vld [vmem:[#allocation12 + $0x98] sm:$0xff]
    %v6055 = vld [vmem:[#allocation12 + $0xa0] sm:$0xff]
    %v6056 = vld [vmem:[#allocation12 + $0xa8] sm:$0xff]
    %v6057 = vld [vmem:[#allocation12 + $0xb0] sm:$0xff]
    %v6058 = vld [vmem:[#allocation12 + $0xb8] sm:$0xff]
    %v6059 = vld [vmem:[#allocation12 + $0xc0] sm:$0xff]
    %v6060 = vld [vmem:[#allocation12 + $0xc8] sm:$0xff]
    %v6061 = vld [vmem:[#allocation12 + $0xd0] sm:$0xff]
    %v6062 = vld [vmem:[#allocation12 + $0xd8] sm:$0xff]
    %v6063 = vld [vmem:[#allocation12 + $0xe0] sm:$0xff]
    %v6064 = vld [vmem:[#allocation12 + $0xe8] sm:$0xff]
    %v6065 = vld [vmem:[#allocation12 + $0xf0] sm:$0xff]
    %v6066 = vld [vmem:[#allocation12 + $0xf8] sm:$0xff]
    %v6067 = vld [vmem:[#allocation12 + $0x100] sm:$0xff]
    %v6068 = vld [vmem:[#allocation12 + $0x108] sm:$0xff]
    %v6069 = vld [vmem:[#allocation12 + $0x110] sm:$0xff]
    %v6070 = vld [vmem:[#allocation12 + $0x118] sm:$0xff]
    %v6071 = vld [vmem:[#allocation12 + $0x120] sm:$0xff]
    %v6072 = vld [vmem:[#allocation12 + $0x128] sm:$0xff]
    %v6073 = vld [vmem:[#allocation12 + $0x130] sm:$0xff]
    %v6074 = vld [vmem:[#allocation12 + $0x138] sm:$0xff]
    %v6075 = vld [vmem:[#allocation12 + $0x140] sm:$0xff]
    %v6076 = vld [vmem:[#allocation12 + $0x148] sm:$0xff]
    %v6077 = vld [vmem:[#allocation12 + $0x150] sm:$0xff]
    %v6078 = vld [vmem:[#allocation12 + $0x158] sm:$0xff]
    %v6079 = vld [vmem:[#allocation12 + $0x160] sm:$0xff]
    %v6080 = vld [vmem:[#allocation12 + $0x168] sm:$0xff]
    %v6081 = vld [vmem:[#allocation12 + $0x170] sm:$0xff]
    %v6082 = vld [vmem:[#allocation12 + $0x178] sm:$0xff]
    %v6083 = vld [vmem:[#allocation12 + $0x180] sm:$0xff]
    %v6084 = vld [vmem:[#allocation12 + $0x188] sm:$0xff]
    %v6085 = vld [vmem:[#allocation12 + $0x190] sm:$0xff]
    %v6086 = vld [vmem:[#allocation12 + $0x198] sm:$0xff]
    %v6087 = vld [vmem:[#allocation12 + $0x1a0] sm:$0xff]
    %v6088 = vld [vmem:[#allocation12 + $0x1a8] sm:$0xff]
    %v6089 = vld [vmem:[#allocation12 + $0x1b0] sm:$0xff]
    %v6090 = vld [vmem:[#allocation12 + $0x1b8] sm:$0xff]
    %v6091 = vld [vmem:[#allocation12 + $0x1c0] sm:$0xff]
    %v6092 = vld [vmem:[#allocation12 + $0x1c8] sm:$0xff]
    %v6093 = vld [vmem:[#allocation12 + $0x1d0] sm:$0xff]
    %v6094 = vld [vmem:[#allocation12 + $0x1d8] sm:$0xff]
    %v6095 = vld [vmem:[#allocation12 + $0x1e0] sm:$0xff]
    %v6096 = vld [vmem:[#allocation12 + $0x1e8] sm:$0xff]
    %v6097 = vld [vmem:[#allocation12 + $0x1f0] sm:$0xff]
    %v6098 = vld [vmem:[#allocation12 + $0x1f8] sm:$0xff]
    %v6099 = vld [vmem:[#allocation13] sm:$0x3]
    %v6101 = vlaneseq
    %v6102 = vshrl.u32 %v6101, 7
    %v6103 = vsub.s32 0, %v6102
    %v6104 = vrot.slane %v6099, %v6103
    %v6105 = vlaneseq
    %v6106 = vshrl.u32 %v6105, 7
    %v6107 = vsub.s32 1, %v6106
    %v6108 = vrot.slane %v6099, %v6107
    %v6175 = vunpack.c.l.b16 %v6035
    %v6176 = vunpack.c.h.b16 %v6035
    %v6177 = vunpack.c.l.b16 %v6036
    %v6178 = vunpack.c.h.b16 %v6036
    %v6179 = vunpack.c.l.b16 %v6037
    %v6180 = vunpack.c.h.b16 %v6037
    %v6181 = vunpack.c.l.b16 %v6038
    %v6182 = vunpack.c.h.b16 %v6038
    %v6183 = vunpack.c.l.b16 %v6039
    %v6184 = vunpack.c.h.b16 %v6039
    %v6185 = vunpack.c.l.b16 %v6040
    %v6186 = vunpack.c.h.b16 %v6040
    %v6187 = vunpack.c.l.b16 %v6041
    %v6188 = vunpack.c.h.b16 %v6041
    %v6189 = vunpack.c.l.b16 %v6042
    %v6190 = vunpack.c.h.b16 %v6042
    %v6191 = vunpack.c.l.b16 %v6043
    %v6192 = vunpack.c.h.b16 %v6043
    %v6193 = vunpack.c.l.b16 %v6044
    %v6194 = vunpack.c.h.b16 %v6044
    %v6195 = vunpack.c.l.b16 %v6045
    %v6196 = vunpack.c.h.b16 %v6045
    %v6197 = vunpack.c.l.b16 %v6046
    %v6198 = vunpack.c.h.b16 %v6046
    %v6199 = vunpack.c.l.b16 %v6047
    %v6200 = vunpack.c.h.b16 %v6047
    %v6201 = vunpack.c.l.b16 %v6048
    %v6202 = vunpack.c.h.b16 %v6048
    %v6203 = vunpack.c.l.b16 %v6049
    %v6204 = vunpack.c.h.b16 %v6049
    %v6205 = vunpack.c.l.b16 %v6050
    %v6206 = vunpack.c.h.b16 %v6050
    %v6207 = vunpack.c.l.b16 %v6051
    %v6208 = vunpack.c.h.b16 %v6051
    %v6209 = vunpack.c.l.b16 %v6052
    %v6210 = vunpack.c.h.b16 %v6052
    %v6211 = vunpack.c.l.b16 %v6053
    %v6212 = vunpack.c.h.b16 %v6053
    %v6213 = vunpack.c.l.b16 %v6054
    %v6214 = vunpack.c.h.b16 %v6054
    %v6215 = vunpack.c.l.b16 %v6055
    %v6216 = vunpack.c.h.b16 %v6055
    %v6217 = vunpack.c.l.b16 %v6056
    %v6218 = vunpack.c.h.b16 %v6056
    %v6219 = vunpack.c.l.b16 %v6057
    %v6220 = vunpack.c.h.b16 %v6057
    %v6221 = vunpack.c.l.b16 %v6058
    %v6222 = vunpack.c.h.b16 %v6058
    %v6223 = vunpack.c.l.b16 %v6059
    %v6224 = vunpack.c.h.b16 %v6059
    %v6225 = vunpack.c.l.b16 %v6060
    %v6226 = vunpack.c.h.b16 %v6060
    %v6227 = vunpack.c.l.b16 %v6061
    %v6228 = vunpack.c.h.b16 %v6061
    %v6229 = vunpack.c.l.b16 %v6062
    %v6230 = vunpack.c.h.b16 %v6062
    %v6231 = vunpack.c.l.b16 %v6063
    %v6232 = vunpack.c.h.b16 %v6063
    %v6233 = vunpack.c.l.b16 %v6064
    %v6234 = vunpack.c.h.b16 %v6064
    %v6235 = vunpack.c.l.b16 %v6065
    %v6236 = vunpack.c.h.b16 %v6065
    %v6237 = vunpack.c.l.b16 %v6066
    %v6238 = vunpack.c.h.b16 %v6066
    %v6239 = vunpack.c.l.b16 %v6067
    %v6240 = vunpack.c.h.b16 %v6067
    %v6241 = vunpack.c.l.b16 %v6068
    %v6242 = vunpack.c.h.b16 %v6068
    %v6243 = vunpack.c.l.b16 %v6069
    %v6244 = vunpack.c.h.b16 %v6069
    %v6245 = vunpack.c.l.b16 %v6070
    %v6246 = vunpack.c.h.b16 %v6070
    %v6247 = vunpack.c.l.b16 %v6071
    %v6248 = vunpack.c.h.b16 %v6071
    %v6249 = vunpack.c.l.b16 %v6072
    %v6250 = vunpack.c.h.b16 %v6072
    %v6251 = vunpack.c.l.b16 %v6073
    %v6252 = vunpack.c.h.b16 %v6073
    %v6253 = vunpack.c.l.b16 %v6074
    %v6254 = vunpack.c.h.b16 %v6074
    %v6255 = vunpack.c.l.b16 %v6075
    %v6256 = vunpack.c.h.b16 %v6075
    %v6257 = vunpack.c.l.b16 %v6076
    %v6258 = vunpack.c.h.b16 %v6076
    %v6259 = vunpack.c.l.b16 %v6077
    %v6260 = vunpack.c.h.b16 %v6077
    %v6261 = vunpack.c.l.b16 %v6078
    %v6262 = vunpack.c.h.b16 %v6078
    %v6263 = vunpack.c.l.b16 %v6079
    %v6264 = vunpack.c.h.b16 %v6079
    %v6265 = vunpack.c.l.b16 %v6080
    %v6266 = vunpack.c.h.b16 %v6080
    %v6267 = vunpack.c.l.b16 %v6081
    %v6268 = vunpack.c.h.b16 %v6081
    %v6269 = vunpack.c.l.b16 %v6082
    %v6270 = vunpack.c.h.b16 %v6082
    %v6271 = vunpack.c.l.b16 %v6083
    %v6272 = vunpack.c.h.b16 %v6083
    %v6273 = vunpack.c.l.b16 %v6084
    %v6274 = vunpack.c.h.b16 %v6084
    %v6275 = vunpack.c.l.b16 %v6085
    %v6276 = vunpack.c.h.b16 %v6085
    %v6277 = vunpack.c.l.b16 %v6086
    %v6278 = vunpack.c.h.b16 %v6086
    %v6279 = vunpack.c.l.b16 %v6087
    %v6280 = vunpack.c.h.b16 %v6087
    %v6281 = vunpack.c.l.b16 %v6088
    %v6282 = vunpack.c.h.b16 %v6088
    %v6283 = vunpack.c.l.b16 %v6089
    %v6284 = vunpack.c.h.b16 %v6089
    %v6285 = vunpack.c.l.b16 %v6090
    %v6286 = vunpack.c.h.b16 %v6090
    %v6287 = vunpack.c.l.b16 %v6091
    %v6288 = vunpack.c.h.b16 %v6091
    %v6289 = vunpack.c.l.b16 %v6092
    %v6290 = vunpack.c.h.b16 %v6092
    %v6291 = vunpack.c.l.b16 %v6093
    %v6292 = vunpack.c.h.b16 %v6093
    %v6293 = vunpack.c.l.b16 %v6094
    %v6294 = vunpack.c.h.b16 %v6094
    %v6295 = vunpack.c.l.b16 %v6095
    %v6296 = vunpack.c.h.b16 %v6095
    %v6297 = vunpack.c.l.b16 %v6096
    %v6298 = vunpack.c.h.b16 %v6096
    %v6299 = vunpack.c.l.b16 %v6097
    %v6300 = vunpack.c.h.b16 %v6097
    %v6301 = vunpack.c.l.b16 %v6098
    %v6302 = vunpack.c.h.b16 %v6098
    %v6303 = vpack.c.b16 %v6177, %v6175
    %v6304 = vpack.c.b16 %v6178, %v6176
    %v6305 = vpack.c.b16 %v6181, %v6179
    %v6306 = vpack.c.b16 %v6182, %v6180
    %v6307 = vpack.c.b16 %v6185, %v6183
    %v6308 = vpack.c.b16 %v6186, %v6184
    %v6309 = vpack.c.b16 %v6189, %v6187
    %v6310 = vpack.c.b16 %v6190, %v6188
    %v6311 = vpack.c.b16 %v6193, %v6191
    %v6312 = vpack.c.b16 %v6194, %v6192
    %v6313 = vpack.c.b16 %v6197, %v6195
    %v6314 = vpack.c.b16 %v6198, %v6196
    %v6315 = vpack.c.b16 %v6201, %v6199
    %v6316 = vpack.c.b16 %v6202, %v6200
    %v6317 = vpack.c.b16 %v6205, %v6203
    %v6318 = vpack.c.b16 %v6206, %v6204
    %v6319 = vpack.c.b16 %v6209, %v6207
    %v6320 = vpack.c.b16 %v6210, %v6208
    %v6321 = vpack.c.b16 %v6213, %v6211
    %v6322 = vpack.c.b16 %v6214, %v6212
    %v6323 = vpack.c.b16 %v6217, %v6215
    %v6324 = vpack.c.b16 %v6218, %v6216
    %v6325 = vpack.c.b16 %v6221, %v6219
    %v6326 = vpack.c.b16 %v6222, %v6220
    %v6327 = vpack.c.b16 %v6225, %v6223
    %v6328 = vpack.c.b16 %v6226, %v6224
    %v6329 = vpack.c.b16 %v6229, %v6227
    %v6330 = vpack.c.b16 %v6230, %v6228
    %v6331 = vpack.c.b16 %v6233, %v6231
    %v6332 = vpack.c.b16 %v6234, %v6232
    %v6333 = vpack.c.b16 %v6237, %v6235
    %v6334 = vpack.c.b16 %v6238, %v6236
    %v6335 = vpack.c.b16 %v6241, %v6239
    %v6336 = vpack.c.b16 %v6242, %v6240
    %v6337 = vpack.c.b16 %v6245, %v6243
    %v6338 = vpack.c.b16 %v6246, %v6244
    %v6339 = vpack.c.b16 %v6249, %v6247
    %v6340 = vpack.c.b16 %v6250, %v6248
    %v6341 = vpack.c.b16 %v6253, %v6251
    %v6342 = vpack.c.b16 %v6254, %v6252
    %v6343 = vpack.c.b16 %v6257, %v6255
    %v6344 = vpack.c.b16 %v6258, %v6256
    %v6345 = vpack.c.b16 %v6261, %v6259
    %v6346 = vpack.c.b16 %v6262, %v6260
    %v6347 = vpack.c.b16 %v6265, %v6263
    %v6348 = vpack.c.b16 %v6266, %v6264
    %v6349 = vpack.c.b16 %v6269, %v6267
    %v6350 = vpack.c.b16 %v6270, %v6268
    %v6351 = vpack.c.b16 %v6273, %v6271
    %v6352 = vpack.c.b16 %v6274, %v6272
    %v6353 = vpack.c.b16 %v6277, %v6275
    %v6354 = vpack.c.b16 %v6278, %v6276
    %v6355 = vpack.c.b16 %v6281, %v6279
    %v6356 = vpack.c.b16 %v6282, %v6280
    %v6357 = vpack.c.b16 %v6285, %v6283
    %v6358 = vpack.c.b16 %v6286, %v6284
    %v6359 = vpack.c.b16 %v6289, %v6287
    %v6360 = vpack.c.b16 %v6290, %v6288
    %v6361 = vpack.c.b16 %v6293, %v6291
    %v6362 = vpack.c.b16 %v6294, %v6292
    %v6363 = vpack.c.b16 %v6297, %v6295
    %v6364 = vpack.c.b16 %v6298, %v6296
    %v6365 = vpack.c.b16 %v6301, %v6299
    %v6366 = vpack.c.b16 %v6302, %v6300
    %6431 = vmatprep.subr.bf16.mxu0 %v6304
    %6432 = vmatpush1.bf16.msra.mxu0 %v6303
    %6433 = vmatprep.subr.bf16.mxu0 %v6306
    %6434 = vmatpush1.bf16.msra.mxu0 %v6305
    %6435 = vmatprep.subr.bf16.mxu0 %v6308
    %6436 = vmatpush1.bf16.msra.mxu0 %v6307
    %6437 = vmatprep.subr.bf16.mxu0 %v6310
    %6438 = vmatpush1.bf16.msra.mxu0 %v6309
    %6439 = vmatprep.subr.bf16.mxu0 %v6312
    %6440 = vmatpush1.bf16.msra.mxu0 %v6311
    %6441 = vmatprep.subr.bf16.mxu0 %v6314
    %6442 = vmatpush1.bf16.msra.mxu0 %v6313
    %6443 = vmatprep.subr.bf16.mxu0 %v6316
    %6444 = vmatpush1.bf16.msra.mxu0 %v6315
    %6445 = vmatprep.subr.bf16.mxu0 %v6318
    %6446 = vmatpush1.bf16.msra.mxu0 %v6317
    %6447 = vmatprep.subr.bf16.mxu0 %v6320
    %6448 = vmatpush1.bf16.msra.mxu0 %v6319
    %6449 = vmatprep.subr.bf16.mxu0 %v6322
    %6450 = vmatpush1.bf16.msra.mxu0 %v6321
    %6451 = vmatprep.subr.bf16.mxu0 %v6324
    %6452 = vmatpush1.bf16.msra.mxu0 %v6323
    %6453 = vmatprep.subr.bf16.mxu0 %v6326
    %6454 = vmatpush1.bf16.msra.mxu0 %v6325
    %6455 = vmatprep.subr.bf16.mxu0 %v6328
    %6456 = vmatpush1.bf16.msra.mxu0 %v6327
    %6457 = vmatprep.subr.bf16.mxu0 %v6330
    %6458 = vmatpush1.bf16.msra.mxu0 %v6329
    %6459 = vmatprep.subr.bf16.mxu0 %v6332
    %6460 = vmatpush1.bf16.msra.mxu0 %v6331
    %6461 = vmatprep.subr.bf16.mxu0 %v6334
    %6462 = vmatpush1.bf16.msra.mxu0 %v6333
    %6463 = vmatprep.mubr.bf16.mxu0 %v6032
    %6464 = vmatmul.mubr.bf16.gmra.mrb[0].mxu0 %v6031
    %v6465 = vpop.f32.mrb[0].mxu0
    %v6466 = vadd.f32 %v6104, %v6465
    %v6467 = vpop.f32.mrb[0].mxu0
    %v6468 = vadd.f32 %v6108, %v6467
    %v6469 = vpop.f32.mrb[0].mxu0
    %v6470 = vpop.f32.mrb[0].mxu0
    %6471 = vdwg.mxu0
    %6472 = vmatprep.subr.bf16.mxu0 %v6336
    %6473 = vmatpush1.bf16.msra.mxu0 %v6335
    %6474 = vmatprep.subr.bf16.mxu0 %v6338
    %6475 = vmatpush1.bf16.msra.mxu0 %v6337
    %6476 = vmatprep.subr.bf16.mxu0 %v6340
    %6477 = vmatpush1.bf16.msra.mxu0 %v6339
    %6478 = vmatprep.subr.bf16.mxu0 %v6342
    %6479 = vmatpush1.bf16.msra.mxu0 %v6341
    %6480 = vmatprep.subr.bf16.mxu0 %v6344
    %6481 = vmatpush1.bf16.msra.mxu0 %v6343
    %6482 = vmatprep.subr.bf16.mxu0 %v6346
    %6483 = vmatpush1.bf16.msra.mxu0 %v6345
    %6484 = vmatprep.subr.bf16.mxu0 %v6348
    %6485 = vmatpush1.bf16.msra.mxu0 %v6347
    %6486 = vmatprep.subr.bf16.mxu0 %v6350
    %6487 = vmatpush1.bf16.msra.mxu0 %v6349
    %6488 = vmatprep.subr.bf16.mxu0 %v6352
    %6489 = vmatpush1.bf16.msra.mxu0 %v6351
    %6490 = vmatprep.subr.bf16.mxu0 %v6354
    %6491 = vmatpush1.bf16.msra.mxu0 %v6353
    %6492 = vmatprep.subr.bf16.mxu0 %v6356
    %6493 = vmatpush1.bf16.msra.mxu0 %v6355
    %6494 = vmatprep.subr.bf16.mxu0 %v6358
    %6495 = vmatpush1.bf16.msra.mxu0 %v6357
    %6496 = vmatprep.subr.bf16.mxu0 %v6360
    %6497 = vmatpush1.bf16.msra.mxu0 %v6359
    %6498 = vmatprep.subr.bf16.mxu0 %v6362
    %6499 = vmatpush1.bf16.msra.mxu0 %v6361
    %6500 = vmatprep.subr.bf16.mxu0 %v6364
    %6501 = vmatpush1.bf16.msra.mxu0 %v6363
    %6502 = vmatprep.subr.bf16.mxu0 %v6366
    %6503 = vmatpush1.bf16.msra.mxu0 %v6365
    %6504 = vmatprep.mubr.bf16.mxu0 %v6034
    %6505 = vmatmul.mubr.bf16.gmra.mrb[0].mxu0 %v6033
    %v6506 = vpop.f32.mrb[0].mxu0
    %v6507 = vadd.f32 %v6466, %v6506
    %v6508 = vpop.f32.mrb[0].mxu0
    %v6509 = vadd.f32 %v6468, %v6508
    %v6510 = vpop.f32.mrb[0].mxu0
    %v6511 = vpop.f32.mrb[0].mxu0
    %6512 = vdwg.mxu0
    %vm6513 = vcmp.gt.f32.partialorder %v6507, 0.0
    %vm6514 = vcmp.gt.f32.partialorder %v6509, 0.0
    %v6515 = vmul.f32 %v6507, 0.2
    %v6516 = vmul.f32 %v6509, 0.2
    %v6517 = vsel %vm6513, %v6507, %v6515
    %v6518 = vsel %vm6514, %v6509, %v6516
    %v6519 = vld [vmem:[#allocation15] sm:$0x3]
    %v6521 = vlaneseq
    %v6522 = vshrl.u32 %v6521, 7
    %v6523 = vsub.s32 0, %v6522
    %v6524 = vrot.slane %v6519, %v6523
    %v6525 = vlaneseq
    %v6526 = vshrl.u32 %v6525, 7
    %v6527 = vsub.s32 1, %v6526
    %v6528 = vrot.slane %v6519, %v6527
    %v6531 = vadd.f32 %v6517, %v6524
    %v6532 = vadd.f32 %v6518, %v6528
    %v6533 = vpack.c.bf16 %v6531, %v6531
    %v6534 = vpack.c.bf16 %v6532, %v6532
    %v6535 = vld [vmem:[#allocation16] sm:$0xf]
    %v6536 = vld [vmem:[#allocation16 + $0x4] sm:$0xf]
    %v6537 = vld [vmem:[#allocation16 + $0x8] sm:$0xf]
    %v6538 = vld [vmem:[#allocation16 + $0xc] sm:$0xf]
    %v6539 = vld [vmem:[#allocation16 + $0x10] sm:$0xf]
    %v6540 = vld [vmem:[#allocation16 + $0x14] sm:$0xf]
    %v6541 = vld [vmem:[#allocation16 + $0x18] sm:$0xf]
    %v6542 = vld [vmem:[#allocation16 + $0x1c] sm:$0xf]
    %v6543 = vld [vmem:[#allocation16 + $0x20] sm:$0xf]
    %v6544 = vld [vmem:[#allocation16 + $0x24] sm:$0xf]
    %v6545 = vld [vmem:[#allocation16 + $0x28] sm:$0xf]
    %v6546 = vld [vmem:[#allocation16 + $0x2c] sm:$0xf]
    %v6547 = vld [vmem:[#allocation16 + $0x30] sm:$0xf]
    %v6548 = vld [vmem:[#allocation16 + $0x34] sm:$0xf]
    %v6549 = vld [vmem:[#allocation16 + $0x38] sm:$0xf]
    %v6550 = vld [vmem:[#allocation16 + $0x3c] sm:$0xf]
    %v6551 = vld [vmem:[#allocation16 + $0x40] sm:$0xf]
    %v6552 = vld [vmem:[#allocation16 + $0x44] sm:$0xf]
    %v6553 = vld [vmem:[#allocation16 + $0x48] sm:$0xf]
    %v6554 = vld [vmem:[#allocation16 + $0x4c] sm:$0xf]
    %v6555 = vld [vmem:[#allocation16 + $0x50] sm:$0xf]
    %v6556 = vld [vmem:[#allocation16 + $0x54] sm:$0xf]
    %v6557 = vld [vmem:[#allocation16 + $0x58] sm:$0xf]
    %v6558 = vld [vmem:[#allocation16 + $0x5c] sm:$0xf]
    %v6559 = vld [vmem:[#allocation16 + $0x60] sm:$0xf]
    %v6560 = vld [vmem:[#allocation16 + $0x64] sm:$0xf]
    %v6561 = vld [vmem:[#allocation16 + $0x68] sm:$0xf]
    %v6562 = vld [vmem:[#allocation16 + $0x6c] sm:$0xf]
    %v6563 = vld [vmem:[#allocation16 + $0x70] sm:$0xf]
    %v6564 = vld [vmem:[#allocation16 + $0x74] sm:$0xf]
    %v6565 = vld [vmem:[#allocation16 + $0x78] sm:$0xf]
    %v6566 = vld [vmem:[#allocation16 + $0x7c] sm:$0xf]
    %v6567 = vld [vmem:[#allocation18] sm:$0x1]
    %v6569 = vlaneseq
    %v6570 = vshrl.u32 %v6569, 7
    %v6571 = vsub.s32 0, %v6570
    %v6572 = vrot.slane %v6567, %v6571
    %v6606 = vunpack.c.l.b16 %v6535
    %v6607 = vunpack.c.l.b16 %v6536
    %v6608 = vunpack.c.l.b16 %v6537
    %v6609 = vunpack.c.l.b16 %v6538
    %v6610 = vunpack.c.l.b16 %v6539
    %v6611 = vunpack.c.l.b16 %v6540
    %v6612 = vunpack.c.l.b16 %v6541
    %v6613 = vunpack.c.l.b16 %v6542
    %v6614 = vunpack.c.l.b16 %v6543
    %v6615 = vunpack.c.l.b16 %v6544
    %v6616 = vunpack.c.l.b16 %v6545
    %v6617 = vunpack.c.l.b16 %v6546
    %v6618 = vunpack.c.l.b16 %v6547
    %v6619 = vunpack.c.l.b16 %v6548
    %v6620 = vunpack.c.l.b16 %v6549
    %v6621 = vunpack.c.l.b16 %v6550
    %v6622 = vunpack.c.l.b16 %v6551
    %v6623 = vunpack.c.l.b16 %v6552
    %v6624 = vunpack.c.l.b16 %v6553
    %v6625 = vunpack.c.l.b16 %v6554
    %v6626 = vunpack.c.l.b16 %v6555
    %v6627 = vunpack.c.l.b16 %v6556
    %v6628 = vunpack.c.l.b16 %v6557
    %v6629 = vunpack.c.l.b16 %v6558
    %v6630 = vunpack.c.l.b16 %v6559
    %v6631 = vunpack.c.l.b16 %v6560
    %v6632 = vunpack.c.l.b16 %v6561
    %v6633 = vunpack.c.l.b16 %v6562
    %v6634 = vunpack.c.l.b16 %v6563
    %v6635 = vunpack.c.l.b16 %v6564
    %v6636 = vunpack.c.l.b16 %v6565
    %v6637 = vunpack.c.l.b16 %v6566
    %v6638 = vpack.c.b16 %v6607, %v6606
    %v6639 = vpack.c.b16 %v6609, %v6608
    %v6640 = vpack.c.b16 %v6611, %v6610
    %v6641 = vpack.c.b16 %v6613, %v6612
    %v6642 = vpack.c.b16 %v6615, %v6614
    %v6643 = vpack.c.b16 %v6617, %v6616
    %v6644 = vpack.c.b16 %v6619, %v6618
    %v6645 = vpack.c.b16 %v6621, %v6620
    %v6646 = vpack.c.b16 %v6623, %v6622
    %v6647 = vpack.c.b16 %v6625, %v6624
    %v6648 = vpack.c.b16 %v6627, %v6626
    %v6649 = vpack.c.b16 %v6629, %v6628
    %v6650 = vpack.c.b16 %v6631, %v6630
    %v6651 = vpack.c.b16 %v6633, %v6632
    %v6652 = vpack.c.b16 %v6635, %v6634
    %v6653 = vpack.c.b16 %v6637, %v6636
    %6670 = vmatprep.subr.bf16.mxu0 0
    %6671 = vmatpush1.bf16.msra.mxu0 %v6638
    %6672 = vmatprep.subr.bf16.mxu0 0
    %6673 = vmatpush1.bf16.msra.mxu0 %v6639
    %6674 = vmatprep.subr.bf16.mxu0 0
    %6675 = vmatpush1.bf16.msra.mxu0 %v6640
    %6676 = vmatprep.subr.bf16.mxu0 0
    %6677 = vmatpush1.bf16.msra.mxu0 %v6641
    %6678 = vmatprep.subr.bf16.mxu0 0
    %6679 = vmatpush1.bf16.msra.mxu0 %v6642
    %6680 = vmatprep.subr.bf16.mxu0 0
    %6681 = vmatpush1.bf16.msra.mxu0 %v6643
    %6682 = vmatprep.subr.bf16.mxu0 0
    %6683 = vmatpush1.bf16.msra.mxu0 %v6644
    %6684 = vmatprep.subr.bf16.mxu0 0
    %6685 = vmatpush1.bf16.msra.mxu0 %v6645
    %6686 = vmatprep.subr.bf16.mxu0 0
    %6687 = vmatpush1.bf16.msra.mxu0 %v6646
    %6688 = vmatprep.subr.bf16.mxu0 0
    %6689 = vmatpush1.bf16.msra.mxu0 %v6647
    %6690 = vmatprep.subr.bf16.mxu0 0
    %6691 = vmatpush1.bf16.msra.mxu0 %v6648
    %6692 = vmatprep.subr.bf16.mxu0 0
    %6693 = vmatpush1.bf16.msra.mxu0 %v6649
    %6694 = vmatprep.subr.bf16.mxu0 0
    %6695 = vmatpush1.bf16.msra.mxu0 %v6650
    %6696 = vmatprep.subr.bf16.mxu0 0
    %6697 = vmatpush1.bf16.msra.mxu0 %v6651
    %6698 = vmatprep.subr.bf16.mxu0 0
    %6699 = vmatpush1.bf16.msra.mxu0 %v6652
    %6700 = vmatprep.subr.bf16.mxu0 0
    %6701 = vmatpush1.bf16.msra.mxu0 %v6653
    %6702 = vmatprep.mubr.bf16.mxu0 %v6534
    %6703 = vmatmul.mubr.bf16.gmra.mrb[0].mxu0 %v6533
    %v6704 = vpop.f32.mrb[0].mxu0
    %v6705 = vadd.f32 %v6572, %v6704
    %v6706 = vpop.f32.mrb[0].mxu0
    %v6707 = vpop.f32.mrb[0].mxu0
    %v6708 = vpop.f32.mrb[0].mxu0
    %6709 = vdwg.mxu0
    %vm6710 = vcmp.gt.f32.partialorder %v6705, 0.0
    %v6711 = vmul.f32 %v6705, 0.2
    %v6712 = vsel %vm6710, %v6705, %v6711
    %v6713 = vld [vmem:[#allocation19] sm:$0x1]
    %v6715 = vlaneseq
    %v6716 = vshrl.u32 %v6715, 7
    %v6717 = vsub.s32 0, %v6716
    %v6718 = vrot.slane %v6713, %v6717
    %v6720 = vadd.f32 %v6712, %v6718
    %v6721 = vpack.c.bf16 %v6720, %v6720
    %v6722 = vld [vmem:[#allocation21] sm:$0xf]
    %v6723 = vld [vmem:[#allocation21 + $0x4] sm:$0xf]
    %v6724 = vld [vmem:[#allocation21 + $0x8] sm:$0xf]
    %v6725 = vld [vmem:[#allocation21 + $0xc] sm:$0xf]
    %v6726 = vld [vmem:[#allocation21 + $0x10] sm:$0xf]
    %v6727 = vld [vmem:[#allocation21 + $0x14] sm:$0xf]
    %v6728 = vld [vmem:[#allocation21 + $0x18] sm:$0xf]
    %v6729 = vld [vmem:[#allocation21 + $0x1c] sm:$0xf]
    %v6730 = vld [vmem:[#allocation21 + $0x20] sm:$0xf]
    %v6731 = vld [vmem:[#allocation21 + $0x24] sm:$0xf]
    %v6732 = vld [vmem:[#allocation21 + $0x28] sm:$0xf]
    %v6733 = vld [vmem:[#allocation21 + $0x2c] sm:$0xf]
    %v6734 = vld [vmem:[#allocation21 + $0x30] sm:$0xf]
    %v6735 = vld [vmem:[#allocation21 + $0x34] sm:$0xf]
    %v6736 = vld [vmem:[#allocation21 + $0x38] sm:$0xf]
    %v6737 = vld [vmem:[#allocation21 + $0x3c] sm:$0xf]
    %v6738 = vld [vmem:[#allocation22] sm:$0x1]
    %v6740 = vlaneseq
    %v6741 = vshrl.u32 %v6740, 7
    %v6742 = vsub.s32 0, %v6741
    %v6743 = vrot.slane %v6738, %v6742
    %v6761 = vunpack.c.l.b16 %v6722
    %v6762 = vunpack.c.l.b16 %v6723
    %v6763 = vunpack.c.l.b16 %v6724
    %v6764 = vunpack.c.l.b16 %v6725
    %v6765 = vunpack.c.l.b16 %v6726
    %v6766 = vunpack.c.l.b16 %v6727
    %v6767 = vunpack.c.l.b16 %v6728
    %v6768 = vunpack.c.l.b16 %v6729
    %v6769 = vunpack.c.l.b16 %v6730
    %v6770 = vunpack.c.l.b16 %v6731
    %v6771 = vunpack.c.l.b16 %v6732
    %v6772 = vunpack.c.l.b16 %v6733
    %v6773 = vunpack.c.l.b16 %v6734
    %v6774 = vunpack.c.l.b16 %v6735
    %v6775 = vunpack.c.l.b16 %v6736
    %v6776 = vunpack.c.l.b16 %v6737
    %v6777 = vpack.c.b16 %v6762, %v6761
    %v6778 = vpack.c.b16 %v6764, %v6763
    %v6779 = vpack.c.b16 %v6766, %v6765
    %v6780 = vpack.c.b16 %v6768, %v6767
    %v6781 = vpack.c.b16 %v6770, %v6769
    %v6782 = vpack.c.b16 %v6772, %v6771
    %v6783 = vpack.c.b16 %v6774, %v6773
    %v6784 = vpack.c.b16 %v6776, %v6775
    %6793 = vmatprep.subr.bf16.mxu0 0
    %6794 = vmatpush1.bf16.msra.mxu0 %v6777
    %6795 = vmatprep.subr.bf16.mxu0 0
    %6796 = vmatpush1.bf16.msra.mxu0 %v6778
    %6797 = vmatprep.subr.bf16.mxu0 0
    %6798 = vmatpush1.bf16.msra.mxu0 %v6779
    %6799 = vmatprep.subr.bf16.mxu0 0
    %6800 = vmatpush1.bf16.msra.mxu0 %v6780
    %6801 = vmatprep.subr.bf16.mxu0 0
    %6802 = vmatpush1.bf16.msra.mxu0 %v6781
    %6803 = vmatprep.subr.bf16.mxu0 0
    %6804 = vmatpush1.bf16.msra.mxu0 %v6782
    %6805 = vmatprep.subr.bf16.mxu0 0
    %6806 = vmatpush1.bf16.msra.mxu0 %v6783
    %6807 = vmatprep.subr.bf16.mxu0 0
    %6808 = vmatpush1.bf16.msra.mxu0 %v6784
    %6809 = vmatprep.subr.bf16.mxu0 0
    %6810 = vmatpush1.bf16.msra.mxu0 0
    %6811 = vmatprep.subr.bf16.mxu0 0
    %6812 = vmatpush1.bf16.msra.mxu0 0
    %6813 = vmatprep.subr.bf16.mxu0 0
    %6814 = vmatpush1.bf16.msra.mxu0 0
    %6815 = vmatprep.subr.bf16.mxu0 0
    %6816 = vmatpush1.bf16.msra.mxu0 0
    %6817 = vmatprep.subr.bf16.mxu0 0
    %6818 = vmatpush1.bf16.msra.mxu0 0
    %6819 = vmatprep.subr.bf16.mxu0 0
    %6820 = vmatpush1.bf16.msra.mxu0 0
    %6821 = vmatprep.subr.bf16.mxu0 0
    %6822 = vmatpush1.bf16.msra.mxu0 0
    %6823 = vmatprep.subr.bf16.mxu0 0
    %6824 = vmatpush1.bf16.msra.mxu0 0
    %6825 = vmatprep.mubr.bf16.mxu0 0
    %6826 = vmatmul.mubr.bf16.gmra.mrb[0].mxu0 %v6721
    %v6827 = vpop.f32.mrb[0].mxu0
    %v6828 = vadd.f32 %v6743, %v6827
    %v6829 = vpop.f32.mrb[0].mxu0
    %v6830 = vpop.f32.mrb[0].mxu0
    %v6831 = vpop.f32.mrb[0].mxu0
    %6832 = vdwg.mxu0
    %v6833 = vlaneseq
    %v6834 = vand.u32 %v6833, 127
    %vm6835 = vcmp.ge.s32.totalorder %v6834, 1
    %vm6836 = vcmp.le.s32.totalorder %v6834, 10
    %vm6837 = vmand %vm6835, %vm6836
    %v6838 = vsel %vm6837, %v6828, -1e+30
    %6839 = vmax.xlane.f32.xlu0 %v6838
    %v6840 = vpop.xlane.xlu0 %6839
    %v6841 = vsub.f32 %v6838, %v6840
    %v6842 = vmul.f32 %v6841, 1.442695
    %v6843 = vpow.pop %v6842
    %6844 = vadd.xlane.f32.xlu0 %v6843
    %v6845 = vpop.xlane.xlu0 %6844
    %v6846 = vrcp.pop %v6845
    %v6847 = vmul.f32 %v6843, %v6846
    %v6848 = vsub.f32 0.0, %v6828
    %v6849 = vmul.f32 %v6848, 1.442695
    %v6850 = vpow.pop %v6849
    %v6851 = vadd.f32 %v6850, 1.0
    %v6852 = vrcp.pop %v6851
    %vm6853 = vcmp.eq.s32.totalorder %v6834, 0
    %v6854 = vsel %vm6837, %v6847, 0.0
    %v6855 = vsel %vm6853, %v6852, %v6854
    %6856 = vst [vmem:[%s15] sm:$0xff] %v6855
    // Predicated region
    $region118: #{discriminator_forward.1} parent=1 // pred_check
      _
    $region119: #{discriminator_forward.1} parent=1 // pred_check_branch
      %6858 = sbr.rel (0) target = $region121
    $region120: #{discriminator_forward.1} parent=1 // pred_region
      _
    $region121: #{discriminator_forward.1} parent=1 // pred_fallthru
      _
    // Predicated region
    $region122: #{discriminator_forward.1} parent=1 // pred_check
      _
    $region123: #{discriminator_forward.1} parent=1 // pred_check_branch
      %6860 = sbr.rel (0) target = $region125
    $region124: #{discriminator_forward.1} parent=1 // pred_region
      _
    $region125: #{discriminator_forward.1} parent=1 // pred_fallthru
      _
    %6861 = vsyncpa [#allocation3], 1
    %6862 = vsyncpa [#allocation5], 1
    %6863 = vsyncpa [#allocation8], 1
    %6864 = vsyncpa [#allocation11], 1
    %6865 = vsyncpa [#allocation14], 1
    %6866 = vsyncpa [#allocation17], 1
    %6867 = vsyncpa [#allocation20], 1
    %6868 = vsyncpa [#allocation23], 1

</llo_original>
